<compile_context>
chip_gen: v7x
topology: tpu7x:2x2x1
jax: 0.10.0
libtpu: 0.0.40
codegen_flags: <defaults>
</compile_context>

<pallas_src>
import functools

import jax
import jax.numpy as jnp
from jax.experimental import pallas as pl
from jax.experimental.pallas import tpu as pltpu

# ----- mini-BERT config (small shapes, same structure as bert-base) -----
VOCAB = 64
HIDDEN = 128          # stands in for BERT_HIDDEN_SIZE = 768
N_LAYERS = 2
N_HEADS = 4
HEAD_DIM = HIDDEN // N_HEADS
INTERMEDIATE = 256
MAX_POS = 16
SEQ = 8
BATCH = 2
N_SENTIMENT_CLASSES = 5
LN_EPS = 1e-12


# ============================ fused encoder kernel ============================

def _encoder_kernel(x_ref, m_ref,
                    eg_ref, eb_ref,
                    qkvw_ref, qkvb_ref, aow_ref, aob_ref, alng_ref, alnb_ref,
                    fiw_ref, fib_ref, fow_ref, fob_ref, flng_ref, flnb_ref,
                    pw_ref, pb_ref,
                    o_ref, *, n_layers, n_heads, head_dim):
    """Full mini-BERT encoder + pooler for one batch element, resident in VMEM."""
    hidden = n_heads * head_dim
    scale = 1.0 / (head_dim ** 0.5)

    def layer_norm(x, g, b):
        mu = jnp.mean(x, axis=-1, keepdims=True)
        var = jnp.mean(jnp.square(x - mu), axis=-1, keepdims=True)
        return (x - mu) * jax.lax.rsqrt(var + LN_EPS) * g + b

    x = x_ref[0].astype(jnp.float32)                      # (S, H)
    x = layer_norm(x, eg_ref[...], eb_ref[...])           # embedding LayerNorm
    bias = m_ref[0]                                       # (1, S) additive key mask

    for l in range(n_layers):                             # unrolled (N_LAYERS = 2)
        # ---- fused Q/K/V projection: one MXU pass, N = 3*H (lane-dense) ----
        qkv = jnp.dot(x, qkvw_ref[l],
                      preferred_element_type=jnp.float32) + qkvb_ref[l]   # (S, 3H)
        q = qkv[:, 0:hidden]
        k = qkv[:, hidden:2 * hidden]
        v = qkv[:, 2 * hidden:3 * hidden]

        # ---- per-head scaled dot-product attention (heads unrolled) ----
        head_outs = []
        for h in range(n_heads):
            sl = slice(h * head_dim, (h + 1) * head_dim)
            q_h, k_h, v_h = q[:, sl], k[:, sl], v[:, sl]          # (S, dH) each
            s = jax.lax.dot_general(q_h, k_h, (((1,), (1,)), ((), ())),
                                    preferred_element_type=jnp.float32) * scale
            s = s + bias                                          # broadcast over queries
            p = jnp.exp(s - jnp.max(s, axis=-1, keepdims=True))
            p = p * pl.reciprocal(jnp.sum(p, axis=-1, keepdims=True), approx=True)
            head_outs.append(jnp.dot(p, v_h, preferred_element_type=jnp.float32))
        ctx = jnp.concatenate(head_outs, axis=-1)                 # (S, H) lane-dense

        # ---- attention output projection + residual + LayerNorm ----
        attn_out = jnp.dot(ctx, aow_ref[l],
                           preferred_element_type=jnp.float32) + aob_ref[l]
        x = layer_norm(attn_out + x, alng_ref[l], alnb_ref[l])

        # ---- feed-forward (GELU) + residual + LayerNorm ----
        hmid = jnp.dot(x, fiw_ref[l],
                       preferred_element_type=jnp.float32) + fib_ref[l]
        hmid = jax.nn.gelu(hmid, approximate=True)
        ffn_out = jnp.dot(hmid, fow_ref[l],
                          preferred_element_type=jnp.float32) + fob_ref[l]
        x = layer_norm(ffn_out + x, flng_ref[l], flnb_ref[l])

    # ---- pooler: tanh(W * CLS + b) ----
    cls = x[0:1, :]                                               # (1, H)
    pooled = jnp.tanh(jnp.dot(cls, pw_ref[...],
                              preferred_element_type=jnp.float32) + pb_ref[...])
    o_ref[0] = pooled.astype(o_ref.dtype)


def _bcast_spec(shape):
    """Whole-array block, same block for every grid index (DMA'd once, reused)."""
    if len(shape) == 2:
        return pl.BlockSpec(shape, lambda b: (0, 0))
    return pl.BlockSpec(shape, lambda b: (0, 0, 0))


_WEIGHT_NAMES = (
    "emb_ln_g", "emb_ln_b",
    "qkv_w", "qkv_b", "attn_out_w", "attn_out_b", "attn_ln_g", "attn_ln_b",
    "ffn_in_w", "ffn_in_b", "ffn_out_w", "ffn_out_b", "ffn_ln_g", "ffn_ln_b",
    "pooler_w", "pooler_b",
)


def bert_pooler_output(params, input_ids, attention_mask):
    """Mini-BERT encoder + pooler. input_ids, attention_mask: (B, S) int32 -> (B, H)."""
    B, S = input_ids.shape
    # --- embeddings (gather is XLA glue) ---
    x = (params["word_emb"][input_ids]
         + params["pos_emb"][:S][None, :, :]
         + params["type_emb"][0][None, None, :]).astype(jnp.float32)   # (B, S, H)

    # additive attention-mask bias: 0 where attended, -1e4 where padded
    mask_bias = ((1.0 - attention_mask.astype(jnp.float32)) * -10000.0).reshape(B, 1, S)

    weights = [params[n] for n in _WEIGHT_NAMES]
    in_specs = [pl.BlockSpec((1, S, HIDDEN), lambda b: (b, 0, 0)),
                pl.BlockSpec((1, 1, S), lambda b: (b, 0, 0))]
    in_specs += [_bcast_spec(w.shape) for w in weights]

    pooled = pl.pallas_call(
        functools.partial(_encoder_kernel, n_layers=N_LAYERS,
                          n_heads=N_HEADS, head_dim=HEAD_DIM),
        out_shape=jax.ShapeDtypeStruct((B, 1, HIDDEN), jnp.float32),
        grid=(B,),
        in_specs=in_specs,
        out_specs=pl.BlockSpec((1, 1, HIDDEN), lambda b: (b, 0, 0)),
        compiler_params=pltpu.CompilerParams(dimension_semantics=("parallel",)),
    )(x, mask_bias, *weights)
    return pooled.reshape(B, HIDDEN)


# ============================ parameter init ============================

def init_params(seed=0):
    key = jax.random.PRNGKey(seed)
    keys = jax.random.split(key, 7 + N_LAYERS)

    def dense(k, fan_in, fan_out):
        kw, kb = jax.random.split(k)
        return (0.02 * jax.random.normal(kw, (fan_in, fan_out), jnp.float32),
                0.02 * jax.random.normal(kb, (fan_out,), jnp.float32))

    pooler_w, pooler_b = dense(keys[3], HIDDEN, HIDDEN)
    sent_w, sent_b = dense(keys[4], HIDDEN, N_SENTIMENT_CLASSES)
    para_w, para_b = dense(keys[5], 2 * HIDDEN, 1)
    sim_w, sim_b = dense(keys[6], 2 * HIDDEN, 1)

    qkv_w, qkv_b = [], []
    ao_w, ao_b = [], []
    fi_w, fi_b = [], []
    fo_w, fo_b = [], []
    for i in range(N_LAYERS):
        lk = jax.random.split(keys[7 + i], 6)
        qw, qb = dense(lk[0], HIDDEN, HIDDEN)
        kw_, kb_ = dense(lk[1], HIDDEN, HIDDEN)
        vw, vb = dense(lk[2], HIDDEN, HIDDEN)
        aow, aob = dense(lk[3], HIDDEN, HIDDEN)
        fiw, fib = dense(lk[4], HIDDEN, INTERMEDIATE)
        fow, fob = dense(lk[5], INTERMEDIATE, HIDDEN)
        qkv_w.append(jnp.concatenate([qw, kw_, vw], axis=1))               # (H, 3H)
        qkv_b.append(jnp.concatenate([qb, kb_, vb], axis=0).reshape(1, 3 * HIDDEN))
        ao_w.append(aow)
        ao_b.append(aob.reshape(1, HIDDEN))
        fi_w.append(fiw)
        fi_b.append(fib.reshape(1, INTERMEDIATE))
        fo_w.append(fow)
        fo_b.append(fob.reshape(1, HIDDEN))

    ones_lh = jnp.ones((N_LAYERS, 1, HIDDEN), jnp.float32)
    zeros_lh = jnp.zeros((N_LAYERS, 1, HIDDEN), jnp.float32)

    return {
        "word_emb": 0.02 * jax.random.normal(keys[0], (VOCAB, HIDDEN), jnp.float32),
        "pos_emb": 0.02 * jax.random.normal(keys[1], (MAX_POS, HIDDEN), jnp.float32),
        "type_emb": 0.02 * jax.random.normal(keys[2], (2, HIDDEN), jnp.float32),
        "emb_ln_g": jnp.ones((1, HIDDEN), jnp.float32),
        "emb_ln_b": jnp.zeros((1, HIDDEN), jnp.float32),
        # stacked per-layer encoder weights (leading axis = layer)
        "qkv_w": jnp.stack(qkv_w), "qkv_b": jnp.stack(qkv_b),
        "attn_out_w": jnp.stack(ao_w), "attn_out_b": jnp.stack(ao_b),
        "attn_ln_g": ones_lh, "attn_ln_b": zeros_lh,
        "ffn_in_w": jnp.stack(fi_w), "ffn_in_b": jnp.stack(fi_b),
        "ffn_out_w": jnp.stack(fo_w), "ffn_out_b": jnp.stack(fo_b),
        "ffn_ln_g": ones_lh, "ffn_ln_b": zeros_lh,
        "pooler_w": pooler_w, "pooler_b": pooler_b.reshape(1, HIDDEN),
        # task heads (tiny: stay in plain XLA)
        "sentiment_w": sent_w, "sentiment_b": sent_b,
        "paraphrase_w": para_w, "paraphrase_b": para_b,
        "similarity_w": sim_w, "similarity_b": sim_b,
    }


# ============================ model API ============================

def forward(params, input_ids, attention_mask):
    # self.dropout(pooler_output): dropout is identity in eval mode.
    return bert_pooler_output(params, input_ids, attention_mask)


@jax.jit
def predict_sentiment(params, input_ids, attention_mask):
    emb = forward(params, input_ids, attention_mask)
    return emb @ params["sentiment_w"] + params["sentiment_b"]            # (B, 5)


def _encode_pair(params, ids1, mask1, ids2, mask2):
    """Batch both sentences of each pair into ONE encoder pass (2B rows)."""
    B = ids1.shape[0]
    emb = forward(params,
                  jnp.concatenate([ids1, ids2], axis=0),
                  jnp.concatenate([mask1, mask2], axis=0))
    return emb[:B], emb[B:]


@jax.jit
def predict_paraphrase(params, ids1, mask1, ids2, mask2):
    e1, e2 = _encode_pair(params, ids1, mask1, ids2, mask2)
    cat = jnp.concatenate([e1, e2], axis=-1)                              # (B, 2H)
    return cat @ params["paraphrase_w"] + params["paraphrase_b"]          # (B, 1)


@jax.jit
def predict_similarity(params, ids1, mask1, ids2, mask2):
    e1, e2 = _encode_pair(params, ids1, mask1, ids2, mask2)
    cat = jnp.concatenate([e1, e2], axis=-1)
    return cat @ params["similarity_w"] + params["similarity_b"]          # (B, 1)


# TODO(synk): contrastive_learning with active dropout needs in-kernel PRNG dropout
# (pltpu.prng_seed / prng_random_bits); in eval mode cosine_similarity(e, e) == 1.


# ============================ demo ============================

if __name__ == "__main__":
    params = init_params(seed=0)

    key = jax.random.PRNGKey(0)
    k1, k2 = jax.random.split(key)
    ids1 = jax.random.randint(k1, (BATCH, SEQ), 0, VOCAB, dtype=jnp.int32)
    ids2 = jax.random.randint(k2, (BATCH, SEQ), 0, VOCAB, dtype=jnp.int32)
    mask1 = jnp.ones((BATCH, SEQ), jnp.int32).at[1, SEQ - 2:].set(0)   # pad tail of 2nd example
    mask2 = jnp.ones((BATCH, SEQ), jnp.int32).at[0, SEQ - 3:].set(0)

    sent_logits = predict_sentiment(params, ids1, mask1)               # (2, 5)
    para_logit = predict_paraphrase(params, ids1, mask1, ids2, mask2)  # (2, 1)
    sim_logit = predict_similarity(params, ids1, mask1, ids2, mask2)   # (2, 1)

    jax.block_until_ready((sent_logits, para_logit, sim_logit))

    assert sent_logits.shape == (BATCH, N_SENTIMENT_CLASSES)
    assert para_logit.shape == (BATCH, 1)
    assert sim_logit.shape == (BATCH, 1)
    assert jnp.all(jnp.isfinite(sent_logits))
    assert jnp.all(jnp.isfinite(para_logit))
    assert jnp.all(jnp.isfinite(sim_logit))

    print("KERNEL_OK")
</pallas_src>

<mosaic_0001>
module attributes {stable_mosaic.version = 11 : i64} {
  func.func @_encoder_kernel(%arg0: i32, %arg1: memref<1x8x128xf32, #tpu.memory_space<vmem>>, %arg2: memref<1x1x8xf32, #tpu.memory_space<vmem>>, %arg3: memref<1x128xf32, #tpu.memory_space<vmem>>, %arg4: memref<1x128xf32, #tpu.memory_space<vmem>>, %arg5: memref<2x128x384xf32, #tpu.memory_space<vmem>>, %arg6: memref<2x1x384xf32, #tpu.memory_space<vmem>>, %arg7: memref<2x128x128xf32, #tpu.memory_space<vmem>>, %arg8: memref<2x1x128xf32, #tpu.memory_space<vmem>>, %arg9: memref<2x1x128xf32, #tpu.memory_space<vmem>>, %arg10: memref<2x1x128xf32, #tpu.memory_space<vmem>>, %arg11: memref<2x128x256xf32, #tpu.memory_space<vmem>>, %arg12: memref<2x1x256xf32, #tpu.memory_space<vmem>>, %arg13: memref<2x256x128xf32, #tpu.memory_space<vmem>>, %arg14: memref<2x1x128xf32, #tpu.memory_space<vmem>>, %arg15: memref<2x1x128xf32, #tpu.memory_space<vmem>>, %arg16: memref<2x1x128xf32, #tpu.memory_space<vmem>>, %arg17: memref<128x128xf32, #tpu.memory_space<vmem>>, %arg18: memref<1x128xf32, #tpu.memory_space<vmem>>, %arg19: memref<1x1x128xf32, #tpu.memory_space<vmem>>) attributes {dimension_semantics = [#tpu.dimension_semantics<parallel>], iteration_bounds = array<i64: 2>, scalar_prefetch = 0 : i64, scratch_operands = 0 : i64, tpu.core_type = #tpu.core_type<tc>, window_params = [{transform_indices = @transform_0, window_bounds = array<i64: 1, 8, 128>}, {transform_indices = @transform_1, window_bounds = array<i64: 1, 1, 8>}, {pipeline_mode = #tpu.pipeline_mode<synchronous>, transform_indices = @transform_2, window_bounds = array<i64: 1, 128>}, {pipeline_mode = #tpu.pipeline_mode<synchronous>, transform_indices = @transform_3, window_bounds = array<i64: 1, 128>}, {pipeline_mode = #tpu.pipeline_mode<synchronous>, transform_indices = @transform_4, window_bounds = array<i64: 2, 128, 384>}, {pipeline_mode = #tpu.pipeline_mode<synchronous>, transform_indices = @transform_5, window_bounds = array<i64: 2, 1, 384>}, {pipeline_mode = #tpu.pipeline_mode<synchronous>, transform_indices = @transform_6, window_bounds = array<i64: 2, 128, 128>}, {pipeline_mode = #tpu.pipeline_mode<synchronous>, transform_indices = @transform_7, window_bounds = array<i64: 2, 1, 128>}, {pipeline_mode = #tpu.pipeline_mode<synchronous>, transform_indices = @transform_8, window_bounds = array<i64: 2, 1, 128>}, {pipeline_mode = #tpu.pipeline_mode<synchronous>, transform_indices = @transform_9, window_bounds = array<i64: 2, 1, 128>}, {pipeline_mode = #tpu.pipeline_mode<synchronous>, transform_indices = @transform_10, window_bounds = array<i64: 2, 128, 256>}, {pipeline_mode = #tpu.pipeline_mode<synchronous>, transform_indices = @transform_11, window_bounds = array<i64: 2, 1, 256>}, {pipeline_mode = #tpu.pipeline_mode<synchronous>, transform_indices = @transform_12, window_bounds = array<i64: 2, 256, 128>}, {pipeline_mode = #tpu.pipeline_mode<synchronous>, transform_indices = @transform_13, window_bounds = array<i64: 2, 1, 128>}, {pipeline_mode = #tpu.pipeline_mode<synchronous>, transform_indices = @transform_14, window_bounds = array<i64: 2, 1, 128>}, {pipeline_mode = #tpu.pipeline_mode<synchronous>, transform_indices = @transform_15, window_bounds = array<i64: 2, 1, 128>}, {pipeline_mode = #tpu.pipeline_mode<synchronous>, transform_indices = @transform_16, window_bounds = array<i64: 128, 128>}, {pipeline_mode = #tpu.pipeline_mode<synchronous>, transform_indices = @transform_17, window_bounds = array<i64: 1, 128>}, {transform_indices = @transform_18, window_bounds = array<i64: 1, 1, 128>}]} {
    %c0 = arith.constant 0 : index
    %c0_0 = arith.constant 0 : index
    %c0_1 = arith.constant 0 : index
    %0 = vector.load %arg1[%c0, %c0_0, %c0_1] : memref<1x8x128xf32, #tpu.memory_space<vmem>>, vector<1x8x128xf32>
    %1 = vector.shape_cast %0 : vector<1x8x128xf32> to vector<8x128xf32>
    %c0_2 = arith.constant 0 : index
    %c0_3 = arith.constant 0 : index
    %2 = vector.load %arg3[%c0_2, %c0_3] : memref<1x128xf32, #tpu.memory_space<vmem>>, vector<1x128xf32>
    %c0_4 = arith.constant 0 : index
    %c0_5 = arith.constant 0 : index
    %3 = vector.load %arg4[%c0_4, %c0_5] : memref<1x128xf32, #tpu.memory_space<vmem>>, vector<1x128xf32>
    %cst = arith.constant dense<0.000000e+00> : vector<8xf32>
    %4 = vector.multi_reduction <add>, %1, %cst [1] : vector<8x128xf32> to vector<8xf32>
    %5 = vector.shape_cast %4 : vector<8xf32> to vector<8x1xf32>
    %cst_6 = arith.constant 1.280000e+02 : f32
    %6 = vector.broadcast %cst_6 : f32 to vector<8x1xf32>
    %7 = arith.divf %5, %6 : vector<8x1xf32>
    %8 = vector.broadcast %7 : vector<8x1xf32> to vector<8x128xf32>
    %9 = arith.subf %1, %8 : vector<8x128xf32>
    %10 = arith.mulf %9, %9 : vector<8x128xf32>
    %cst_7 = arith.constant dense<0.000000e+00> : vector<8xf32>
    %11 = vector.multi_reduction <add>, %10, %cst_7 [1] : vector<8x128xf32> to vector<8xf32>
    %12 = vector.shape_cast %11 : vector<8xf32> to vector<8x1xf32>
    %cst_8 = arith.constant 1.280000e+02 : f32
    %13 = vector.broadcast %cst_8 : f32 to vector<8x1xf32>
    %14 = arith.divf %12, %13 : vector<8x1xf32>
    %15 = vector.broadcast %7 : vector<8x1xf32> to vector<8x128xf32>
    %16 = arith.subf %1, %15 : vector<8x128xf32>
    %cst_9 = arith.constant 9.99999996E-13 : f32
    %17 = vector.broadcast %cst_9 : f32 to vector<8x1xf32>
    %18 = arith.addf %14, %17 : vector<8x1xf32>
    %19 = math.rsqrt %18 : vector<8x1xf32>
    %20 = vector.broadcast %19 : vector<8x1xf32> to vector<8x128xf32>
    %21 = arith.mulf %16, %20 : vector<8x128xf32>
    %22 = vector.broadcast %2 : vector<1x128xf32> to vector<8x128xf32>
    %23 = arith.mulf %21, %22 : vector<8x128xf32>
    %24 = vector.broadcast %3 : vector<1x128xf32> to vector<8x128xf32>
    %25 = arith.addf %23, %24 : vector<8x128xf32>
    %c0_10 = arith.constant 0 : index
    %c0_11 = arith.constant 0 : index
    %c0_12 = arith.constant 0 : index
    %26 = vector.load %arg2[%c0_10, %c0_11, %c0_12] : memref<1x1x8xf32, #tpu.memory_space<vmem>>, vector<1x1x8xf32>
    %27 = vector.shape_cast %26 : vector<1x1x8xf32> to vector<1x8xf32>
    %c0_13 = arith.constant 0 : index
    %c0_14 = arith.constant 0 : index
    %c0_15 = arith.constant 0 : index
    %28 = vector.load %arg5[%c0_13, %c0_14, %c0_15] : memref<2x128x384xf32, #tpu.memory_space<vmem>>, vector<1x128x384xf32>
    %29 = vector.shape_cast %28 : vector<1x128x384xf32> to vector<128x384xf32>
    %cst_16 = arith.constant dense<0.000000e+00> : vector<8x384xf32>
    %30 = tpu.matmul %25, %29, %cst_16 {dimension_numbers = #tpu.dot_dimension_numbers<[1], [0], [0], [1], [0, 0, 1, 1], [], []>} : vector<8x128xf32>, vector<128x384xf32>, vector<8x384xf32> -> vector<8x384xf32>
    %c0_17 = arith.constant 0 : index
    %c0_18 = arith.constant 0 : index
    %c0_19 = arith.constant 0 : index
    %31 = vector.load %arg6[%c0_17, %c0_18, %c0_19] : memref<2x1x384xf32, #tpu.memory_space<vmem>>, vector<1x1x384xf32>
    %32 = vector.shape_cast %31 : vector<1x1x384xf32> to vector<1x384xf32>
    %33 = vector.broadcast %32 : vector<1x384xf32> to vector<8x384xf32>
    %34 = arith.addf %30, %33 : vector<8x384xf32>
    %35 = vector.extract_strided_slice %34 {offsets = [0, 0], sizes = [8, 128], strides = [1, 1]} : vector<8x384xf32> to vector<8x128xf32>
    %36 = vector.extract_strided_slice %34 {offsets = [0, 128], sizes = [8, 128], strides = [1, 1]} : vector<8x384xf32> to vector<8x128xf32>
    %37 = vector.extract_strided_slice %34 {offsets = [0, 256], sizes = [8, 128], strides = [1, 1]} : vector<8x384xf32> to vector<8x128xf32>
    %38 = vector.extract_strided_slice %35 {offsets = [0, 0], sizes = [8, 32], strides = [1, 1]} : vector<8x128xf32> to vector<8x32xf32>
    %39 = vector.extract_strided_slice %36 {offsets = [0, 0], sizes = [8, 32], strides = [1, 1]} : vector<8x128xf32> to vector<8x32xf32>
    %40 = vector.extract_strided_slice %37 {offsets = [0, 0], sizes = [8, 32], strides = [1, 1]} : vector<8x128xf32> to vector<8x32xf32>
    %cst_20 = arith.constant dense<0.000000e+00> : vector<8x8xf32>
    %41 = tpu.matmul %38, %39, %cst_20 {dimension_numbers = #tpu.dot_dimension_numbers<[1], [1], [0], [0], [0, 0, 1, 0], [], []>} : vector<8x32xf32>, vector<8x32xf32>, vector<8x8xf32> -> vector<8x8xf32>
    %cst_21 = arith.constant 0.176776692 : f32
    %42 = vector.broadcast %cst_21 : f32 to vector<8x8xf32>
    %43 = arith.mulf %41, %42 : vector<8x8xf32>
    %44 = vector.broadcast %27 : vector<1x8xf32> to vector<8x8xf32>
    %45 = arith.addf %43, %44 : vector<8x8xf32>
    %cst_22 = arith.constant dense<0xFF800000> : vector<8xf32>
    %46 = vector.multi_reduction <maximumf>, %45, %cst_22 [1] : vector<8x8xf32> to vector<8xf32>
    %47 = vector.shape_cast %46 : vector<8xf32> to vector<8x1xf32>
    %48 = vector.broadcast %47 : vector<8x1xf32> to vector<8x8xf32>
    %49 = arith.subf %45, %48 : vector<8x8xf32>
    %50 = math.exp %49 : vector<8x8xf32>
    %cst_23 = arith.constant dense<0.000000e+00> : vector<8xf32>
    %51 = vector.multi_reduction <add>, %50, %cst_23 [1] : vector<8x8xf32> to vector<8xf32>
    %52 = vector.shape_cast %51 : vector<8xf32> to vector<8x1xf32>
    %53 = tpu.reciprocal %52 {approx = true} : vector<8x1xf32> -> vector<8x1xf32>
    %54 = vector.broadcast %53 : vector<8x1xf32> to vector<8x8xf32>
    %55 = arith.mulf %50, %54 : vector<8x8xf32>
    %cst_24 = arith.constant dense<0.000000e+00> : vector<8x32xf32>
    %56 = tpu.matmul %55, %40, %cst_24 {dimension_numbers = #tpu.dot_dimension_numbers<[1], [0], [0], [1], [0, 0, 1, 1], [], []>} : vector<8x8xf32>, vector<8x32xf32>, vector<8x32xf32> -> vector<8x32xf32>
    %57 = vector.extract_strided_slice %35 {offsets = [0, 32], sizes = [8, 32], strides = [1, 1]} : vector<8x128xf32> to vector<8x32xf32>
    %58 = vector.extract_strided_slice %36 {offsets = [0, 32], sizes = [8, 32], strides = [1, 1]} : vector<8x128xf32> to vector<8x32xf32>
    %59 = vector.extract_strided_slice %37 {offsets = [0, 32], sizes = [8, 32], strides = [1, 1]} : vector<8x128xf32> to vector<8x32xf32>
    %cst_25 = arith.constant dense<0.000000e+00> : vector<8x8xf32>
    %60 = tpu.matmul %57, %58, %cst_25 {dimension_numbers = #tpu.dot_dimension_numbers<[1], [1], [0], [0], [0, 0, 1, 0], [], []>} : vector<8x32xf32>, vector<8x32xf32>, vector<8x8xf32> -> vector<8x8xf32>
    %cst_26 = arith.constant 0.176776692 : f32
    %61 = vector.broadcast %cst_26 : f32 to vector<8x8xf32>
    %62 = arith.mulf %60, %61 : vector<8x8xf32>
    %63 = vector.broadcast %27 : vector<1x8xf32> to vector<8x8xf32>
    %64 = arith.addf %62, %63 : vector<8x8xf32>
    %cst_27 = arith.constant dense<0xFF800000> : vector<8xf32>
    %65 = vector.multi_reduction <maximumf>, %64, %cst_27 [1] : vector<8x8xf32> to vector<8xf32>
    %66 = vector.shape_cast %65 : vector<8xf32> to vector<8x1xf32>
    %67 = vector.broadcast %66 : vector<8x1xf32> to vector<8x8xf32>
    %68 = arith.subf %64, %67 : vector<8x8xf32>
    %69 = math.exp %68 : vector<8x8xf32>
    %cst_28 = arith.constant dense<0.000000e+00> : vector<8xf32>
    %70 = vector.multi_reduction <add>, %69, %cst_28 [1] : vector<8x8xf32> to vector<8xf32>
    %71 = vector.shape_cast %70 : vector<8xf32> to vector<8x1xf32>
    %72 = tpu.reciprocal %71 {approx = true} : vector<8x1xf32> -> vector<8x1xf32>
    %73 = vector.broadcast %72 : vector<8x1xf32> to vector<8x8xf32>
    %74 = arith.mulf %69, %73 : vector<8x8xf32>
    %cst_29 = arith.constant dense<0.000000e+00> : vector<8x32xf32>
    %75 = tpu.matmul %74, %59, %cst_29 {dimension_numbers = #tpu.dot_dimension_numbers<[1], [0], [0], [1], [0, 0, 1, 1], [], []>} : vector<8x8xf32>, vector<8x32xf32>, vector<8x32xf32> -> vector<8x32xf32>
    %76 = vector.extract_strided_slice %35 {offsets = [0, 64], sizes = [8, 32], strides = [1, 1]} : vector<8x128xf32> to vector<8x32xf32>
    %77 = vector.extract_strided_slice %36 {offsets = [0, 64], sizes = [8, 32], strides = [1, 1]} : vector<8x128xf32> to vector<8x32xf32>
    %78 = vector.extract_strided_slice %37 {offsets = [0, 64], sizes = [8, 32], strides = [1, 1]} : vector<8x128xf32> to vector<8x32xf32>
    %cst_30 = arith.constant dense<0.000000e+00> : vector<8x8xf32>
    %79 = tpu.matmul %76, %77, %cst_30 {dimension_numbers = #tpu.dot_dimension_numbers<[1], [1], [0], [0], [0, 0, 1, 0], [], []>} : vector<8x32xf32>, vector<8x32xf32>, vector<8x8xf32> -> vector<8x8xf32>
    %cst_31 = arith.constant 0.176776692 : f32
    %80 = vector.broadcast %cst_31 : f32 to vector<8x8xf32>
    %81 = arith.mulf %79, %80 : vector<8x8xf32>
    %82 = vector.broadcast %27 : vector<1x8xf32> to vector<8x8xf32>
    %83 = arith.addf %81, %82 : vector<8x8xf32>
    %cst_32 = arith.constant dense<0xFF800000> : vector<8xf32>
    %84 = vector.multi_reduction <maximumf>, %83, %cst_32 [1] : vector<8x8xf32> to vector<8xf32>
    %85 = vector.shape_cast %84 : vector<8xf32> to vector<8x1xf32>
    %86 = vector.broadcast %85 : vector<8x1xf32> to vector<8x8xf32>
    %87 = arith.subf %83, %86 : vector<8x8xf32>
    %88 = math.exp %87 : vector<8x8xf32>
    %cst_33 = arith.constant dense<0.000000e+00> : vector<8xf32>
    %89 = vector.multi_reduction <add>, %88, %cst_33 [1] : vector<8x8xf32> to vector<8xf32>
    %90 = vector.shape_cast %89 : vector<8xf32> to vector<8x1xf32>
    %91 = tpu.reciprocal %90 {approx = true} : vector<8x1xf32> -> vector<8x1xf32>
    %92 = vector.broadcast %91 : vector<8x1xf32> to vector<8x8xf32>
    %93 = arith.mulf %88, %92 : vector<8x8xf32>
    %cst_34 = arith.constant dense<0.000000e+00> : vector<8x32xf32>
    %94 = tpu.matmul %93, %78, %cst_34 {dimension_numbers = #tpu.dot_dimension_numbers<[1], [0], [0], [1], [0, 0, 1, 1], [], []>} : vector<8x8xf32>, vector<8x32xf32>, vector<8x32xf32> -> vector<8x32xf32>
    %95 = vector.extract_strided_slice %35 {offsets = [0, 96], sizes = [8, 32], strides = [1, 1]} : vector<8x128xf32> to vector<8x32xf32>
    %96 = vector.extract_strided_slice %36 {offsets = [0, 96], sizes = [8, 32], strides = [1, 1]} : vector<8x128xf32> to vector<8x32xf32>
    %97 = vector.extract_strided_slice %37 {offsets = [0, 96], sizes = [8, 32], strides = [1, 1]} : vector<8x128xf32> to vector<8x32xf32>
    %cst_35 = arith.constant dense<0.000000e+00> : vector<8x8xf32>
    %98 = tpu.matmul %95, %96, %cst_35 {dimension_numbers = #tpu.dot_dimension_numbers<[1], [1], [0], [0], [0, 0, 1, 0], [], []>} : vector<8x32xf32>, vector<8x32xf32>, vector<8x8xf32> -> vector<8x8xf32>
    %cst_36 = arith.constant 0.176776692 : f32
    %99 = vector.broadcast %cst_36 : f32 to vector<8x8xf32>
    %100 = arith.mulf %98, %99 : vector<8x8xf32>
    %101 = vector.broadcast %27 : vector<1x8xf32> to vector<8x8xf32>
    %102 = arith.addf %100, %101 : vector<8x8xf32>
    %cst_37 = arith.constant dense<0xFF800000> : vector<8xf32>
    %103 = vector.multi_reduction <maximumf>, %102, %cst_37 [1] : vector<8x8xf32> to vector<8xf32>
    %104 = vector.shape_cast %103 : vector<8xf32> to vector<8x1xf32>
    %105 = vector.broadcast %104 : vector<8x1xf32> to vector<8x8xf32>
    %106 = arith.subf %102, %105 : vector<8x8xf32>
    %107 = math.exp %106 : vector<8x8xf32>
    %cst_38 = arith.constant dense<0.000000e+00> : vector<8xf32>
    %108 = vector.multi_reduction <add>, %107, %cst_38 [1] : vector<8x8xf32> to vector<8xf32>
    %109 = vector.shape_cast %108 : vector<8xf32> to vector<8x1xf32>
    %110 = tpu.reciprocal %109 {approx = true} : vector<8x1xf32> -> vector<8x1xf32>
    %111 = vector.broadcast %110 : vector<8x1xf32> to vector<8x8xf32>
    %112 = arith.mulf %107, %111 : vector<8x8xf32>
    %cst_39 = arith.constant dense<0.000000e+00> : vector<8x32xf32>
    %113 = tpu.matmul %112, %97, %cst_39 {dimension_numbers = #tpu.dot_dimension_numbers<[1], [0], [0], [1], [0, 0, 1, 1], [], []>} : vector<8x8xf32>, vector<8x32xf32>, vector<8x32xf32> -> vector<8x32xf32>
    %114 = tpu.concatenate %56, %75, %94, %113 in 1 : vector<8x32xf32>, vector<8x32xf32>, vector<8x32xf32>, vector<8x32xf32> -> vector<8x128xf32>
    %c0_40 = arith.constant 0 : index
    %c0_41 = arith.constant 0 : index
    %c0_42 = arith.constant 0 : index
    %115 = vector.load %arg7[%c0_40, %c0_41, %c0_42] : memref<2x128x128xf32, #tpu.memory_space<vmem>>, vector<1x128x128xf32>
    %116 = vector.shape_cast %115 : vector<1x128x128xf32> to vector<128x128xf32>
    %cst_43 = arith.constant dense<0.000000e+00> : vector<8x128xf32>
    %117 = tpu.matmul %114, %116, %cst_43 {dimension_numbers = #tpu.dot_dimension_numbers<[1], [0], [0], [1], [0, 0, 1, 1], [], []>} : vector<8x128xf32>, vector<128x128xf32>, vector<8x128xf32> -> vector<8x128xf32>
    %c0_44 = arith.constant 0 : index
    %c0_45 = arith.constant 0 : index
    %c0_46 = arith.constant 0 : index
    %118 = vector.load %arg8[%c0_44, %c0_45, %c0_46] : memref<2x1x128xf32, #tpu.memory_space<vmem>>, vector<1x1x128xf32>
    %119 = vector.shape_cast %118 : vector<1x1x128xf32> to vector<1x128xf32>
    %120 = vector.broadcast %119 : vector<1x128xf32> to vector<8x128xf32>
    %121 = arith.addf %117, %120 : vector<8x128xf32>
    %122 = arith.addf %121, %25 : vector<8x128xf32>
    %c0_47 = arith.constant 0 : index
    %c0_48 = arith.constant 0 : index
    %c0_49 = arith.constant 0 : index
    %123 = vector.load %arg9[%c0_47, %c0_48, %c0_49] : memref<2x1x128xf32, #tpu.memory_space<vmem>>, vector<1x1x128xf32>
    %124 = vector.shape_cast %123 : vector<1x1x128xf32> to vector<1x128xf32>
    %c0_50 = arith.constant 0 : index
    %c0_51 = arith.constant 0 : index
    %c0_52 = arith.constant 0 : index
    %125 = vector.load %arg10[%c0_50, %c0_51, %c0_52] : memref<2x1x128xf32, #tpu.memory_space<vmem>>, vector<1x1x128xf32>
    %126 = vector.shape_cast %125 : vector<1x1x128xf32> to vector<1x128xf32>
    %cst_53 = arith.constant dense<0.000000e+00> : vector<8xf32>
    %127 = vector.multi_reduction <add>, %122, %cst_53 [1] : vector<8x128xf32> to vector<8xf32>
    %128 = vector.shape_cast %127 : vector<8xf32> to vector<8x1xf32>
    %cst_54 = arith.constant 1.280000e+02 : f32
    %129 = vector.broadcast %cst_54 : f32 to vector<8x1xf32>
    %130 = arith.divf %128, %129 : vector<8x1xf32>
    %131 = vector.broadcast %130 : vector<8x1xf32> to vector<8x128xf32>
    %132 = arith.subf %122, %131 : vector<8x128xf32>
    %133 = arith.mulf %132, %132 : vector<8x128xf32>
    %cst_55 = arith.constant dense<0.000000e+00> : vector<8xf32>
    %134 = vector.multi_reduction <add>, %133, %cst_55 [1] : vector<8x128xf32> to vector<8xf32>
    %135 = vector.shape_cast %134 : vector<8xf32> to vector<8x1xf32>
    %cst_56 = arith.constant 1.280000e+02 : f32
    %136 = vector.broadcast %cst_56 : f32 to vector<8x1xf32>
    %137 = arith.divf %135, %136 : vector<8x1xf32>
    %138 = vector.broadcast %130 : vector<8x1xf32> to vector<8x128xf32>
    %139 = arith.subf %122, %138 : vector<8x128xf32>
    %cst_57 = arith.constant 9.99999996E-13 : f32
    %140 = vector.broadcast %cst_57 : f32 to vector<8x1xf32>
    %141 = arith.addf %137, %140 : vector<8x1xf32>
    %142 = math.rsqrt %141 : vector<8x1xf32>
    %143 = vector.broadcast %142 : vector<8x1xf32> to vector<8x128xf32>
    %144 = arith.mulf %139, %143 : vector<8x128xf32>
    %145 = vector.broadcast %124 : vector<1x128xf32> to vector<8x128xf32>
    %146 = arith.mulf %144, %145 : vector<8x128xf32>
    %147 = vector.broadcast %126 : vector<1x128xf32> to vector<8x128xf32>
    %148 = arith.addf %146, %147 : vector<8x128xf32>
    %c0_58 = arith.constant 0 : index
    %c0_59 = arith.constant 0 : index
    %c0_60 = arith.constant 0 : index
    %149 = vector.load %arg11[%c0_58, %c0_59, %c0_60] : memref<2x128x256xf32, #tpu.memory_space<vmem>>, vector<1x128x256xf32>
    %150 = vector.shape_cast %149 : vector<1x128x256xf32> to vector<128x256xf32>
    %cst_61 = arith.constant dense<0.000000e+00> : vector<8x256xf32>
    %151 = tpu.matmul %148, %150, %cst_61 {dimension_numbers = #tpu.dot_dimension_numbers<[1], [0], [0], [1], [0, 0, 1, 1], [], []>} : vector<8x128xf32>, vector<128x256xf32>, vector<8x256xf32> -> vector<8x256xf32>
    %c0_62 = arith.constant 0 : index
    %c0_63 = arith.constant 0 : index
    %c0_64 = arith.constant 0 : index
    %152 = vector.load %arg12[%c0_62, %c0_63, %c0_64] : memref<2x1x256xf32, #tpu.memory_space<vmem>>, vector<1x1x256xf32>
    %153 = vector.shape_cast %152 : vector<1x1x256xf32> to vector<1x256xf32>
    %154 = vector.broadcast %153 : vector<1x256xf32> to vector<8x256xf32>
    %155 = arith.addf %151, %154 : vector<8x256xf32>
    %156 = arith.mulf %155, %155 : vector<8x256xf32>
    %157 = arith.mulf %155, %156 : vector<8x256xf32>
    %cst_65 = arith.constant 4.471500e-02 : f32
    %158 = vector.broadcast %cst_65 : f32 to vector<8x256xf32>
    %159 = arith.mulf %158, %157 : vector<8x256xf32>
    %160 = arith.addf %155, %159 : vector<8x256xf32>
    %cst_66 = arith.constant 0.797884583 : f32
    %161 = vector.broadcast %cst_66 : f32 to vector<8x256xf32>
    %162 = arith.mulf %161, %160 : vector<8x256xf32>
    %163 = math.tanh %162 : vector<8x256xf32>
    %cst_67 = arith.constant 1.000000e+00 : f32
    %164 = vector.broadcast %cst_67 : f32 to vector<8x256xf32>
    %165 = arith.addf %164, %163 : vector<8x256xf32>
    %cst_68 = arith.constant 5.000000e-01 : f32
    %166 = vector.broadcast %cst_68 : f32 to vector<8x256xf32>
    %167 = arith.mulf %166, %165 : vector<8x256xf32>
    %168 = arith.mulf %155, %167 : vector<8x256xf32>
    %c0_69 = arith.constant 0 : index
    %c0_70 = arith.constant 0 : index
    %c0_71 = arith.constant 0 : index
    %169 = vector.load %arg13[%c0_69, %c0_70, %c0_71] : memref<2x256x128xf32, #tpu.memory_space<vmem>>, vector<1x256x128xf32>
    %170 = vector.shape_cast %169 : vector<1x256x128xf32> to vector<256x128xf32>
    %cst_72 = arith.constant dense<0.000000e+00> : vector<8x128xf32>
    %171 = tpu.matmul %168, %170, %cst_72 {dimension_numbers = #tpu.dot_dimension_numbers<[1], [0], [0], [1], [0, 0, 1, 1], [], []>} : vector<8x256xf32>, vector<256x128xf32>, vector<8x128xf32> -> vector<8x128xf32>
    %c0_73 = arith.constant 0 : index
    %c0_74 = arith.constant 0 : index
    %c0_75 = arith.constant 0 : index
    %172 = vector.load %arg14[%c0_73, %c0_74, %c0_75] : memref<2x1x128xf32, #tpu.memory_space<vmem>>, vector<1x1x128xf32>
    %173 = vector.shape_cast %172 : vector<1x1x128xf32> to vector<1x128xf32>
    %174 = vector.broadcast %173 : vector<1x128xf32> to vector<8x128xf32>
    %175 = arith.addf %171, %174 : vector<8x128xf32>
    %176 = arith.addf %175, %148 : vector<8x128xf32>
    %c0_76 = arith.constant 0 : index
    %c0_77 = arith.constant 0 : index
    %c0_78 = arith.constant 0 : index
    %177 = vector.load %arg15[%c0_76, %c0_77, %c0_78] : memref<2x1x128xf32, #tpu.memory_space<vmem>>, vector<1x1x128xf32>
    %178 = vector.shape_cast %177 : vector<1x1x128xf32> to vector<1x128xf32>
    %c0_79 = arith.constant 0 : index
    %c0_80 = arith.constant 0 : index
    %c0_81 = arith.constant 0 : index
    %179 = vector.load %arg16[%c0_79, %c0_80, %c0_81] : memref<2x1x128xf32, #tpu.memory_space<vmem>>, vector<1x1x128xf32>
    %180 = vector.shape_cast %179 : vector<1x1x128xf32> to vector<1x128xf32>
    %cst_82 = arith.constant dense<0.000000e+00> : vector<8xf32>
    %181 = vector.multi_reduction <add>, %176, %cst_82 [1] : vector<8x128xf32> to vector<8xf32>
    %182 = vector.shape_cast %181 : vector<8xf32> to vector<8x1xf32>
    %cst_83 = arith.constant 1.280000e+02 : f32
    %183 = vector.broadcast %cst_83 : f32 to vector<8x1xf32>
    %184 = arith.divf %182, %183 : vector<8x1xf32>
    %185 = vector.broadcast %184 : vector<8x1xf32> to vector<8x128xf32>
    %186 = arith.subf %176, %185 : vector<8x128xf32>
    %187 = arith.mulf %186, %186 : vector<8x128xf32>
    %cst_84 = arith.constant dense<0.000000e+00> : vector<8xf32>
    %188 = vector.multi_reduction <add>, %187, %cst_84 [1] : vector<8x128xf32> to vector<8xf32>
    %189 = vector.shape_cast %188 : vector<8xf32> to vector<8x1xf32>
    %cst_85 = arith.constant 1.280000e+02 : f32
    %190 = vector.broadcast %cst_85 : f32 to vector<8x1xf32>
    %191 = arith.divf %189, %190 : vector<8x1xf32>
    %192 = vector.broadcast %184 : vector<8x1xf32> to vector<8x128xf32>
    %193 = arith.subf %176, %192 : vector<8x128xf32>
    %cst_86 = arith.constant 9.99999996E-13 : f32
    %194 = vector.broadcast %cst_86 : f32 to vector<8x1xf32>
    %195 = arith.addf %191, %194 : vector<8x1xf32>
    %196 = math.rsqrt %195 : vector<8x1xf32>
    %197 = vector.broadcast %196 : vector<8x1xf32> to vector<8x128xf32>
    %198 = arith.mulf %193, %197 : vector<8x128xf32>
    %199 = vector.broadcast %178 : vector<1x128xf32> to vector<8x128xf32>
    %200 = arith.mulf %198, %199 : vector<8x128xf32>
    %201 = vector.broadcast %180 : vector<1x128xf32> to vector<8x128xf32>
    %202 = arith.addf %200, %201 : vector<8x128xf32>
    %c1 = arith.constant 1 : index
    %c0_87 = arith.constant 0 : index
    %c0_88 = arith.constant 0 : index
    %203 = vector.load %arg5[%c1, %c0_87, %c0_88] : memref<2x128x384xf32, #tpu.memory_space<vmem>>, vector<1x128x384xf32>
    %204 = vector.shape_cast %203 : vector<1x128x384xf32> to vector<128x384xf32>
    %cst_89 = arith.constant dense<0.000000e+00> : vector<8x384xf32>
    %205 = tpu.matmul %202, %204, %cst_89 {dimension_numbers = #tpu.dot_dimension_numbers<[1], [0], [0], [1], [0, 0, 1, 1], [], []>} : vector<8x128xf32>, vector<128x384xf32>, vector<8x384xf32> -> vector<8x384xf32>
    %c1_90 = arith.constant 1 : index
    %c0_91 = arith.constant 0 : index
    %c0_92 = arith.constant 0 : index
    %206 = vector.load %arg6[%c1_90, %c0_91, %c0_92] : memref<2x1x384xf32, #tpu.memory_space<vmem>>, vector<1x1x384xf32>
    %207 = vector.shape_cast %206 : vector<1x1x384xf32> to vector<1x384xf32>
    %208 = vector.broadcast %207 : vector<1x384xf32> to vector<8x384xf32>
    %209 = arith.addf %205, %208 : vector<8x384xf32>
    %210 = vector.extract_strided_slice %209 {offsets = [0, 0], sizes = [8, 128], strides = [1, 1]} : vector<8x384xf32> to vector<8x128xf32>
    %211 = vector.extract_strided_slice %209 {offsets = [0, 128], sizes = [8, 128], strides = [1, 1]} : vector<8x384xf32> to vector<8x128xf32>
    %212 = vector.extract_strided_slice %209 {offsets = [0, 256], sizes = [8, 128], strides = [1, 1]} : vector<8x384xf32> to vector<8x128xf32>
    %213 = vector.extract_strided_slice %210 {offsets = [0, 0], sizes = [8, 32], strides = [1, 1]} : vector<8x128xf32> to vector<8x32xf32>
    %214 = vector.extract_strided_slice %211 {offsets = [0, 0], sizes = [8, 32], strides = [1, 1]} : vector<8x128xf32> to vector<8x32xf32>
    %215 = vector.extract_strided_slice %212 {offsets = [0, 0], sizes = [8, 32], strides = [1, 1]} : vector<8x128xf32> to vector<8x32xf32>
    %cst_93 = arith.constant dense<0.000000e+00> : vector<8x8xf32>
    %216 = tpu.matmul %213, %214, %cst_93 {dimension_numbers = #tpu.dot_dimension_numbers<[1], [1], [0], [0], [0, 0, 1, 0], [], []>} : vector<8x32xf32>, vector<8x32xf32>, vector<8x8xf32> -> vector<8x8xf32>
    %cst_94 = arith.constant 0.176776692 : f32
    %217 = vector.broadcast %cst_94 : f32 to vector<8x8xf32>
    %218 = arith.mulf %216, %217 : vector<8x8xf32>
    %219 = vector.broadcast %27 : vector<1x8xf32> to vector<8x8xf32>
    %220 = arith.addf %218, %219 : vector<8x8xf32>
    %cst_95 = arith.constant dense<0xFF800000> : vector<8xf32>
    %221 = vector.multi_reduction <maximumf>, %220, %cst_95 [1] : vector<8x8xf32> to vector<8xf32>
    %222 = vector.shape_cast %221 : vector<8xf32> to vector<8x1xf32>
    %223 = vector.broadcast %222 : vector<8x1xf32> to vector<8x8xf32>
    %224 = arith.subf %220, %223 : vector<8x8xf32>
    %225 = math.exp %224 : vector<8x8xf32>
    %cst_96 = arith.constant dense<0.000000e+00> : vector<8xf32>
    %226 = vector.multi_reduction <add>, %225, %cst_96 [1] : vector<8x8xf32> to vector<8xf32>
    %227 = vector.shape_cast %226 : vector<8xf32> to vector<8x1xf32>
    %228 = tpu.reciprocal %227 {approx = true} : vector<8x1xf32> -> vector<8x1xf32>
    %229 = vector.broadcast %228 : vector<8x1xf32> to vector<8x8xf32>
    %230 = arith.mulf %225, %229 : vector<8x8xf32>
    %cst_97 = arith.constant dense<0.000000e+00> : vector<8x32xf32>
    %231 = tpu.matmul %230, %215, %cst_97 {dimension_numbers = #tpu.dot_dimension_numbers<[1], [0], [0], [1], [0, 0, 1, 1], [], []>} : vector<8x8xf32>, vector<8x32xf32>, vector<8x32xf32> -> vector<8x32xf32>
    %232 = vector.extract_strided_slice %210 {offsets = [0, 32], sizes = [8, 32], strides = [1, 1]} : vector<8x128xf32> to vector<8x32xf32>
    %233 = vector.extract_strided_slice %211 {offsets = [0, 32], sizes = [8, 32], strides = [1, 1]} : vector<8x128xf32> to vector<8x32xf32>
    %234 = vector.extract_strided_slice %212 {offsets = [0, 32], sizes = [8, 32], strides = [1, 1]} : vector<8x128xf32> to vector<8x32xf32>
    %cst_98 = arith.constant dense<0.000000e+00> : vector<8x8xf32>
    %235 = tpu.matmul %232, %233, %cst_98 {dimension_numbers = #tpu.dot_dimension_numbers<[1], [1], [0], [0], [0, 0, 1, 0], [], []>} : vector<8x32xf32>, vector<8x32xf32>, vector<8x8xf32> -> vector<8x8xf32>
    %cst_99 = arith.constant 0.176776692 : f32
    %236 = vector.broadcast %cst_99 : f32 to vector<8x8xf32>
    %237 = arith.mulf %235, %236 : vector<8x8xf32>
    %238 = vector.broadcast %27 : vector<1x8xf32> to vector<8x8xf32>
    %239 = arith.addf %237, %238 : vector<8x8xf32>
    %cst_100 = arith.constant dense<0xFF800000> : vector<8xf32>
    %240 = vector.multi_reduction <maximumf>, %239, %cst_100 [1] : vector<8x8xf32> to vector<8xf32>
    %241 = vector.shape_cast %240 : vector<8xf32> to vector<8x1xf32>
    %242 = vector.broadcast %241 : vector<8x1xf32> to vector<8x8xf32>
    %243 = arith.subf %239, %242 : vector<8x8xf32>
    %244 = math.exp %243 : vector<8x8xf32>
    %cst_101 = arith.constant dense<0.000000e+00> : vector<8xf32>
    %245 = vector.multi_reduction <add>, %244, %cst_101 [1] : vector<8x8xf32> to vector<8xf32>
    %246 = vector.shape_cast %245 : vector<8xf32> to vector<8x1xf32>
    %247 = tpu.reciprocal %246 {approx = true} : vector<8x1xf32> -> vector<8x1xf32>
    %248 = vector.broadcast %247 : vector<8x1xf32> to vector<8x8xf32>
    %249 = arith.mulf %244, %248 : vector<8x8xf32>
    %cst_102 = arith.constant dense<0.000000e+00> : vector<8x32xf32>
    %250 = tpu.matmul %249, %234, %cst_102 {dimension_numbers = #tpu.dot_dimension_numbers<[1], [0], [0], [1], [0, 0, 1, 1], [], []>} : vector<8x8xf32>, vector<8x32xf32>, vector<8x32xf32> -> vector<8x32xf32>
    %251 = vector.extract_strided_slice %210 {offsets = [0, 64], sizes = [8, 32], strides = [1, 1]} : vector<8x128xf32> to vector<8x32xf32>
    %252 = vector.extract_strided_slice %211 {offsets = [0, 64], sizes = [8, 32], strides = [1, 1]} : vector<8x128xf32> to vector<8x32xf32>
    %253 = vector.extract_strided_slice %212 {offsets = [0, 64], sizes = [8, 32], strides = [1, 1]} : vector<8x128xf32> to vector<8x32xf32>
    %cst_103 = arith.constant dense<0.000000e+00> : vector<8x8xf32>
    %254 = tpu.matmul %251, %252, %cst_103 {dimension_numbers = #tpu.dot_dimension_numbers<[1], [1], [0], [0], [0, 0, 1, 0], [], []>} : vector<8x32xf32>, vector<8x32xf32>, vector<8x8xf32> -> vector<8x8xf32>
    %cst_104 = arith.constant 0.176776692 : f32
    %255 = vector.broadcast %cst_104 : f32 to vector<8x8xf32>
    %256 = arith.mulf %254, %255 : vector<8x8xf32>
    %257 = vector.broadcast %27 : vector<1x8xf32> to vector<8x8xf32>
    %258 = arith.addf %256, %257 : vector<8x8xf32>
    %cst_105 = arith.constant dense<0xFF800000> : vector<8xf32>
    %259 = vector.multi_reduction <maximumf>, %258, %cst_105 [1] : vector<8x8xf32> to vector<8xf32>
    %260 = vector.shape_cast %259 : vector<8xf32> to vector<8x1xf32>
    %261 = vector.broadcast %260 : vector<8x1xf32> to vector<8x8xf32>
    %262 = arith.subf %258, %261 : vector<8x8xf32>
    %263 = math.exp %262 : vector<8x8xf32>
    %cst_106 = arith.constant dense<0.000000e+00> : vector<8xf32>
    %264 = vector.multi_reduction <add>, %263, %cst_106 [1] : vector<8x8xf32> to vector<8xf32>
    %265 = vector.shape_cast %264 : vector<8xf32> to vector<8x1xf32>
    %266 = tpu.reciprocal %265 {approx = true} : vector<8x1xf32> -> vector<8x1xf32>
    %267 = vector.broadcast %266 : vector<8x1xf32> to vector<8x8xf32>
    %268 = arith.mulf %263, %267 : vector<8x8xf32>
    %cst_107 = arith.constant dense<0.000000e+00> : vector<8x32xf32>
    %269 = tpu.matmul %268, %253, %cst_107 {dimension_numbers = #tpu.dot_dimension_numbers<[1], [0], [0], [1], [0, 0, 1, 1], [], []>} : vector<8x8xf32>, vector<8x32xf32>, vector<8x32xf32> -> vector<8x32xf32>
    %270 = vector.extract_strided_slice %210 {offsets = [0, 96], sizes = [8, 32], strides = [1, 1]} : vector<8x128xf32> to vector<8x32xf32>
    %271 = vector.extract_strided_slice %211 {offsets = [0, 96], sizes = [8, 32], strides = [1, 1]} : vector<8x128xf32> to vector<8x32xf32>
    %272 = vector.extract_strided_slice %212 {offsets = [0, 96], sizes = [8, 32], strides = [1, 1]} : vector<8x128xf32> to vector<8x32xf32>
    %cst_108 = arith.constant dense<0.000000e+00> : vector<8x8xf32>
    %273 = tpu.matmul %270, %271, %cst_108 {dimension_numbers = #tpu.dot_dimension_numbers<[1], [1], [0], [0], [0, 0, 1, 0], [], []>} : vector<8x32xf32>, vector<8x32xf32>, vector<8x8xf32> -> vector<8x8xf32>
    %cst_109 = arith.constant 0.176776692 : f32
    %274 = vector.broadcast %cst_109 : f32 to vector<8x8xf32>
    %275 = arith.mulf %273, %274 : vector<8x8xf32>
    %276 = vector.broadcast %27 : vector<1x8xf32> to vector<8x8xf32>
    %277 = arith.addf %275, %276 : vector<8x8xf32>
    %cst_110 = arith.constant dense<0xFF800000> : vector<8xf32>
    %278 = vector.multi_reduction <maximumf>, %277, %cst_110 [1] : vector<8x8xf32> to vector<8xf32>
    %279 = vector.shape_cast %278 : vector<8xf32> to vector<8x1xf32>
    %280 = vector.broadcast %279 : vector<8x1xf32> to vector<8x8xf32>
    %281 = arith.subf %277, %280 : vector<8x8xf32>
    %282 = math.exp %281 : vector<8x8xf32>
    %cst_111 = arith.constant dense<0.000000e+00> : vector<8xf32>
    %283 = vector.multi_reduction <add>, %282, %cst_111 [1] : vector<8x8xf32> to vector<8xf32>
    %284 = vector.shape_cast %283 : vector<8xf32> to vector<8x1xf32>
    %285 = tpu.reciprocal %284 {approx = true} : vector<8x1xf32> -> vector<8x1xf32>
    %286 = vector.broadcast %285 : vector<8x1xf32> to vector<8x8xf32>
    %287 = arith.mulf %282, %286 : vector<8x8xf32>
    %cst_112 = arith.constant dense<0.000000e+00> : vector<8x32xf32>
    %288 = tpu.matmul %287, %272, %cst_112 {dimension_numbers = #tpu.dot_dimension_numbers<[1], [0], [0], [1], [0, 0, 1, 1], [], []>} : vector<8x8xf32>, vector<8x32xf32>, vector<8x32xf32> -> vector<8x32xf32>
    %289 = tpu.concatenate %231, %250, %269, %288 in 1 : vector<8x32xf32>, vector<8x32xf32>, vector<8x32xf32>, vector<8x32xf32> -> vector<8x128xf32>
    %c1_113 = arith.constant 1 : index
    %c0_114 = arith.constant 0 : index
    %c0_115 = arith.constant 0 : index
    %290 = vector.load %arg7[%c1_113, %c0_114, %c0_115] : memref<2x128x128xf32, #tpu.memory_space<vmem>>, vector<1x128x128xf32>
    %291 = vector.shape_cast %290 : vector<1x128x128xf32> to vector<128x128xf32>
    %cst_116 = arith.constant dense<0.000000e+00> : vector<8x128xf32>
    %292 = tpu.matmul %289, %291, %cst_116 {dimension_numbers = #tpu.dot_dimension_numbers<[1], [0], [0], [1], [0, 0, 1, 1], [], []>} : vector<8x128xf32>, vector<128x128xf32>, vector<8x128xf32> -> vector<8x128xf32>
    %c1_117 = arith.constant 1 : index
    %c0_118 = arith.constant 0 : index
    %c0_119 = arith.constant 0 : index
    %293 = vector.load %arg8[%c1_117, %c0_118, %c0_119] : memref<2x1x128xf32, #tpu.memory_space<vmem>>, vector<1x1x128xf32>
    %294 = vector.shape_cast %293 : vector<1x1x128xf32> to vector<1x128xf32>
    %295 = vector.broadcast %294 : vector<1x128xf32> to vector<8x128xf32>
    %296 = arith.addf %292, %295 : vector<8x128xf32>
    %297 = arith.addf %296, %202 : vector<8x128xf32>
    %c1_120 = arith.constant 1 : index
    %c0_121 = arith.constant 0 : index
    %c0_122 = arith.constant 0 : index
    %298 = vector.load %arg9[%c1_120, %c0_121, %c0_122] : memref<2x1x128xf32, #tpu.memory_space<vmem>>, vector<1x1x128xf32>
    %299 = vector.shape_cast %298 : vector<1x1x128xf32> to vector<1x128xf32>
    %c1_123 = arith.constant 1 : index
    %c0_124 = arith.constant 0 : index
    %c0_125 = arith.constant 0 : index
    %300 = vector.load %arg10[%c1_123, %c0_124, %c0_125] : memref<2x1x128xf32, #tpu.memory_space<vmem>>, vector<1x1x128xf32>
    %301 = vector.shape_cast %300 : vector<1x1x128xf32> to vector<1x128xf32>
    %cst_126 = arith.constant dense<0.000000e+00> : vector<8xf32>
    %302 = vector.multi_reduction <add>, %297, %cst_126 [1] : vector<8x128xf32> to vector<8xf32>
    %303 = vector.shape_cast %302 : vector<8xf32> to vector<8x1xf32>
    %cst_127 = arith.constant 1.280000e+02 : f32
    %304 = vector.broadcast %cst_127 : f32 to vector<8x1xf32>
    %305 = arith.divf %303, %304 : vector<8x1xf32>
    %306 = vector.broadcast %305 : vector<8x1xf32> to vector<8x128xf32>
    %307 = arith.subf %297, %306 : vector<8x128xf32>
    %308 = arith.mulf %307, %307 : vector<8x128xf32>
    %cst_128 = arith.constant dense<0.000000e+00> : vector<8xf32>
    %309 = vector.multi_reduction <add>, %308, %cst_128 [1] : vector<8x128xf32> to vector<8xf32>
    %310 = vector.shape_cast %309 : vector<8xf32> to vector<8x1xf32>
    %cst_129 = arith.constant 1.280000e+02 : f32
    %311 = vector.broadcast %cst_129 : f32 to vector<8x1xf32>
    %312 = arith.divf %310, %311 : vector<8x1xf32>
    %313 = vector.broadcast %305 : vector<8x1xf32> to vector<8x128xf32>
    %314 = arith.subf %297, %313 : vector<8x128xf32>
    %cst_130 = arith.constant 9.99999996E-13 : f32
    %315 = vector.broadcast %cst_130 : f32 to vector<8x1xf32>
    %316 = arith.addf %312, %315 : vector<8x1xf32>
    %317 = math.rsqrt %316 : vector<8x1xf32>
    %318 = vector.broadcast %317 : vector<8x1xf32> to vector<8x128xf32>
    %319 = arith.mulf %314, %318 : vector<8x128xf32>
    %320 = vector.broadcast %299 : vector<1x128xf32> to vector<8x128xf32>
    %321 = arith.mulf %319, %320 : vector<8x128xf32>
    %322 = vector.broadcast %301 : vector<1x128xf32> to vector<8x128xf32>
    %323 = arith.addf %321, %322 : vector<8x128xf32>
    %c1_131 = arith.constant 1 : index
    %c0_132 = arith.constant 0 : index
    %c0_133 = arith.constant 0 : index
    %324 = vector.load %arg11[%c1_131, %c0_132, %c0_133] : memref<2x128x256xf32, #tpu.memory_space<vmem>>, vector<1x128x256xf32>
    %325 = vector.shape_cast %324 : vector<1x128x256xf32> to vector<128x256xf32>
    %cst_134 = arith.constant dense<0.000000e+00> : vector<8x256xf32>
    %326 = tpu.matmul %323, %325, %cst_134 {dimension_numbers = #tpu.dot_dimension_numbers<[1], [0], [0], [1], [0, 0, 1, 1], [], []>} : vector<8x128xf32>, vector<128x256xf32>, vector<8x256xf32> -> vector<8x256xf32>
    %c1_135 = arith.constant 1 : index
    %c0_136 = arith.constant 0 : index
    %c0_137 = arith.constant 0 : index
    %327 = vector.load %arg12[%c1_135, %c0_136, %c0_137] : memref<2x1x256xf32, #tpu.memory_space<vmem>>, vector<1x1x256xf32>
    %328 = vector.shape_cast %327 : vector<1x1x256xf32> to vector<1x256xf32>
    %329 = vector.broadcast %328 : vector<1x256xf32> to vector<8x256xf32>
    %330 = arith.addf %326, %329 : vector<8x256xf32>
    %331 = arith.mulf %330, %330 : vector<8x256xf32>
    %332 = arith.mulf %330, %331 : vector<8x256xf32>
    %cst_138 = arith.constant 4.471500e-02 : f32
    %333 = vector.broadcast %cst_138 : f32 to vector<8x256xf32>
    %334 = arith.mulf %333, %332 : vector<8x256xf32>
    %335 = arith.addf %330, %334 : vector<8x256xf32>
    %cst_139 = arith.constant 0.797884583 : f32
    %336 = vector.broadcast %cst_139 : f32 to vector<8x256xf32>
    %337 = arith.mulf %336, %335 : vector<8x256xf32>
    %338 = math.tanh %337 : vector<8x256xf32>
    %cst_140 = arith.constant 1.000000e+00 : f32
    %339 = vector.broadcast %cst_140 : f32 to vector<8x256xf32>
    %340 = arith.addf %339, %338 : vector<8x256xf32>
    %cst_141 = arith.constant 5.000000e-01 : f32
    %341 = vector.broadcast %cst_141 : f32 to vector<8x256xf32>
    %342 = arith.mulf %341, %340 : vector<8x256xf32>
    %343 = arith.mulf %330, %342 : vector<8x256xf32>
    %c1_142 = arith.constant 1 : index
    %c0_143 = arith.constant 0 : index
    %c0_144 = arith.constant 0 : index
    %344 = vector.load %arg13[%c1_142, %c0_143, %c0_144] : memref<2x256x128xf32, #tpu.memory_space<vmem>>, vector<1x256x128xf32>
    %345 = vector.shape_cast %344 : vector<1x256x128xf32> to vector<256x128xf32>
    %cst_145 = arith.constant dense<0.000000e+00> : vector<8x128xf32>
    %346 = tpu.matmul %343, %345, %cst_145 {dimension_numbers = #tpu.dot_dimension_numbers<[1], [0], [0], [1], [0, 0, 1, 1], [], []>} : vector<8x256xf32>, vector<256x128xf32>, vector<8x128xf32> -> vector<8x128xf32>
    %c1_146 = arith.constant 1 : index
    %c0_147 = arith.constant 0 : index
    %c0_148 = arith.constant 0 : index
    %347 = vector.load %arg14[%c1_146, %c0_147, %c0_148] : memref<2x1x128xf32, #tpu.memory_space<vmem>>, vector<1x1x128xf32>
    %348 = vector.shape_cast %347 : vector<1x1x128xf32> to vector<1x128xf32>
    %349 = vector.broadcast %348 : vector<1x128xf32> to vector<8x128xf32>
    %350 = arith.addf %346, %349 : vector<8x128xf32>
    %351 = arith.addf %350, %323 : vector<8x128xf32>
    %c1_149 = arith.constant 1 : index
    %c0_150 = arith.constant 0 : index
    %c0_151 = arith.constant 0 : index
    %352 = vector.load %arg15[%c1_149, %c0_150, %c0_151] : memref<2x1x128xf32, #tpu.memory_space<vmem>>, vector<1x1x128xf32>
    %353 = vector.shape_cast %352 : vector<1x1x128xf32> to vector<1x128xf32>
    %c1_152 = arith.constant 1 : index
    %c0_153 = arith.constant 0 : index
    %c0_154 = arith.constant 0 : index
    %354 = vector.load %arg16[%c1_152, %c0_153, %c0_154] : memref<2x1x128xf32, #tpu.memory_space<vmem>>, vector<1x1x128xf32>
    %355 = vector.shape_cast %354 : vector<1x1x128xf32> to vector<1x128xf32>
    %cst_155 = arith.constant dense<0.000000e+00> : vector<8xf32>
    %356 = vector.multi_reduction <add>, %351, %cst_155 [1] : vector<8x128xf32> to vector<8xf32>
    %357 = vector.shape_cast %356 : vector<8xf32> to vector<8x1xf32>
    %cst_156 = arith.constant 1.280000e+02 : f32
    %358 = vector.broadcast %cst_156 : f32 to vector<8x1xf32>
    %359 = arith.divf %357, %358 : vector<8x1xf32>
    %360 = vector.broadcast %359 : vector<8x1xf32> to vector<8x128xf32>
    %361 = arith.subf %351, %360 : vector<8x128xf32>
    %362 = arith.mulf %361, %361 : vector<8x128xf32>
    %cst_157 = arith.constant dense<0.000000e+00> : vector<8xf32>
    %363 = vector.multi_reduction <add>, %362, %cst_157 [1] : vector<8x128xf32> to vector<8xf32>
    %364 = vector.shape_cast %363 : vector<8xf32> to vector<8x1xf32>
    %cst_158 = arith.constant 1.280000e+02 : f32
    %365 = vector.broadcast %cst_158 : f32 to vector<8x1xf32>
    %366 = arith.divf %364, %365 : vector<8x1xf32>
    %367 = vector.broadcast %359 : vector<8x1xf32> to vector<8x128xf32>
    %368 = arith.subf %351, %367 : vector<8x128xf32>
    %cst_159 = arith.constant 9.99999996E-13 : f32
    %369 = vector.broadcast %cst_159 : f32 to vector<8x1xf32>
    %370 = arith.addf %366, %369 : vector<8x1xf32>
    %371 = math.rsqrt %370 : vector<8x1xf32>
    %372 = vector.broadcast %371 : vector<8x1xf32> to vector<8x128xf32>
    %373 = arith.mulf %368, %372 : vector<8x128xf32>
    %374 = vector.broadcast %353 : vector<1x128xf32> to vector<8x128xf32>
    %375 = arith.mulf %373, %374 : vector<8x128xf32>
    %376 = vector.broadcast %355 : vector<1x128xf32> to vector<8x128xf32>
    %377 = arith.addf %375, %376 : vector<8x128xf32>
    %378 = vector.extract_strided_slice %377 {offsets = [0, 0], sizes = [1, 128], strides = [1, 1]} : vector<8x128xf32> to vector<1x128xf32>
    %c0_160 = arith.constant 0 : index
    %c0_161 = arith.constant 0 : index
    %379 = vector.load %arg17[%c0_160, %c0_161] : memref<128x128xf32, #tpu.memory_space<vmem>>, vector<128x128xf32>
    %cst_162 = arith.constant dense<0.000000e+00> : vector<1x128xf32>
    %380 = tpu.matmul %378, %379, %cst_162 {dimension_numbers = #tpu.dot_dimension_numbers<[1], [0], [0], [1], [0, 0, 1, 1], [], []>} : vector<1x128xf32>, vector<128x128xf32>, vector<1x128xf32> -> vector<1x128xf32>
    %c0_163 = arith.constant 0 : index
    %c0_164 = arith.constant 0 : index
    %381 = vector.load %arg18[%c0_163, %c0_164] : memref<1x128xf32, #tpu.memory_space<vmem>>, vector<1x128xf32>
    %382 = arith.addf %380, %381 : vector<1x128xf32>
    %383 = math.tanh %382 : vector<1x128xf32>
    %c0_165 = arith.constant 0 : index
    %c0_166 = arith.constant 0 : index
    %c0_167 = arith.constant 0 : index
    %384 = vector.load %arg19[%c0_165, %c0_166, %c0_167] : memref<1x1x128xf32, #tpu.memory_space<vmem>>, vector<1x1x128xf32>
    %385 = vector.shape_cast %384 : vector<1x1x128xf32> to vector<1x128xf32>
    %386 = vector.shape_cast %383 : vector<1x128xf32> to vector<1x1x128xf32>
    tpu.vector_store %arg19[%c0_165, %c0_166, %c0_167], %386 {strides = array<i32>} : memref<1x1x128xf32, #tpu.memory_space<vmem>>, vector<1x1x128xf32>,
    return
  }
  func.func @transform_0(%arg0: i32) -> (i32, i32, i32) {
    %c0_i32 = arith.constant 0 : i32
    %c0_i32_0 = arith.constant 0 : i32
    %c0_i32_1 = arith.constant 0 : i32
    return %arg0, %c0_i32, %c0_i32_0 : i32, i32, i32
  }
  func.func @transform_1(%arg0: i32) -> (i32, i32, i32) {
    %c0_i32 = arith.constant 0 : i32
    %c0_i32_0 = arith.constant 0 : i32
    %c0_i32_1 = arith.constant 0 : i32
    return %arg0, %c0_i32, %c0_i32_0 : i32, i32, i32
  }
  func.func @transform_2(%arg0: i32) -> (i32, i32) {
    %c0_i32 = arith.constant 0 : i32
    %c0_i32_0 = arith.constant 0 : i32
    %c0_i32_1 = arith.constant 0 : i32
    return %c0_i32, %c0_i32_0 : i32, i32
  }
  func.func @transform_3(%arg0: i32) -> (i32, i32) {
    %c0_i32 = arith.constant 0 : i32
    %c0_i32_0 = arith.constant 0 : i32
    %c0_i32_1 = arith.constant 0 : i32
    return %c0_i32, %c0_i32_0 : i32, i32
  }
  func.func @transform_4(%arg0: i32) -> (i32, i32, i32) {
    %c0_i32 = arith.constant 0 : i32
    %c0_i32_0 = arith.constant 0 : i32
    %c0_i32_1 = arith.constant 0 : i32
    %c0_i32_2 = arith.constant 0 : i32
    return %c0_i32, %c0_i32_0, %c0_i32_1 : i32, i32, i32
  }
  func.func @transform_5(%arg0: i32) -> (i32, i32, i32) {
    %c0_i32 = arith.constant 0 : i32
    %c0_i32_0 = arith.constant 0 : i32
    %c0_i32_1 = arith.constant 0 : i32
    %c0_i32_2 = arith.constant 0 : i32
    return %c0_i32, %c0_i32_0, %c0_i32_1 : i32, i32, i32
  }
  func.func @transform_6(%arg0: i32) -> (i32, i32, i32) {
    %c0_i32 = arith.constant 0 : i32
    %c0_i32_0 = arith.constant 0 : i32
    %c0_i32_1 = arith.constant 0 : i32
    %c0_i32_2 = arith.constant 0 : i32
    return %c0_i32, %c0_i32_0, %c0_i32_1 : i32, i32, i32
  }
  func.func @transform_7(%arg0: i32) -> (i32, i32, i32) {
    %c0_i32 = arith.constant 0 : i32
    %c0_i32_0 = arith.constant 0 : i32
    %c0_i32_1 = arith.constant 0 : i32
    %c0_i32_2 = arith.constant 0 : i32
    return %c0_i32, %c0_i32_0, %c0_i32_1 : i32, i32, i32
  }
  func.func @transform_8(%arg0: i32) -> (i32, i32, i32) {
    %c0_i32 = arith.constant 0 : i32
    %c0_i32_0 = arith.constant 0 : i32
    %c0_i32_1 = arith.constant 0 : i32
    %c0_i32_2 = arith.constant 0 : i32
    return %c0_i32, %c0_i32_0, %c0_i32_1 : i32, i32, i32
  }
  func.func @transform_9(%arg0: i32) -> (i32, i32, i32) {
    %c0_i32 = arith.constant 0 : i32
    %c0_i32_0 = arith.constant 0 : i32
    %c0_i32_1 = arith.constant 0 : i32
    %c0_i32_2 = arith.constant 0 : i32
    return %c0_i32, %c0_i32_0, %c0_i32_1 : i32, i32, i32
  }
  func.func @transform_10(%arg0: i32) -> (i32, i32, i32) {
    %c0_i32 = arith.constant 0 : i32
    %c0_i32_0 = arith.constant 0 : i32
    %c0_i32_1 = arith.constant 0 : i32
    %c0_i32_2 = arith.constant 0 : i32
    return %c0_i32, %c0_i32_0, %c0_i32_1 : i32, i32, i32
  }
  func.func @transform_11(%arg0: i32) -> (i32, i32, i32) {
    %c0_i32 = arith.constant 0 : i32
    %c0_i32_0 = arith.constant 0 : i32
    %c0_i32_1 = arith.constant 0 : i32
    %c0_i32_2 = arith.constant 0 : i32
    return %c0_i32, %c0_i32_0, %c0_i32_1 : i32, i32, i32
  }
  func.func @transform_12(%arg0: i32) -> (i32, i32, i32) {
    %c0_i32 = arith.constant 0 : i32
    %c0_i32_0 = arith.constant 0 : i32
    %c0_i32_1 = arith.constant 0 : i32
    %c0_i32_2 = arith.constant 0 : i32
    return %c0_i32, %c0_i32_0, %c0_i32_1 : i32, i32, i32
  }
  func.func @transform_13(%arg0: i32) -> (i32, i32, i32) {
    %c0_i32 = arith.constant 0 : i32
    %c0_i32_0 = arith.constant 0 : i32
    %c0_i32_1 = arith.constant 0 : i32
    %c0_i32_2 = arith.constant 0 : i32
    return %c0_i32, %c0_i32_0, %c0_i32_1 : i32, i32, i32
  }
  func.func @transform_14(%arg0: i32) -> (i32, i32, i32) {
    %c0_i32 = arith.constant 0 : i32
    %c0_i32_0 = arith.constant 0 : i32
    %c0_i32_1 = arith.constant 0 : i32
    %c0_i32_2 = arith.constant 0 : i32
    return %c0_i32, %c0_i32_0, %c0_i32_1 : i32, i32, i32
  }
  func.func @transform_15(%arg0: i32) -> (i32, i32, i32) {
    %c0_i32 = arith.constant 0 : i32
    %c0_i32_0 = arith.constant 0 : i32
    %c0_i32_1 = arith.constant 0 : i32
    %c0_i32_2 = arith.constant 0 : i32
    return %c0_i32, %c0_i32_0, %c0_i32_1 : i32, i32, i32
  }
  func.func @transform_16(%arg0: i32) -> (i32, i32) {
    %c0_i32 = arith.constant 0 : i32
    %c0_i32_0 = arith.constant 0 : i32
    %c0_i32_1 = arith.constant 0 : i32
    return %c0_i32, %c0_i32_0 : i32, i32
  }
  func.func @transform_17(%arg0: i32) -> (i32, i32) {
    %c0_i32 = arith.constant 0 : i32
    %c0_i32_0 = arith.constant 0 : i32
    %c0_i32_1 = arith.constant 0 : i32
    return %c0_i32, %c0_i32_0 : i32, i32
  }
  func.func @transform_18(%arg0: i32) -> (i32, i32, i32) {
    %c0_i32 = arith.constant 0 : i32
    %c0_i32_0 = arith.constant 0 : i32
    %c0_i32_1 = arith.constant 0 : i32
    return %arg0, %c0_i32, %c0_i32_0 : i32, i32, i32
  }
}

</mosaic_0001>

<llo_original>
// kernel: predict_sentiment.1
$region0: #{predict_sentiment.1}
  #allocation0 [shape = 'u32[]', space=smem, size = 0x4, offset = 0x4, fixed_abs, tag = 'smem constant byte address 0x4 - core index']
  #allocation1 [shape = 'u32[144,128]{1,0:T(1,128)}', space=vmem, size = 0x12000, scoped, tag = 'internal scratch']
  %s0 = inlined_call_operand.vmem [shape: f32[2,8,128], index: 0, kind: input, shape index: {}]
  %s1 = inlined_call_operand.vmem [shape: f32[2,1,8], index: 1, kind: input, shape index: {}]
  %s2 = inlined_call_operand.hbm [shape: f32[1,128], index: 2, kind: input, shape index: {}]
  %s3 = inlined_call_operand.hbm [shape: f32[1,128], index: 3, kind: input, shape index: {}]
  %s4 = inlined_call_operand.hbm [shape: f32[2,128,384], index: 4, kind: input, shape index: {}]
  %s5 = inlined_call_operand.vmem [shape: f32[2,1,384], index: 5, kind: input, shape index: {}]
  %s6 = inlined_call_operand.vmem [shape: f32[2,128,128], index: 6, kind: input, shape index: {}]
  %s7 = inlined_call_operand.vmem [shape: f32[2,1,128], index: 7, kind: input, shape index: {}]
  %s8 = inlined_call_operand.vmem [shape: f32[2,1,128], index: 8, kind: input, shape index: {}]
  %s9 = inlined_call_operand.vmem [shape: f32[2,1,128], index: 9, kind: input, shape index: {}]
  %s10 = inlined_call_operand.hbm [shape: f32[2,128,256], index: 10, kind: input, shape index: {}]
  %s11 = inlined_call_operand.vmem [shape: f32[2,1,256], index: 11, kind: input, shape index: {}]
  %s12 = inlined_call_operand.hbm [shape: f32[2,256,128], index: 12, kind: input, shape index: {}]
  %s13 = inlined_call_operand.vmem [shape: f32[2,1,128], index: 13, kind: input, shape index: {}]
  %s14 = inlined_call_operand.vmem [shape: f32[2,1,128], index: 14, kind: input, shape index: {}]
  %s15 = inlined_call_operand.hbm [shape: f32[2,1,128], index: 15, kind: input, shape index: {}]
  %s16 = inlined_call_operand.hbm [shape: f32[128,128], index: 16, kind: input, shape index: {}]
  %s17 = inlined_call_operand.hbm [shape: f32[1,128], index: 17, kind: input, shape index: {}]
  %s18 = inlined_call_operand.vmem [shape: f32[2,1,128], index: 18, kind: output, shape index: {}]
  %s19 = sld [smem:[#allocation0]]
  $region137: #{predict_sentiment.1} parent=0
    _
  %s21 = ssub.s32 1, %s19
  %s22 = scalar_select 0, %s21, %s19
  $region1: #{predict_sentiment.1} parent=0
    #allocation2 [shape = 'u8[512]{0}', space=vmem, size = 0x400, scoped, tag = 'input window, operand 2, single buffered']
    #allocation3 [shape = 's32[2]{0}', space=sflag, size = 0x8, scoped, tag = 'scoped memory for predict_sentiment.1']
    #allocation4 [shape = 'u8[512]{0}', space=vmem, size = 0x400, scoped, tag = 'input window, operand 3, single buffered']
    #allocation5 [shape = 's32[1]{0}', space=sflag, size = 0x4, scoped, tag = 'scoped memory for predict_sentiment.1']
    #allocation6 [shape = 'u8[393216]{0}', space=vmem, size = 0x60000, scoped, tag = 'input window, operand 4, single buffered']
    #allocation7 [shape = 'u8[262144]{0}', space=vmem, size = 0x40000, scoped, tag = 'input window, operand 10, single buffered']
    #allocation8 [shape = 's32[1]{0}', space=sflag, size = 0x4, scoped, tag = 'scoped memory for predict_sentiment.1']
    #allocation9 [shape = 'u8[262144]{0}', space=vmem, size = 0x40000, scoped, tag = 'input window, operand 12, single buffered']
    #allocation10 [shape = 'u8[1024]{0}', space=vmem, size = 0x400, scoped, tag = 'input window, operand 15, single buffered']
    #allocation11 [shape = 's32[1]{0}', space=sflag, size = 0x4, scoped, tag = 'scoped memory for predict_sentiment.1']
    #allocation12 [shape = 'u8[65536]{0}', space=vmem, size = 0x10000, scoped, tag = 'input window, operand 16, single buffered']
    #allocation13 [shape = 'u8[512]{0}', space=vmem, size = 0x400, scoped, tag = 'input window, operand 17, single buffered']
    #allocation14 [shape = 's32[1]{0}', space=sflag, size = 0x4, scoped, tag = 'scoped memory for predict_sentiment.1']
    %23 = vsyncpa [#allocation3], 0
    %24 = vsyncpa [#allocation5], 0
    %25 = vsyncpa [#allocation8], 0
    %26 = vsyncpa [#allocation11], 0
    %27 = vsyncpa [#allocation14], 0
    loop: start=0, step=1, limit=4
    $region2: #{predict_sentiment.1} parent=1 // loop_pre_header
      _
    $region3: #{predict_sentiment.1} parent=1 // loop_header
      %s29 = sphi 0, %s33
      %p30 = scmp.ge.s32.totalorder %s29, 4
      %s39 = sphi 0, %s41
      %s42 = sphi 0, %s39
      %s43 = sphi 0, %s42
      %s59 = sphi 0, %s43
      %s65 = sphi 0, %s67
      %s68 = sphi 0, %s65
      %s69 = sphi 0, %s68
      %s85 = sphi 0, %s69
      %s89 = sphi 0, %s89
      %s91 = sphi 0, %s89
      %s92 = sphi 0, %s91
      %s106 = sphi 0, %s92
      %s110 = sphi 0, %s110
      %s112 = sphi 0, %s110
      %s113 = sphi 0, %s112
      %s127 = sphi 0, %s113
      %s131 = sphi 0, %s131
      %s133 = sphi 0, %s131
      %s134 = sphi 0, %s133
      %s148 = sphi 0, %s134
      %s152 = sphi 0, %s152
      %s154 = sphi 0, %s152
      %s155 = sphi 0, %s154
      %s169 = sphi 0, %s155
      %s173 = sphi 0, %s173
      %s175 = sphi 0, %s173
      %s176 = sphi 0, %s175
      %s190 = sphi 0, %s176
      %s194 = sphi 0, %s194
      %s196 = sphi 0, %s194
      %s197 = sphi 0, %s196
      %s211 = sphi 0, %s197
      %s215 = sphi 0, %s215
      %s217 = sphi 0, %s215
      %s218 = sphi 0, %s217
      %s232 = sphi 0, %s218
      %s236 = sphi 0, %s236
      %s238 = sphi 0, %s236
      %s239 = sphi 0, %s238
      %s253 = sphi 0, %s239
      %s257 = sphi 0, %s257
      %s259 = sphi 0, %s257
      %s260 = sphi 0, %s259
      %s274 = sphi 0, %s260
      %s278 = sphi 0, %s278
      %s280 = sphi 0, %s278
      %s281 = sphi 0, %s280
      %s295 = sphi 0, %s281
      %s299 = sphi 0, %s299
      %s301 = sphi 0, %s299
      %s302 = sphi 0, %s301
      %s316 = sphi 0, %s302
      %s320 = sphi 0, %s320
      %s322 = sphi 0, %s320
      %s323 = sphi 0, %s322
      %s337 = sphi 0, %s323
      %s341 = sphi 0, %s341
      %s343 = sphi 0, %s341
      %s344 = sphi 0, %s343
      %s358 = sphi 0, %s344
      %s362 = sphi 0, %s362
      %s364 = sphi 0, %s362
      %s365 = sphi 0, %s364
      %s379 = sphi 0, %s365
      %s383 = sphi 0, %s383
      %s385 = sphi 0, %s383
      %s386 = sphi 0, %s385
      %s400 = sphi 0, %s386
      %s404 = sphi 0, %s404
      %s406 = sphi 0, %s404
      %s407 = sphi 0, %s406
      %s421 = sphi 0, %s407
      %s427 = sphi 0, %s429
      %s430 = sphi 0, %s427
      %s431 = sphi 0, %s430
      %s447 = sphi 0, %s431
    $region4: #{predict_sentiment.1} parent=1 // loop_header_branch
      %32 = sbr.rel (%p30) target = $region8
    $region5: #{predict_sentiment.1} parent=1 // loop_body
      %s34 = ssub.s32 %s29, 1
      %s35 = ssub.s32 %s29, 2
      %s36 = sadd.s32 %s29, 1
      %s37 = ssub.s32 %s29, %s36
      %p38 = scmp.eq.s32.totalorder %s37, 0
      %s40 = sadd.s32 %s39, 1
      %s41 = scalar_select %p38, %s39, %s40
      %p44 = pneg %p38
      %p45 = scmp.eq.s32.totalorder %s29, 1
      %p46 = por %p44, %p45
      %p47 = scmp.ne.s32.totalorder %s39, %s42
      %p48 = scmp.eq.s32.totalorder %s29, 0
      %p49 = por %p47, %p48
      %p50 = scmp.ne.s32.totalorder %s39, %s42
      %p51 = scmp.eq.s32.totalorder %s34, 1
      %p52 = por %p50, %p51
      %p53 = scmp.ne.s32.totalorder %s42, %s43
      %p54 = scmp.eq.s32.totalorder %s34, 0
      %p55 = por %p53, %p54
      %p56 = scmp.ne.s32.totalorder %s42, %s43
      %p57 = scmp.eq.s32.totalorder %s35, 1
      %p58 = por %p56, %p57
      %p60 = scmp.ne.s32.totalorder %s43, %s59
      %p61 = scmp.eq.s32.totalorder %s35, 0
      %p62 = por %p60, %p61
      %s63 = ssub.s32 %s29, %s36
      %p64 = scmp.eq.s32.totalorder %s63, 0
      %s66 = sadd.s32 %s65, 1
      %s67 = scalar_select %p64, %s65, %s66
      %p70 = pneg %p64
      %p71 = scmp.eq.s32.totalorder %s29, 1
      %p72 = por %p70, %p71
      %p73 = scmp.ne.s32.totalorder %s65, %s68
      %p74 = scmp.eq.s32.totalorder %s29, 0
      %p75 = por %p73, %p74
      %p76 = scmp.ne.s32.totalorder %s65, %s68
      %p77 = scmp.eq.s32.totalorder %s34, 1
      %p78 = por %p76, %p77
      %p79 = scmp.ne.s32.totalorder %s68, %s69
      %p80 = scmp.eq.s32.totalorder %s34, 0
      %p81 = por %p79, %p80
      %p82 = scmp.ne.s32.totalorder %s68, %s69
      %p83 = scmp.eq.s32.totalorder %s35, 1
      %p84 = por %p82, %p83
      %p86 = scmp.ne.s32.totalorder %s69, %s85
      %p87 = scmp.eq.s32.totalorder %s35, 0
      %p88 = por %p86, %p87
      %s90 = sadd.s32 %s89, 1
      %p93 = scmp.eq.s32.totalorder %s29, 1
      %p94 = scmp.ne.s32.totalorder %s89, %s91
      %p95 = scmp.eq.s32.totalorder %s29, 0
      %p96 = por %p94, %p95
      %p97 = scmp.ne.s32.totalorder %s89, %s91
      %p98 = scmp.eq.s32.totalorder %s34, 1
      %p99 = por %p97, %p98
      %p100 = scmp.ne.s32.totalorder %s91, %s92
      %p101 = scmp.eq.s32.totalorder %s34, 0
      %p102 = por %p100, %p101
      %p103 = scmp.ne.s32.totalorder %s91, %s92
      %p104 = scmp.eq.s32.totalorder %s35, 1
      %p105 = por %p103, %p104
      %p107 = scmp.ne.s32.totalorder %s92, %s106
      %p108 = scmp.eq.s32.totalorder %s35, 0
      %p109 = por %p107, %p108
      %s111 = sadd.s32 %s110, 1
      %p114 = scmp.eq.s32.totalorder %s29, 1
      %p115 = scmp.ne.s32.totalorder %s110, %s112
      %p116 = scmp.eq.s32.totalorder %s29, 0
      %p117 = por %p115, %p116
      %p118 = scmp.ne.s32.totalorder %s110, %s112
      %p119 = scmp.eq.s32.totalorder %s34, 1
      %p120 = por %p118, %p119
      %p121 = scmp.ne.s32.totalorder %s112, %s113
      %p122 = scmp.eq.s32.totalorder %s34, 0
      %p123 = por %p121, %p122
      %p124 = scmp.ne.s32.totalorder %s112, %s113
      %p125 = scmp.eq.s32.totalorder %s35, 1
      %p126 = por %p124, %p125
      %p128 = scmp.ne.s32.totalorder %s113, %s127
      %p129 = scmp.eq.s32.totalorder %s35, 0
      %p130 = por %p128, %p129
      %s132 = sadd.s32 %s131, 1
      %p135 = scmp.eq.s32.totalorder %s29, 1
      %p136 = scmp.ne.s32.totalorder %s131, %s133
      %p137 = scmp.eq.s32.totalorder %s29, 0
      %p138 = por %p136, %p137
      %p139 = scmp.ne.s32.totalorder %s131, %s133
      %p140 = scmp.eq.s32.totalorder %s34, 1
      %p141 = por %p139, %p140
      %p142 = scmp.ne.s32.totalorder %s133, %s134
      %p143 = scmp.eq.s32.totalorder %s34, 0
      %p144 = por %p142, %p143
      %p145 = scmp.ne.s32.totalorder %s133, %s134
      %p146 = scmp.eq.s32.totalorder %s35, 1
      %p147 = por %p145, %p146
      %p149 = scmp.ne.s32.totalorder %s134, %s148
      %p150 = scmp.eq.s32.totalorder %s35, 0
      %p151 = por %p149, %p150
      %s153 = sadd.s32 %s152, 1
      %p156 = scmp.eq.s32.totalorder %s29, 1
      %p157 = scmp.ne.s32.totalorder %s152, %s154
      %p158 = scmp.eq.s32.totalorder %s29, 0
      %p159 = por %p157, %p158
      %p160 = scmp.ne.s32.totalorder %s152, %s154
      %p161 = scmp.eq.s32.totalorder %s34, 1
      %p162 = por %p160, %p161
      %p163 = scmp.ne.s32.totalorder %s154, %s155
      %p164 = scmp.eq.s32.totalorder %s34, 0
      %p165 = por %p163, %p164
      %p166 = scmp.ne.s32.totalorder %s154, %s155
      %p167 = scmp.eq.s32.totalorder %s35, 1
      %p168 = por %p166, %p167
      %p170 = scmp.ne.s32.totalorder %s155, %s169
      %p171 = scmp.eq.s32.totalorder %s35, 0
      %p172 = por %p170, %p171
      %s174 = sadd.s32 %s173, 1
      %p177 = scmp.eq.s32.totalorder %s29, 1
      %p178 = scmp.ne.s32.totalorder %s173, %s175
      %p179 = scmp.eq.s32.totalorder %s29, 0
      %p180 = por %p178, %p179
      %p181 = scmp.ne.s32.totalorder %s173, %s175
      %p182 = scmp.eq.s32.totalorder %s34, 1
      %p183 = por %p181, %p182
      %p184 = scmp.ne.s32.totalorder %s175, %s176
      %p185 = scmp.eq.s32.totalorder %s34, 0
      %p186 = por %p184, %p185
      %p187 = scmp.ne.s32.totalorder %s175, %s176
      %p188 = scmp.eq.s32.totalorder %s35, 1
      %p189 = por %p187, %p188
      %p191 = scmp.ne.s32.totalorder %s176, %s190
      %p192 = scmp.eq.s32.totalorder %s35, 0
      %p193 = por %p191, %p192
      %s195 = sadd.s32 %s194, 1
      %p198 = scmp.eq.s32.totalorder %s29, 1
      %p199 = scmp.ne.s32.totalorder %s194, %s196
      %p200 = scmp.eq.s32.totalorder %s29, 0
      %p201 = por %p199, %p200
      %p202 = scmp.ne.s32.totalorder %s194, %s196
      %p203 = scmp.eq.s32.totalorder %s34, 1
      %p204 = por %p202, %p203
      %p205 = scmp.ne.s32.totalorder %s196, %s197
      %p206 = scmp.eq.s32.totalorder %s34, 0
      %p207 = por %p205, %p206
      %p208 = scmp.ne.s32.totalorder %s196, %s197
      %p209 = scmp.eq.s32.totalorder %s35, 1
      %p210 = por %p208, %p209
      %p212 = scmp.ne.s32.totalorder %s197, %s211
      %p213 = scmp.eq.s32.totalorder %s35, 0
      %p214 = por %p212, %p213
      %s216 = sadd.s32 %s215, 1
      %p219 = scmp.eq.s32.totalorder %s29, 1
      %p220 = scmp.ne.s32.totalorder %s215, %s217
      %p221 = scmp.eq.s32.totalorder %s29, 0
      %p222 = por %p220, %p221
      %p223 = scmp.ne.s32.totalorder %s215, %s217
      %p224 = scmp.eq.s32.totalorder %s34, 1
      %p225 = por %p223, %p224
      %p226 = scmp.ne.s32.totalorder %s217, %s218
      %p227 = scmp.eq.s32.totalorder %s34, 0
      %p228 = por %p226, %p227
      %p229 = scmp.ne.s32.totalorder %s217, %s218
      %p230 = scmp.eq.s32.totalorder %s35, 1
      %p231 = por %p229, %p230
      %p233 = scmp.ne.s32.totalorder %s218, %s232
      %p234 = scmp.eq.s32.totalorder %s35, 0
      %p235 = por %p233, %p234
      %s237 = sadd.s32 %s236, 1
      %p240 = scmp.eq.s32.totalorder %s29, 1
      %p241 = scmp.ne.s32.totalorder %s236, %s238
      %p242 = scmp.eq.s32.totalorder %s29, 0
      %p243 = por %p241, %p242
      %p244 = scmp.ne.s32.totalorder %s236, %s238
      %p245 = scmp.eq.s32.totalorder %s34, 1
      %p246 = por %p244, %p245
      %p247 = scmp.ne.s32.totalorder %s238, %s239
      %p248 = scmp.eq.s32.totalorder %s34, 0
      %p249 = por %p247, %p248
      %p250 = scmp.ne.s32.totalorder %s238, %s239
      %p251 = scmp.eq.s32.totalorder %s35, 1
      %p252 = por %p250, %p251
      %p254 = scmp.ne.s32.totalorder %s239, %s253
      %p255 = scmp.eq.s32.totalorder %s35, 0
      %p256 = por %p254, %p255
      %s258 = sadd.s32 %s257, 1
      %p261 = scmp.eq.s32.totalorder %s29, 1
      %p262 = scmp.ne.s32.totalorder %s257, %s259
      %p263 = scmp.eq.s32.totalorder %s29, 0
      %p264 = por %p262, %p263
      %p265 = scmp.ne.s32.totalorder %s257, %s259
      %p266 = scmp.eq.s32.totalorder %s34, 1
      %p267 = por %p265, %p266
      %p268 = scmp.ne.s32.totalorder %s259, %s260
      %p269 = scmp.eq.s32.totalorder %s34, 0
      %p270 = por %p268, %p269
      %p271 = scmp.ne.s32.totalorder %s259, %s260
      %p272 = scmp.eq.s32.totalorder %s35, 1
      %p273 = por %p271, %p272
      %p275 = scmp.ne.s32.totalorder %s260, %s274
      %p276 = scmp.eq.s32.totalorder %s35, 0
      %p277 = por %p275, %p276
      %s279 = sadd.s32 %s278, 1
      %p282 = scmp.eq.s32.totalorder %s29, 1
      %p283 = scmp.ne.s32.totalorder %s278, %s280
      %p284 = scmp.eq.s32.totalorder %s29, 0
      %p285 = por %p283, %p284
      %p286 = scmp.ne.s32.totalorder %s278, %s280
      %p287 = scmp.eq.s32.totalorder %s34, 1
      %p288 = por %p286, %p287
      %p289 = scmp.ne.s32.totalorder %s280, %s281
      %p290 = scmp.eq.s32.totalorder %s34, 0
      %p291 = por %p289, %p290
      %p292 = scmp.ne.s32.totalorder %s280, %s281
      %p293 = scmp.eq.s32.totalorder %s35, 1
      %p294 = por %p292, %p293
      %p296 = scmp.ne.s32.totalorder %s281, %s295
      %p297 = scmp.eq.s32.totalorder %s35, 0
      %p298 = por %p296, %p297
      %s300 = sadd.s32 %s299, 1
      %p303 = scmp.eq.s32.totalorder %s29, 1
      %p304 = scmp.ne.s32.totalorder %s299, %s301
      %p305 = scmp.eq.s32.totalorder %s29, 0
      %p306 = por %p304, %p305
      %p307 = scmp.ne.s32.totalorder %s299, %s301
      %p308 = scmp.eq.s32.totalorder %s34, 1
      %p309 = por %p307, %p308
      %p310 = scmp.ne.s32.totalorder %s301, %s302
      %p311 = scmp.eq.s32.totalorder %s34, 0
      %p312 = por %p310, %p311
      %p313 = scmp.ne.s32.totalorder %s301, %s302
      %p314 = scmp.eq.s32.totalorder %s35, 1
      %p315 = por %p313, %p314
      %p317 = scmp.ne.s32.totalorder %s302, %s316
      %p318 = scmp.eq.s32.totalorder %s35, 0
      %p319 = por %p317, %p318
      %s321 = sadd.s32 %s320, 1
      %p324 = scmp.eq.s32.totalorder %s29, 1
      %p325 = scmp.ne.s32.totalorder %s320, %s322
      %p326 = scmp.eq.s32.totalorder %s29, 0
      %p327 = por %p325, %p326
      %p328 = scmp.ne.s32.totalorder %s320, %s322
      %p329 = scmp.eq.s32.totalorder %s34, 1
      %p330 = por %p328, %p329
      %p331 = scmp.ne.s32.totalorder %s322, %s323
      %p332 = scmp.eq.s32.totalorder %s34, 0
      %p333 = por %p331, %p332
      %p334 = scmp.ne.s32.totalorder %s322, %s323
      %p335 = scmp.eq.s32.totalorder %s35, 1
      %p336 = por %p334, %p335
      %p338 = scmp.ne.s32.totalorder %s323, %s337
      %p339 = scmp.eq.s32.totalorder %s35, 0
      %p340 = por %p338, %p339
      %s342 = sadd.s32 %s341, 1
      %p345 = scmp.eq.s32.totalorder %s29, 1
      %p346 = scmp.ne.s32.totalorder %s341, %s343
      %p347 = scmp.eq.s32.totalorder %s29, 0
      %p348 = por %p346, %p347
      %p349 = scmp.ne.s32.totalorder %s341, %s343
      %p350 = scmp.eq.s32.totalorder %s34, 1
      %p351 = por %p349, %p350
      %p352 = scmp.ne.s32.totalorder %s343, %s344
      %p353 = scmp.eq.s32.totalorder %s34, 0
      %p354 = por %p352, %p353
      %p355 = scmp.ne.s32.totalorder %s343, %s344
      %p356 = scmp.eq.s32.totalorder %s35, 1
      %p357 = por %p355, %p356
      %p359 = scmp.ne.s32.totalorder %s344, %s358
      %p360 = scmp.eq.s32.totalorder %s35, 0
      %p361 = por %p359, %p360
      %s363 = sadd.s32 %s362, 1
      %p366 = scmp.eq.s32.totalorder %s29, 1
      %p367 = scmp.ne.s32.totalorder %s362, %s364
      %p368 = scmp.eq.s32.totalorder %s29, 0
      %p369 = por %p367, %p368
      %p370 = scmp.ne.s32.totalorder %s362, %s364
      %p371 = scmp.eq.s32.totalorder %s34, 1
      %p372 = por %p370, %p371
      %p373 = scmp.ne.s32.totalorder %s364, %s365
      %p374 = scmp.eq.s32.totalorder %s34, 0
      %p375 = por %p373, %p374
      %p376 = scmp.ne.s32.totalorder %s364, %s365
      %p377 = scmp.eq.s32.totalorder %s35, 1
      %p378 = por %p376, %p377
      %p380 = scmp.ne.s32.totalorder %s365, %s379
      %p381 = scmp.eq.s32.totalorder %s35, 0
      %p382 = por %p380, %p381
      %s384 = sadd.s32 %s383, 1
      %p387 = scmp.eq.s32.totalorder %s29, 1
      %p388 = scmp.ne.s32.totalorder %s383, %s385
      %p389 = scmp.eq.s32.totalorder %s29, 0
      %p390 = por %p388, %p389
      %p391 = scmp.ne.s32.totalorder %s383, %s385
      %p392 = scmp.eq.s32.totalorder %s34, 1
      %p393 = por %p391, %p392
      %p394 = scmp.ne.s32.totalorder %s385, %s386
      %p395 = scmp.eq.s32.totalorder %s34, 0
      %p396 = por %p394, %p395
      %p397 = scmp.ne.s32.totalorder %s385, %s386
      %p398 = scmp.eq.s32.totalorder %s35, 1
      %p399 = por %p397, %p398
      %p401 = scmp.ne.s32.totalorder %s386, %s400
      %p402 = scmp.eq.s32.totalorder %s35, 0
      %p403 = por %p401, %p402
      %s405 = sadd.s32 %s404, 1
      %p408 = scmp.eq.s32.totalorder %s29, 1
      %p409 = scmp.ne.s32.totalorder %s404, %s406
      %p410 = scmp.eq.s32.totalorder %s29, 0
      %p411 = por %p409, %p410
      %p412 = scmp.ne.s32.totalorder %s404, %s406
      %p413 = scmp.eq.s32.totalorder %s34, 1
      %p414 = por %p412, %p413
      %p415 = scmp.ne.s32.totalorder %s406, %s407
      %p416 = scmp.eq.s32.totalorder %s34, 0
      %p417 = por %p415, %p416
      %p418 = scmp.ne.s32.totalorder %s406, %s407
      %p419 = scmp.eq.s32.totalorder %s35, 1
      %p420 = por %p418, %p419
      %p422 = scmp.ne.s32.totalorder %s407, %s421
      %p423 = scmp.eq.s32.totalorder %s35, 0
      %p424 = por %p422, %p423
      %s425 = ssub.s32 %s29, %s36
      %p426 = scmp.eq.s32.totalorder %s425, 0
      %s428 = sadd.s32 %s427, 1
      %s429 = scalar_select %p426, %s427, %s428
      %p432 = pneg %p426
      %p433 = scmp.eq.s32.totalorder %s29, 1
      %p434 = por %p432, %p433
      %p435 = scmp.ne.s32.totalorder %s427, %s430
      %p436 = scmp.eq.s32.totalorder %s29, 0
      %p437 = por %p435, %p436
      %p438 = scmp.ne.s32.totalorder %s427, %s430
      %p439 = scmp.eq.s32.totalorder %s34, 1
      %p440 = por %p438, %p439
      %p441 = scmp.ne.s32.totalorder %s430, %s431
      %p442 = scmp.eq.s32.totalorder %s34, 0
      %p443 = por %p441, %p442
      %p444 = scmp.ne.s32.totalorder %s430, %s431
      %p445 = scmp.eq.s32.totalorder %s35, 1
      %p446 = por %p444, %p445
      %p448 = scmp.ne.s32.totalorder %s431, %s447
      %p449 = scmp.eq.s32.totalorder %s35, 0
      %p450 = por %p448, %p449
      %p451 = scmp.le.s32.totalorder 1, %s29
      %p452 = scmp.lt.s32.totalorder %s29, 3
      %p453 = pnand %p451, %p452
      %p454 = pneg %p453
      // Predicated region
      $region9: #{predict_sentiment.1} parent=5 // pred_check
        _
      $region10: #{predict_sentiment.1} parent=5 // pred_check_branch
        %456 = sbr.rel (%p453) target = $region12
      $region11: #{predict_sentiment.1} parent=5 // pred_region
        %s457 = ssub.s32 %s29, 1
        // Predicated region
        $region13: #{predict_sentiment.1} parent=11 // pred_check
          %p458 = pneg %p102
        $region14: #{predict_sentiment.1} parent=11 // pred_check_branch
          %460 = sbr.rel (%p458) target = $region16
        $region15: #{predict_sentiment.1} parent=11 // pred_region
          %s462 = ssub.s32 16, 16
          %463 = vsyncadd [#allocation3], %s462
          %s465 = sshll.u32 [#allocation2], 4
          %s466 = int_to_ptr.vmem [resolvable:$true] %s465
          %468 = dma.hbm_to_vmem [thread:$0]  %s2, 16, %s466, [#allocation3]
        $region16: #{predict_sentiment.1} parent=11 // pred_fallthru
          _
        // Predicated region
        $region17: #{predict_sentiment.1} parent=11 // pred_check
          %p469 = pneg %p123
        $region18: #{predict_sentiment.1} parent=11 // pred_check_branch
          %471 = sbr.rel (%p469) target = $region20
        $region19: #{predict_sentiment.1} parent=11 // pred_region
          %s473 = ssub.s32 16, 16
          %474 = vsyncadd [#allocation5], %s473
          %s476 = sshll.u32 [#allocation4], 4
          %s477 = int_to_ptr.vmem [resolvable:$true] %s476
          %479 = dma.hbm_to_vmem [thread:$0]  %s3, 16, %s477, [#allocation5]
        $region20: #{predict_sentiment.1} parent=11 // pred_fallthru
          _
        // Predicated region
        $region21: #{predict_sentiment.1} parent=11 // pred_check
          %p480 = pneg %p144
        $region22: #{predict_sentiment.1} parent=11 // pred_check_branch
          %482 = sbr.rel (%p480) target = $region24
        $region23: #{predict_sentiment.1} parent=11 // pred_region
          %s484 = ssub.s32 12288, 12288
          %485 = vsyncadd [#allocation5], %s484
          %s486 = sshll.u32 [#allocation6], 4
          %s487 = int_to_ptr.vmem [resolvable:$true] %s486
          %492 = dma.hbm_to_vmem [thread:$0]  %s4, 12288, %s487, [#allocation5], 384, 384, 24
        $region24: #{predict_sentiment.1} parent=11 // pred_fallthru
          _
        // Predicated region
        $region25: #{predict_sentiment.1} parent=11 // pred_check
          %p493 = pneg %p165
        $region26: #{predict_sentiment.1} parent=11 // pred_check_branch
          %495 = sbr.rel (%p493) target = $region28
        $region27: #{predict_sentiment.1} parent=11 // pred_region
          _
        $region28: #{predict_sentiment.1} parent=11 // pred_fallthru
          _
        // Predicated region
        $region29: #{predict_sentiment.1} parent=11 // pred_check
          %p496 = pneg %p186
        $region30: #{predict_sentiment.1} parent=11 // pred_check_branch
          %498 = sbr.rel (%p496) target = $region32
        $region31: #{predict_sentiment.1} parent=11 // pred_region
          _
        $region32: #{predict_sentiment.1} parent=11 // pred_fallthru
          _
        // Predicated region
        $region33: #{predict_sentiment.1} parent=11 // pred_check
          %p499 = pneg %p207
        $region34: #{predict_sentiment.1} parent=11 // pred_check_branch
          %501 = sbr.rel (%p499) target = $region36
        $region35: #{predict_sentiment.1} parent=11 // pred_region
          _
        $region36: #{predict_sentiment.1} parent=11 // pred_fallthru
          _
        // Predicated region
        $region37: #{predict_sentiment.1} parent=11 // pred_check
          %p502 = pneg %p228
        $region38: #{predict_sentiment.1} parent=11 // pred_check_branch
          %504 = sbr.rel (%p502) target = $region40
        $region39: #{predict_sentiment.1} parent=11 // pred_region
          _
        $region40: #{predict_sentiment.1} parent=11 // pred_fallthru
          _
        // Predicated region
        $region41: #{predict_sentiment.1} parent=11 // pred_check
          %p505 = pneg %p249
        $region42: #{predict_sentiment.1} parent=11 // pred_check_branch
          %507 = sbr.rel (%p505) target = $region44
        $region43: #{predict_sentiment.1} parent=11 // pred_region
          _
        $region44: #{predict_sentiment.1} parent=11 // pred_fallthru
          _
        // Predicated region
        $region45: #{predict_sentiment.1} parent=11 // pred_check
          %p508 = pneg %p270
        $region46: #{predict_sentiment.1} parent=11 // pred_check_branch
          %510 = sbr.rel (%p508) target = $region48
        $region47: #{predict_sentiment.1} parent=11 // pred_region
          %s512 = ssub.s32 8192, 8192
          %513 = vsyncadd [#allocation8], %s512
          %s514 = sshll.u32 [#allocation7], 4
          %s515 = int_to_ptr.vmem [resolvable:$true] %s514
          %520 = dma.hbm_to_vmem [thread:$0]  %s10, 8192, %s515, [#allocation8], 256, 256, 16
        $region48: #{predict_sentiment.1} parent=11 // pred_fallthru
          _
        // Predicated region
        $region49: #{predict_sentiment.1} parent=11 // pred_check
          %p521 = pneg %p291
        $region50: #{predict_sentiment.1} parent=11 // pred_check_branch
          %523 = sbr.rel (%p521) target = $region52
        $region51: #{predict_sentiment.1} parent=11 // pred_region
          _
        $region52: #{predict_sentiment.1} parent=11 // pred_fallthru
          _
        // Predicated region
        $region53: #{predict_sentiment.1} parent=11 // pred_check
          %p524 = pneg %p312
        $region54: #{predict_sentiment.1} parent=11 // pred_check_branch
          %526 = sbr.rel (%p524) target = $region56
        $region55: #{predict_sentiment.1} parent=11 // pred_region
          %s528 = ssub.s32 8192, 8192
          %529 = vsyncadd [#allocation8], %s528
          %s530 = sshll.u32 [#allocation9], 4
          %s531 = int_to_ptr.vmem [resolvable:$true] %s530
          %536 = dma.hbm_to_vmem [thread:$0]  %s12, 8192, %s531, [#allocation8], 128, 128, 8
        $region56: #{predict_sentiment.1} parent=11 // pred_fallthru
          _
        // Predicated region
        $region57: #{predict_sentiment.1} parent=11 // pred_check
          %p537 = pneg %p333
        $region58: #{predict_sentiment.1} parent=11 // pred_check_branch
          %539 = sbr.rel (%p537) target = $region60
        $region59: #{predict_sentiment.1} parent=11 // pred_region
          _
        $region60: #{predict_sentiment.1} parent=11 // pred_fallthru
          _
        // Predicated region
        $region61: #{predict_sentiment.1} parent=11 // pred_check
          %p540 = pneg %p354
        $region62: #{predict_sentiment.1} parent=11 // pred_check_branch
          %542 = sbr.rel (%p540) target = $region64
        $region63: #{predict_sentiment.1} parent=11 // pred_region
          _
        $region64: #{predict_sentiment.1} parent=11 // pred_fallthru
          _
        // Predicated region
        $region65: #{predict_sentiment.1} parent=11 // pred_check
          %p543 = pneg %p375
        $region66: #{predict_sentiment.1} parent=11 // pred_check_branch
          %545 = sbr.rel (%p543) target = $region68
        $region67: #{predict_sentiment.1} parent=11 // pred_region
          %s547 = ssub.s32 32, 32
          %548 = vsyncadd [#allocation11], %s547
          %s549 = sshll.u32 [#allocation10], 4
          %s550 = int_to_ptr.vmem [resolvable:$true] %s549
          %555 = dma.hbm_to_vmem [thread:$0]  %s15, 32, %s550, [#allocation11], 16, 16, 1
        $region68: #{predict_sentiment.1} parent=11 // pred_fallthru
          _
        // Predicated region
        $region69: #{predict_sentiment.1} parent=11 // pred_check
          %p556 = pneg %p396
        $region70: #{predict_sentiment.1} parent=11 // pred_check_branch
          %558 = sbr.rel (%p556) target = $region72
        $region71: #{predict_sentiment.1} parent=11 // pred_region
          %s560 = ssub.s32 2048, 2048
          %561 = vsyncadd [#allocation11], %s560
          %s562 = sshll.u32 [#allocation12], 4
          %s563 = int_to_ptr.vmem [resolvable:$true] %s562
          %568 = dma.hbm_to_vmem [thread:$0]  %s16, 2048, %s563, [#allocation11], 128, 128, 8
        $region72: #{predict_sentiment.1} parent=11 // pred_fallthru
          _
        // Predicated region
        $region73: #{predict_sentiment.1} parent=11 // pred_check
          %p569 = pneg %p417
        $region74: #{predict_sentiment.1} parent=11 // pred_check_branch
          %571 = sbr.rel (%p569) target = $region76
        $region75: #{predict_sentiment.1} parent=11 // pred_region
          %s573 = ssub.s32 16, 16
          %574 = vsyncadd [#allocation14], %s573
          %s576 = sshll.u32 [#allocation13], 4
          %s577 = int_to_ptr.vmem [resolvable:$true] %s576
          %579 = dma.hbm_to_vmem [thread:$0]  %s17, 16, %s577, [#allocation14]
        $region76: #{predict_sentiment.1} parent=11 // pred_fallthru
          _
      $region12: #{predict_sentiment.1} parent=5 // pred_fallthru
        _
      %p580 = scmp.lt.s32.totalorder %s29, 2
      // Predicated region
      $region77: #{predict_sentiment.1} parent=5 // pred_check
        %p581 = pneg %p580
      $region78: #{predict_sentiment.1} parent=5 // pred_check_branch
        %583 = sbr.rel (%p581) target = $region80
      $region79: #{predict_sentiment.1} parent=5 // pred_region
        // Predicated region
        $region81: #{predict_sentiment.1} parent=79 // pred_check
          %p584 = pneg %p49
        $region82: #{predict_sentiment.1} parent=79 // pred_check_branch
          %586 = sbr.rel (%p584) target = $region84
        $region83: #{predict_sentiment.1} parent=79 // pred_region
          %p587 = scmp.lt.s32.totalorder %s29, 1
          %s588 = scalar_select %p587, %s29, 1
          %s589 = smul.addr %s588, 8
          %s590 = scalar_lea.vmem %s0, %s589
        $region84: #{predict_sentiment.1} parent=79 // pred_fallthru
          _
        // Predicated region
        $region85: #{predict_sentiment.1} parent=79 // pred_check
          %p591 = pneg %p75
        $region86: #{predict_sentiment.1} parent=79 // pred_check_branch
          %593 = sbr.rel (%p591) target = $region88
        $region87: #{predict_sentiment.1} parent=79 // pred_region
          %p594 = scmp.lt.s32.totalorder %s29, 1
          %s595 = scalar_select %p594, %s29, 1
          %s596 = scalar_lea.vmem %s1, %s595
        $region88: #{predict_sentiment.1} parent=79 // pred_fallthru
          _
      $region80: #{predict_sentiment.1} parent=5 // pred_fallthru
        _
      %p597 = scmp.le.s32.totalorder 1, %s29
      %p598 = scmp.lt.s32.totalorder %s29, 3
      %p599 = pnand %p597, %p598
      %p600 = pneg %p599
      // Predicated region
      $region89: #{predict_sentiment.1} parent=5 // pred_check
        _
      $region90: #{predict_sentiment.1} parent=5 // pred_check_branch
        %602 = sbr.rel (%p599) target = $region92
      $region91: #{predict_sentiment.1} parent=5 // pred_region
        %s603 = ssub.s32 %s29, 1
        // Predicated region
        $region93: #{predict_sentiment.1} parent=91 // pred_check
          %p604 = pneg %p102
        $region94: #{predict_sentiment.1} parent=91 // pred_check_branch
          %606 = sbr.rel (%p604) target = $region96
        $region95: #{predict_sentiment.1} parent=91 // pred_region
          %607 = dma.done [#allocation3], 16
        $region96: #{predict_sentiment.1} parent=91 // pred_fallthru
          _
        // Predicated region
        $region97: #{predict_sentiment.1} parent=91 // pred_check
          %p608 = pneg %p123
        $region98: #{predict_sentiment.1} parent=91 // pred_check_branch
          %610 = sbr.rel (%p608) target = $region100
        $region99: #{predict_sentiment.1} parent=91 // pred_region
          %611 = dma.done [#allocation5], 16
        $region100: #{predict_sentiment.1} parent=91 // pred_fallthru
          _
        // Predicated region
        $region101: #{predict_sentiment.1} parent=91 // pred_check
          %p612 = pneg %p144
        $region102: #{predict_sentiment.1} parent=91 // pred_check_branch
          %614 = sbr.rel (%p612) target = $region104
        $region103: #{predict_sentiment.1} parent=91 // pred_region
          %615 = dma.done [#allocation5], 12288
        $region104: #{predict_sentiment.1} parent=91 // pred_fallthru
          _
        // Predicated region
        $region105: #{predict_sentiment.1} parent=91 // pred_check
          %p616 = pneg %p270
        $region106: #{predict_sentiment.1} parent=91 // pred_check_branch
          %618 = sbr.rel (%p616) target = $region108
        $region107: #{predict_sentiment.1} parent=91 // pred_region
          %619 = dma.done [#allocation8], 8192
        $region108: #{predict_sentiment.1} parent=91 // pred_fallthru
          _
        // Predicated region
        $region109: #{predict_sentiment.1} parent=91 // pred_check
          %p620 = pneg %p312
        $region110: #{predict_sentiment.1} parent=91 // pred_check_branch
          %622 = sbr.rel (%p620) target = $region112
        $region111: #{predict_sentiment.1} parent=91 // pred_region
          %623 = dma.done [#allocation8], 8192
        $region112: #{predict_sentiment.1} parent=91 // pred_fallthru
          _
        // Predicated region
        $region113: #{predict_sentiment.1} parent=91 // pred_check
          %p624 = pneg %p375
        $region114: #{predict_sentiment.1} parent=91 // pred_check_branch
          %626 = sbr.rel (%p624) target = $region116
        $region115: #{predict_sentiment.1} parent=91 // pred_region
          %627 = dma.done [#allocation11], 32
        $region116: #{predict_sentiment.1} parent=91 // pred_fallthru
          _
        // Predicated region
        $region117: #{predict_sentiment.1} parent=91 // pred_check
          %p628 = pneg %p396
        $region118: #{predict_sentiment.1} parent=91 // pred_check_branch
          %630 = sbr.rel (%p628) target = $region120
        $region119: #{predict_sentiment.1} parent=91 // pred_region
          %631 = dma.done [#allocation11], 2048
        $region120: #{predict_sentiment.1} parent=91 // pred_fallthru
          _
        // Predicated region
        $region121: #{predict_sentiment.1} parent=91 // pred_check
          %p632 = pneg %p417
        $region122: #{predict_sentiment.1} parent=91 // pred_check_branch
          %634 = sbr.rel (%p632) target = $region124
        $region123: #{predict_sentiment.1} parent=91 // pred_region
          %635 = dma.done [#allocation14], 16
        $region124: #{predict_sentiment.1} parent=91 // pred_fallthru
          _
        %p636 = scmp.lt.s32.totalorder %s34, 1
        %s637 = scalar_select %p636, %s34, 1
        %s638 = smul.addr %s637, 8
        %s639 = scalar_lea.vmem %s0, %s638
        %p640 = pneg %p55
        %p641 = pneg %p52
        %p642 = scmp.lt.s32.totalorder %s34, 1
        %s643 = scalar_select %p642, %s34, 1
        %s644 = scalar_lea.vmem %s1, %s643
        %p645 = pneg %p81
        %p646 = pneg %p78
        %p647 = pneg %p102
        %p648 = pneg %p99
        %p649 = pneg %p123
        %p650 = pneg %p120
        %p651 = pneg %p144
        %p652 = pneg %p141
        %p653 = pneg %p165
        %p654 = pneg %p162
        %p655 = pneg %p186
        %p656 = pneg %p183
        %p657 = pneg %p207
        %p658 = pneg %p204
        %p659 = pneg %p228
        %p660 = pneg %p225
        %p661 = pneg %p249
        %p662 = pneg %p246
        %p663 = pneg %p270
        %p664 = pneg %p267
        %p665 = pneg %p291
        %p666 = pneg %p288
        %p667 = pneg %p312
        %p668 = pneg %p309
        %p669 = pneg %p333
        %p670 = pneg %p330
        %p671 = pneg %p354
        %p672 = pneg %p351
        %p673 = pneg %p375
        %p674 = pneg %p372
        %p675 = pneg %p396
        %p676 = pneg %p393
        %p677 = pneg %p417
        %p678 = pneg %p414
        %p679 = pneg %p443
        %p680 = pneg %p440
        %p681 = scmp.lt.s32.totalorder %s34, 1
        %s682 = scalar_select %p681, %s34, 1
        %s683 = scalar_lea.vmem %s18, %s682
        %p684 = scmp.lt.s32.totalorder %s34, 1
        %s685 = scalar_select %p684, %s34, 1
        %s686 = smul.addr %s685, 8
        %s687 = scalar_lea.vmem %s0, %s686
        %p688 = scmp.lt.s32.totalorder %s34, 1
        %s689 = scalar_select %p688, %s34, 1
        %s690 = scalar_lea.vmem %s1, %s689
        %p691 = scmp.lt.s32.totalorder %s34, 1
        %s692 = scalar_select %p691, %s34, 1
        %s693 = scalar_lea.vmem %s18, %s692
        %v694 = vld [vmem:[%s687] sm:$0xff]
        %v695 = vld [vmem:[#allocation2] sm:$0x1]
        %v696 = vld [vmem:[#allocation4] sm:$0x1]
        %697 = vadd.xlane.f32.xlu0 %v694
        %v698 = vpop.xlane.xlu0 %697
        %v699 = vrcp.pop 128.0
        %v700 = vmul.f32 %v698, %v699
        %v701 = vsub.f32 %v694, %v700
        %v702 = vmul.f32 %v701, %v701
        %703 = vadd.xlane.f32.xlu0 %v702
        %v704 = vpop.xlane.xlu0 %703
        %v705 = vmul.f32 %v704, %v699
        %v706 = vadd.f32 %v705, 1e-12
        %v707 = vrsqrt.pop %v706
        %v708 = vmul.f32 %v701, %v707
        %v710 = vlaneseq
        %v711 = vshrl.u32 %v710, 7
        %v712 = vsub.s32 0, %v711
        %v713 = vrot.slane %v695, %v712
        %v715 = vmul.f32 %v708, %v713
        %v717 = vlaneseq
        %v718 = vshrl.u32 %v717, 7
        %v719 = vsub.s32 0, %v718
        %v720 = vrot.slane %v696, %v719
        %v722 = vadd.f32 %v715, %v720
        %v723 = vld [vmem:[%s690] sm:$0x1]
        %v724 = vld [vmem:[#allocation6] sm:$0xff]
        %v725 = vld [vmem:[#allocation6 + $0x8] sm:$0xff]
        %v726 = vld [vmem:[#allocation6 + $0x10] sm:$0xff]
        %v727 = vld [vmem:[#allocation6 + $0x18] sm:$0xff]
        %v728 = vld [vmem:[#allocation6 + $0x20] sm:$0xff]
        %v729 = vld [vmem:[#allocation6 + $0x28] sm:$0xff]
        %v730 = vld [vmem:[#allocation6 + $0x30] sm:$0xff]
        %v731 = vld [vmem:[#allocation6 + $0x38] sm:$0xff]
        %v732 = vld [vmem:[#allocation6 + $0x40] sm:$0xff]
        %v733 = vld [vmem:[#allocation6 + $0x48] sm:$0xff]
        %v734 = vld [vmem:[#allocation6 + $0x50] sm:$0xff]
        %v735 = vld [vmem:[#allocation6 + $0x58] sm:$0xff]
        %v736 = vld [vmem:[#allocation6 + $0x60] sm:$0xff]
        %v737 = vld [vmem:[#allocation6 + $0x68] sm:$0xff]
        %v738 = vld [vmem:[#allocation6 + $0x70] sm:$0xff]
        %v739 = vld [vmem:[#allocation6 + $0x78] sm:$0xff]
        %v740 = vld [vmem:[#allocation6 + $0x80] sm:$0xff]
        %v741 = vld [vmem:[#allocation6 + $0x88] sm:$0xff]
        %v742 = vld [vmem:[#allocation6 + $0x90] sm:$0xff]
        %v743 = vld [vmem:[#allocation6 + $0x98] sm:$0xff]
        %v744 = vld [vmem:[#allocation6 + $0xa0] sm:$0xff]
        %v745 = vld [vmem:[#allocation6 + $0xa8] sm:$0xff]
        %v746 = vld [vmem:[#allocation6 + $0xb0] sm:$0xff]
        %v747 = vld [vmem:[#allocation6 + $0xb8] sm:$0xff]
        %v748 = vld [vmem:[#allocation6 + $0xc0] sm:$0xff]
        %v749 = vld [vmem:[#allocation6 + $0xc8] sm:$0xff]
        %v750 = vld [vmem:[#allocation6 + $0xd0] sm:$0xff]
        %v751 = vld [vmem:[#allocation6 + $0xd8] sm:$0xff]
        %v752 = vld [vmem:[#allocation6 + $0xe0] sm:$0xff]
        %v753 = vld [vmem:[#allocation6 + $0xe8] sm:$0xff]
        %v754 = vld [vmem:[#allocation6 + $0xf0] sm:$0xff]
        %v755 = vld [vmem:[#allocation6 + $0xf8] sm:$0xff]
        %v756 = vld [vmem:[#allocation6 + $0x100] sm:$0xff]
        %v757 = vld [vmem:[#allocation6 + $0x108] sm:$0xff]
        %v758 = vld [vmem:[#allocation6 + $0x110] sm:$0xff]
        %v759 = vld [vmem:[#allocation6 + $0x118] sm:$0xff]
        %v760 = vld [vmem:[#allocation6 + $0x120] sm:$0xff]
        %v761 = vld [vmem:[#allocation6 + $0x128] sm:$0xff]
        %v762 = vld [vmem:[#allocation6 + $0x130] sm:$0xff]
        %v763 = vld [vmem:[#allocation6 + $0x138] sm:$0xff]
        %v764 = vld [vmem:[#allocation6 + $0x140] sm:$0xff]
        %v765 = vld [vmem:[#allocation6 + $0x148] sm:$0xff]
        %v766 = vld [vmem:[#allocation6 + $0x150] sm:$0xff]
        %v767 = vld [vmem:[#allocation6 + $0x158] sm:$0xff]
        %v768 = vld [vmem:[#allocation6 + $0x160] sm:$0xff]
        %v769 = vld [vmem:[#allocation6 + $0x168] sm:$0xff]
        %v770 = vld [vmem:[#allocation6 + $0x170] sm:$0xff]
        %v771 = vld [vmem:[#allocation6 + $0x178] sm:$0xff]
        %v772 = vld [vmem:[%s5] sm:$0x7]
        %v774 = vlaneseq
        %v775 = vshrl.u32 %v774, 7
        %v776 = vsub.s32 0, %v775
        %v777 = vrot.slane %v772, %v776
        %v778 = vlaneseq
        %v779 = vshrl.u32 %v778, 7
        %v780 = vsub.s32 1, %v779
        %v781 = vrot.slane %v772, %v780
        %v782 = vlaneseq
        %v783 = vshrl.u32 %v782, 7
        %v784 = vsub.s32 2, %v783
        %v785 = vrot.slane %v772, %v784
        %789 = vmatprep.subr.mxu0 %v725
        %790 = vmatpush1.msra.mxu0 %v724
        %791 = vmatprep.subr.mxu0 %v728
        %792 = vmatpush1.msra.mxu0 %v727
        %793 = vmatprep.subr.mxu0 %v731
        %794 = vmatpush1.msra.mxu0 %v730
        %795 = vmatprep.subr.mxu0 %v734
        %796 = vmatpush1.msra.mxu0 %v733
        %797 = vmatprep.subr.mxu0 %v737
        %798 = vmatpush1.msra.mxu0 %v736
        %799 = vmatprep.subr.mxu0 %v740
        %800 = vmatpush1.msra.mxu0 %v739
        %801 = vmatprep.subr.mxu0 %v743
        %802 = vmatpush1.msra.mxu0 %v742
        %803 = vmatprep.subr.mxu0 %v746
        %804 = vmatpush1.msra.mxu0 %v745
        %805 = vmatprep.subr.mxu0 %v749
        %806 = vmatpush1.msra.mxu0 %v748
        %807 = vmatprep.subr.mxu0 %v752
        %808 = vmatpush1.msra.mxu0 %v751
        %809 = vmatprep.subr.mxu0 %v755
        %810 = vmatpush1.msra.mxu0 %v754
        %811 = vmatprep.subr.mxu0 %v758
        %812 = vmatpush1.msra.mxu0 %v757
        %813 = vmatprep.subr.mxu0 %v761
        %814 = vmatpush1.msra.mxu0 %v760
        %815 = vmatprep.subr.mxu0 %v764
        %816 = vmatpush1.msra.mxu0 %v763
        %817 = vmatprep.subr.mxu0 %v767
        %818 = vmatpush1.msra.mxu0 %v766
        %819 = vmatprep.subr.mxu0 %v770
        %820 = vmatpush1.msra.mxu0 %v769
        %821 = vmatprep.subr.mxu0 0.0
        %822 = vmatpush1.msra.mxu0 0.0
        %823 = vmatprep.subr.mxu0 0.0
        %824 = vmatpush1.msra.mxu0 0.0
        %825 = vmatprep.subr.mxu0 0.0
        %826 = vmatpush1.msra.mxu0 0.0
        %827 = vmatprep.subr.mxu0 0.0
        %828 = vmatpush1.msra.mxu0 0.0
        %829 = vmatprep.subr.mxu0 0.0
        %830 = vmatpush1.msra.mxu0 0.0
        %831 = vmatprep.subr.mxu0 0.0
        %832 = vmatpush1.msra.mxu0 0.0
        %833 = vmatprep.subr.mxu0 0.0
        %834 = vmatpush1.msra.mxu0 0.0
        %835 = vmatprep.subr.mxu0 0.0
        %836 = vmatpush1.msra.mxu0 0.0
        %837 = vmatprep.subr.mxu0 0.0
        %838 = vmatpush1.msra.mxu0 0.0
        %839 = vmatprep.subr.mxu0 0.0
        %840 = vmatpush1.msra.mxu0 0.0
        %841 = vmatprep.subr.mxu0 0.0
        %842 = vmatpush1.msra.mxu0 0.0
        %843 = vmatprep.subr.mxu0 0.0
        %844 = vmatpush1.msra.mxu0 0.0
        %845 = vmatprep.subr.mxu0 0.0
        %846 = vmatpush1.msra.mxu0 0.0
        %847 = vmatprep.subr.mxu0 0.0
        %848 = vmatpush1.msra.mxu0 0.0
        %849 = vmatprep.subr.mxu0 0.0
        %850 = vmatpush1.msra.mxu0 0.0
        %851 = vmatprep.subr.mxu0 0.0
        %852 = vmatpush1.msra.mxu0 0.0
        %853 = vmatprep.mubr.f32.mxu0 0.0
        %854 = vmatmul.mubr.f32.gmra.mrb[0].mxu0 %v722
        %v855 = vpop.f32.mrb[0].mxu0
        %v856 = vadd.f32 %v777, %v855
        %v857 = vpop.f32.mrb[0].mxu0
        %v858 = vadd.f32 %v781, %v857
        %859 = vdwg.mxu0
        %860 = vmatprep.subr.mxu0 0.0
        %861 = vmatpush1.msra.mxu0 %v726
        %862 = vmatprep.subr.mxu0 0.0
        %863 = vmatpush1.msra.mxu0 %v729
        %864 = vmatprep.subr.mxu0 0.0
        %865 = vmatpush1.msra.mxu0 %v732
        %866 = vmatprep.subr.mxu0 0.0
        %867 = vmatpush1.msra.mxu0 %v735
        %868 = vmatprep.subr.mxu0 0.0
        %869 = vmatpush1.msra.mxu0 %v738
        %870 = vmatprep.subr.mxu0 0.0
        %871 = vmatpush1.msra.mxu0 %v741
        %872 = vmatprep.subr.mxu0 0.0
        %873 = vmatpush1.msra.mxu0 %v744
        %874 = vmatprep.subr.mxu0 0.0
        %875 = vmatpush1.msra.mxu0 %v747
        %876 = vmatprep.subr.mxu0 0.0
        %877 = vmatpush1.msra.mxu0 %v750
        %878 = vmatprep.subr.mxu0 0.0
        %879 = vmatpush1.msra.mxu0 %v753
        %880 = vmatprep.subr.mxu0 0.0
        %881 = vmatpush1.msra.mxu0 %v756
        %882 = vmatprep.subr.mxu0 0.0
        %883 = vmatpush1.msra.mxu0 %v759
        %884 = vmatprep.subr.mxu0 0.0
        %885 = vmatpush1.msra.mxu0 %v762
        %886 = vmatprep.subr.mxu0 0.0
        %887 = vmatpush1.msra.mxu0 %v765
        %888 = vmatprep.subr.mxu0 0.0
        %889 = vmatpush1.msra.mxu0 %v768
        %890 = vmatprep.subr.mxu0 0.0
        %891 = vmatpush1.msra.mxu0 %v771
        %892 = vmatprep.subr.mxu0 0.0
        %893 = vmatpush1.msra.mxu0 0.0
        %894 = vmatprep.subr.mxu0 0.0
        %895 = vmatpush1.msra.mxu0 0.0
        %896 = vmatprep.subr.mxu0 0.0
        %897 = vmatpush1.msra.mxu0 0.0
        %898 = vmatprep.subr.mxu0 0.0
        %899 = vmatpush1.msra.mxu0 0.0
        %900 = vmatprep.subr.mxu0 0.0
        %901 = vmatpush1.msra.mxu0 0.0
        %902 = vmatprep.subr.mxu0 0.0
        %903 = vmatpush1.msra.mxu0 0.0
        %904 = vmatprep.subr.mxu0 0.0
        %905 = vmatpush1.msra.mxu0 0.0
        %906 = vmatprep.subr.mxu0 0.0
        %907 = vmatpush1.msra.mxu0 0.0
        %908 = vmatprep.subr.mxu0 0.0
        %909 = vmatpush1.msra.mxu0 0.0
        %910 = vmatprep.subr.mxu0 0.0
        %911 = vmatpush1.msra.mxu0 0.0
        %912 = vmatprep.subr.mxu0 0.0
        %913 = vmatpush1.msra.mxu0 0.0
        %914 = vmatprep.subr.mxu0 0.0
        %915 = vmatpush1.msra.mxu0 0.0
        %916 = vmatprep.subr.mxu0 0.0
        %917 = vmatpush1.msra.mxu0 0.0
        %918 = vmatprep.subr.mxu0 0.0
        %919 = vmatpush1.msra.mxu0 0.0
        %920 = vmatprep.subr.mxu0 0.0
        %921 = vmatpush1.msra.mxu0 0.0
        %922 = vmatprep.subr.mxu0 0.0
        %923 = vmatpush1.msra.mxu0 0.0
        %924 = vmatprep.mubr.f32.mxu0 0.0
        %925 = vmatmul.mubr.f32.gmra.mrb[0].mxu0 %v722
        %v926 = vpop.f32.mrb[0].mxu0
        %v927 = vadd.f32 %v785, %v926
        %v928 = vpop.f32.mrb[0].mxu0
        %929 = vdwg.mxu0
        %vm930 = vcmask 261120
        %v932 = vsel %vm930, %v856, 0
        %v935 = vsel %vm930, %v858, 0
        %937 = vmatprep.subr.mxu0 0.0
        %938 = vmatpush1.xpose.msra.mxu0 %v935
        %939 = vmatprep.subr.mxu0 0.0
        %940 = vmatpush1.xpose.msra.mxu0 0.0
        %941 = vmatprep.subr.mxu0 0.0
        %942 = vmatpush1.xpose.msra.mxu0 0.0
        %943 = vmatprep.subr.mxu0 0.0
        %944 = vmatpush1.xpose.msra.mxu0 0.0
        %945 = vmatprep.subr.mxu0 0.0
        %946 = vmatpush1.xpose.msra.mxu0 0.0
        %947 = vmatprep.subr.mxu0 0.0
        %948 = vmatpush1.xpose.msra.mxu0 0.0
        %949 = vmatprep.subr.mxu0 0.0
        %950 = vmatpush1.xpose.msra.mxu0 0.0
        %951 = vmatprep.subr.mxu0 0.0
        %952 = vmatpush1.xpose.msra.mxu0 0.0
        %953 = vmatprep.subr.mxu0 0.0
        %954 = vmatpush1.xpose.msra.mxu0 0.0
        %955 = vmatprep.subr.mxu0 0.0
        %956 = vmatpush1.xpose.msra.mxu0 0.0
        %957 = vmatprep.subr.mxu0 0.0
        %958 = vmatpush1.xpose.msra.mxu0 0.0
        %959 = vmatprep.subr.mxu0 0.0
        %960 = vmatpush1.xpose.msra.mxu0 0.0
        %961 = vmatprep.subr.mxu0 0.0
        %962 = vmatpush1.xpose.msra.mxu0 0.0
        %963 = vmatprep.subr.mxu0 0.0
        %964 = vmatpush1.xpose.msra.mxu0 0.0
        %965 = vmatprep.subr.mxu0 0.0
        %966 = vmatpush1.xpose.msra.mxu0 0.0
        %967 = vmatprep.subr.mxu0 0.0
        %968 = vmatpush1.xpose.msra.mxu0 0.0
        %969 = vmatprep.subr.mxu0 0.0
        %970 = vmatpush1.xpose.msra.mxu0 0.0
        %971 = vmatprep.subr.mxu0 0.0
        %972 = vmatpush1.xpose.msra.mxu0 0.0
        %973 = vmatprep.subr.mxu0 0.0
        %974 = vmatpush1.xpose.msra.mxu0 0.0
        %975 = vmatprep.subr.mxu0 0.0
        %976 = vmatpush1.xpose.msra.mxu0 0.0
        %977 = vmatprep.subr.mxu0 0.0
        %978 = vmatpush1.xpose.msra.mxu0 0.0
        %979 = vmatprep.subr.mxu0 0.0
        %980 = vmatpush1.xpose.msra.mxu0 0.0
        %981 = vmatprep.subr.mxu0 0.0
        %982 = vmatpush1.xpose.msra.mxu0 0.0
        %983 = vmatprep.subr.mxu0 0.0
        %984 = vmatpush1.xpose.msra.mxu0 0.0
        %985 = vmatprep.subr.mxu0 0.0
        %986 = vmatpush1.xpose.msra.mxu0 0.0
        %987 = vmatprep.subr.mxu0 0.0
        %988 = vmatpush1.xpose.msra.mxu0 0.0
        %989 = vmatprep.subr.mxu0 0.0
        %990 = vmatpush1.xpose.msra.mxu0 0.0
        %991 = vmatprep.subr.mxu0 0.0
        %992 = vmatpush1.xpose.msra.mxu0 0.0
        %993 = vmatprep.subr.mxu0 0.0
        %994 = vmatpush1.xpose.msra.mxu0 0.0
        %995 = vmatprep.subr.mxu0 0.0
        %996 = vmatpush1.xpose.msra.mxu0 0.0
        %997 = vmatprep.subr.mxu0 0.0
        %998 = vmatpush1.xpose.msra.mxu0 0.0
        %999 = vmatprep.subr.mxu0 0.0
        %1000 = vmatpush1.xpose.msra.mxu0 0.0
        %1001 = vmatprep.mubr.f32.mxu0 0.0
        %1002 = vmatmul.mubr.f32.gmra.mrb[0].mxu0 %v932
        %v1003 = vpop.f32.mrb[0].mxu0
        %v1004 = vadd.f32 0.0, %v1003
        %v1005 = vpop.f32.mrb[0].mxu0
        %1006 = vdwg.mxu0
        %v1007 = vmul.f32 %v1004, 0.17677669
        %v1009 = vlaneseq
        %v1010 = vshrl.u32 %v1009, 7
        %v1011 = vsub.s32 0, %v1010
        %v1012 = vrot.slane %v723, %v1011
        %v1014 = vadd.f32 %v1007, %v1012
        %vm1015 = vcmask 64512
        %v1016 = vsel %vm1015, %v1014, -inf
        %1017 = vmax.xlane.f32.xlu0 %v1016
        %v1018 = vpop.xlane.xlu0 %1017
        %v1019 = vsub.f32 %v1014, %v1018
        %v1020 = vmul.f32 %v1019, 1.442695
        %v1021 = vpow.pop %v1020
        %v1022 = vsel %vm1015, %v1021, 0.0
        %1023 = vadd.xlane.f32.xlu0 %v1022
        %v1024 = vpop.xlane.xlu0 %1023
        %v1025 = vrcp.pop %v1024
        %v1026 = vmul.f32 %v1021, %v1025
        %v1028 = vsel %vm1015, %v1026, 0
        %1030 = vmatprep.subr.mxu0 0.0
        %1031 = vmatpush1.msra.mxu0 %v927
        %1032 = vmatprep.subr.mxu0 0.0
        %1033 = vmatpush1.msra.mxu0 0.0
        %1034 = vmatprep.subr.mxu0 0.0
        %1035 = vmatpush1.msra.mxu0 0.0
        %1036 = vmatprep.subr.mxu0 0.0
        %1037 = vmatpush1.msra.mxu0 0.0
        %1038 = vmatprep.subr.mxu0 0.0
        %1039 = vmatpush1.msra.mxu0 0.0
        %1040 = vmatprep.subr.mxu0 0.0
        %1041 = vmatpush1.msra.mxu0 0.0
        %1042 = vmatprep.subr.mxu0 0.0
        %1043 = vmatpush1.msra.mxu0 0.0
        %1044 = vmatprep.subr.mxu0 0.0
        %1045 = vmatpush1.msra.mxu0 0.0
        %1046 = vmatprep.subr.mxu0 0.0
        %1047 = vmatpush1.msra.mxu0 0.0
        %1048 = vmatprep.subr.mxu0 0.0
        %1049 = vmatpush1.msra.mxu0 0.0
        %1050 = vmatprep.subr.mxu0 0.0
        %1051 = vmatpush1.msra.mxu0 0.0
        %1052 = vmatprep.subr.mxu0 0.0
        %1053 = vmatpush1.msra.mxu0 0.0
        %1054 = vmatprep.subr.mxu0 0.0
        %1055 = vmatpush1.msra.mxu0 0.0
        %1056 = vmatprep.subr.mxu0 0.0
        %1057 = vmatpush1.msra.mxu0 0.0
        %1058 = vmatprep.subr.mxu0 0.0
        %1059 = vmatpush1.msra.mxu0 0.0
        %1060 = vmatprep.subr.mxu0 0.0
        %1061 = vmatpush1.msra.mxu0 0.0
        %1062 = vmatprep.subr.mxu0 0.0
        %1063 = vmatpush1.msra.mxu0 0.0
        %1064 = vmatprep.subr.mxu0 0.0
        %1065 = vmatpush1.msra.mxu0 0.0
        %1066 = vmatprep.subr.mxu0 0.0
        %1067 = vmatpush1.msra.mxu0 0.0
        %1068 = vmatprep.subr.mxu0 0.0
        %1069 = vmatpush1.msra.mxu0 0.0
        %1070 = vmatprep.subr.mxu0 0.0
        %1071 = vmatpush1.msra.mxu0 0.0
        %1072 = vmatprep.subr.mxu0 0.0
        %1073 = vmatpush1.msra.mxu0 0.0
        %1074 = vmatprep.subr.mxu0 0.0
        %1075 = vmatpush1.msra.mxu0 0.0
        %1076 = vmatprep.subr.mxu0 0.0
        %1077 = vmatpush1.msra.mxu0 0.0
        %1078 = vmatprep.subr.mxu0 0.0
        %1079 = vmatpush1.msra.mxu0 0.0
        %1080 = vmatprep.subr.mxu0 0.0
        %1081 = vmatpush1.msra.mxu0 0.0
        %1082 = vmatprep.subr.mxu0 0.0
        %1083 = vmatpush1.msra.mxu0 0.0
        %1084 = vmatprep.subr.mxu0 0.0
        %1085 = vmatpush1.msra.mxu0 0.0
        %1086 = vmatprep.subr.mxu0 0.0
        %1087 = vmatpush1.msra.mxu0 0.0
        %1088 = vmatprep.subr.mxu0 0.0
        %1089 = vmatpush1.msra.mxu0 0.0
        %1090 = vmatprep.subr.mxu0 0.0
        %1091 = vmatpush1.msra.mxu0 0.0
        %1092 = vmatprep.subr.mxu0 0.0
        %1093 = vmatpush1.msra.mxu0 0.0
        %1094 = vmatprep.mubr.f32.mxu0 0.0
        %1095 = vmatmul.mubr.f32.gmra.mrb[0].mxu0 %v1028
        %v1096 = vpop.f32.mrb[0].mxu0
        %v1097 = vadd.f32 0.0, %v1096
        %v1098 = vpop.f32.mrb[0].mxu0
        %1099 = vdwg.mxu0
        %1100 = vrot.lane.b32.xlu0 %v856, 96
        %v1101 = vpop.permute.xlu0 %1100
        %1102 = vrot.lane.b32.xlu0 %v858, 96
        %v1103 = vpop.permute.xlu0 %1102
        %v1104 = vsel %vm930, %v1101, 0
        %v1106 = vsel %vm930, %v1103, 0
        %1108 = vmatprep.subr.mxu0 0.0
        %1109 = vmatpush1.xpose.msra.mxu0 %v1106
        %1110 = vmatprep.subr.mxu0 0.0
        %1111 = vmatpush1.xpose.msra.mxu0 0.0
        %1112 = vmatprep.subr.mxu0 0.0
        %1113 = vmatpush1.xpose.msra.mxu0 0.0
        %1114 = vmatprep.subr.mxu0 0.0
        %1115 = vmatpush1.xpose.msra.mxu0 0.0
        %1116 = vmatprep.subr.mxu0 0.0
        %1117 = vmatpush1.xpose.msra.mxu0 0.0
        %1118 = vmatprep.subr.mxu0 0.0
        %1119 = vmatpush1.xpose.msra.mxu0 0.0
        %1120 = vmatprep.subr.mxu0 0.0
        %1121 = vmatpush1.xpose.msra.mxu0 0.0
        %1122 = vmatprep.subr.mxu0 0.0
        %1123 = vmatpush1.xpose.msra.mxu0 0.0
        %1124 = vmatprep.subr.mxu0 0.0
        %1125 = vmatpush1.xpose.msra.mxu0 0.0
        %1126 = vmatprep.subr.mxu0 0.0
        %1127 = vmatpush1.xpose.msra.mxu0 0.0
        %1128 = vmatprep.subr.mxu0 0.0
        %1129 = vmatpush1.xpose.msra.mxu0 0.0
        %1130 = vmatprep.subr.mxu0 0.0
        %1131 = vmatpush1.xpose.msra.mxu0 0.0
        %1132 = vmatprep.subr.mxu0 0.0
        %1133 = vmatpush1.xpose.msra.mxu0 0.0
        %1134 = vmatprep.subr.mxu0 0.0
        %1135 = vmatpush1.xpose.msra.mxu0 0.0
        %1136 = vmatprep.subr.mxu0 0.0
        %1137 = vmatpush1.xpose.msra.mxu0 0.0
        %1138 = vmatprep.subr.mxu0 0.0
        %1139 = vmatpush1.xpose.msra.mxu0 0.0
        %1140 = vmatprep.subr.mxu0 0.0
        %1141 = vmatpush1.xpose.msra.mxu0 0.0
        %1142 = vmatprep.subr.mxu0 0.0
        %1143 = vmatpush1.xpose.msra.mxu0 0.0
        %1144 = vmatprep.subr.mxu0 0.0
        %1145 = vmatpush1.xpose.msra.mxu0 0.0
        %1146 = vmatprep.subr.mxu0 0.0
        %1147 = vmatpush1.xpose.msra.mxu0 0.0
        %1148 = vmatprep.subr.mxu0 0.0
        %1149 = vmatpush1.xpose.msra.mxu0 0.0
        %1150 = vmatprep.subr.mxu0 0.0
        %1151 = vmatpush1.xpose.msra.mxu0 0.0
        %1152 = vmatprep.subr.mxu0 0.0
        %1153 = vmatpush1.xpose.msra.mxu0 0.0
        %1154 = vmatprep.subr.mxu0 0.0
        %1155 = vmatpush1.xpose.msra.mxu0 0.0
        %1156 = vmatprep.subr.mxu0 0.0
        %1157 = vmatpush1.xpose.msra.mxu0 0.0
        %1158 = vmatprep.subr.mxu0 0.0
        %1159 = vmatpush1.xpose.msra.mxu0 0.0
        %1160 = vmatprep.subr.mxu0 0.0
        %1161 = vmatpush1.xpose.msra.mxu0 0.0
        %1162 = vmatprep.subr.mxu0 0.0
        %1163 = vmatpush1.xpose.msra.mxu0 0.0
        %1164 = vmatprep.subr.mxu0 0.0
        %1165 = vmatpush1.xpose.msra.mxu0 0.0
        %1166 = vmatprep.subr.mxu0 0.0
        %1167 = vmatpush1.xpose.msra.mxu0 0.0
        %1168 = vmatprep.subr.mxu0 0.0
        %1169 = vmatpush1.xpose.msra.mxu0 0.0
        %1170 = vmatprep.subr.mxu0 0.0
        %1171 = vmatpush1.xpose.msra.mxu0 0.0
        %1172 = vmatprep.mubr.f32.mxu0 0.0
        %1173 = vmatmul.mubr.f32.gmra.mrb[0].mxu0 %v1104
        %v1174 = vpop.f32.mrb[0].mxu0
        %v1175 = vadd.f32 0.0, %v1174
        %v1176 = vpop.f32.mrb[0].mxu0
        %1177 = vdwg.mxu0
        %v1178 = vmul.f32 %v1175, 0.17677669
        %v1179 = vadd.f32 %v1178, %v1012
        %v1180 = vsel %vm1015, %v1179, -inf
        %1181 = vmax.xlane.f32.xlu0 %v1180
        %v1182 = vpop.xlane.xlu0 %1181
        %v1183 = vsub.f32 %v1179, %v1182
        %v1184 = vmul.f32 %v1183, 1.442695
        %v1185 = vpow.pop %v1184
        %v1186 = vsel %vm1015, %v1185, 0.0
        %1187 = vadd.xlane.f32.xlu0 %v1186
        %v1188 = vpop.xlane.xlu0 %1187
        %v1189 = vrcp.pop %v1188
        %v1190 = vmul.f32 %v1185, %v1189
        %1192 = vrot.lane.b32.xlu0 %v927, 96
        %v1193 = vpop.permute.xlu0 %1192
        %v1196 = vsel %vm1015, %v1190, 0
        %1198 = vmatprep.subr.mxu0 0.0
        %1199 = vmatpush1.msra.mxu0 %v1193
        %1200 = vmatprep.subr.mxu0 0.0
        %1201 = vmatpush1.msra.mxu0 0.0
        %1202 = vmatprep.subr.mxu0 0.0
        %1203 = vmatpush1.msra.mxu0 0.0
        %1204 = vmatprep.subr.mxu0 0.0
        %1205 = vmatpush1.msra.mxu0 0.0
        %1206 = vmatprep.subr.mxu0 0.0
        %1207 = vmatpush1.msra.mxu0 0.0
        %1208 = vmatprep.subr.mxu0 0.0
        %1209 = vmatpush1.msra.mxu0 0.0
        %1210 = vmatprep.subr.mxu0 0.0
        %1211 = vmatpush1.msra.mxu0 0.0
        %1212 = vmatprep.subr.mxu0 0.0
        %1213 = vmatpush1.msra.mxu0 0.0
        %1214 = vmatprep.subr.mxu0 0.0
        %1215 = vmatpush1.msra.mxu0 0.0
        %1216 = vmatprep.subr.mxu0 0.0
        %1217 = vmatpush1.msra.mxu0 0.0
        %1218 = vmatprep.subr.mxu0 0.0
        %1219 = vmatpush1.msra.mxu0 0.0
        %1220 = vmatprep.subr.mxu0 0.0
        %1221 = vmatpush1.msra.mxu0 0.0
        %1222 = vmatprep.subr.mxu0 0.0
        %1223 = vmatpush1.msra.mxu0 0.0
        %1224 = vmatprep.subr.mxu0 0.0
        %1225 = vmatpush1.msra.mxu0 0.0
        %1226 = vmatprep.subr.mxu0 0.0
        %1227 = vmatpush1.msra.mxu0 0.0
        %1228 = vmatprep.subr.mxu0 0.0
        %1229 = vmatpush1.msra.mxu0 0.0
        %1230 = vmatprep.subr.mxu0 0.0
        %1231 = vmatpush1.msra.mxu0 0.0
        %1232 = vmatprep.subr.mxu0 0.0
        %1233 = vmatpush1.msra.mxu0 0.0
        %1234 = vmatprep.subr.mxu0 0.0
        %1235 = vmatpush1.msra.mxu0 0.0
        %1236 = vmatprep.subr.mxu0 0.0
        %1237 = vmatpush1.msra.mxu0 0.0
        %1238 = vmatprep.subr.mxu0 0.0
        %1239 = vmatpush1.msra.mxu0 0.0
        %1240 = vmatprep.subr.mxu0 0.0
        %1241 = vmatpush1.msra.mxu0 0.0
        %1242 = vmatprep.subr.mxu0 0.0
        %1243 = vmatpush1.msra.mxu0 0.0
        %1244 = vmatprep.subr.mxu0 0.0
        %1245 = vmatpush1.msra.mxu0 0.0
        %1246 = vmatprep.subr.mxu0 0.0
        %1247 = vmatpush1.msra.mxu0 0.0
        %1248 = vmatprep.subr.mxu0 0.0
        %1249 = vmatpush1.msra.mxu0 0.0
        %1250 = vmatprep.subr.mxu0 0.0
        %1251 = vmatpush1.msra.mxu0 0.0
        %1252 = vmatprep.subr.mxu0 0.0
        %1253 = vmatpush1.msra.mxu0 0.0
        %1254 = vmatprep.subr.mxu0 0.0
        %1255 = vmatpush1.msra.mxu0 0.0
        %1256 = vmatprep.subr.mxu0 0.0
        %1257 = vmatpush1.msra.mxu0 0.0
        %1258 = vmatprep.subr.mxu0 0.0
        %1259 = vmatpush1.msra.mxu0 0.0
        %1260 = vmatprep.subr.mxu0 0.0
        %1261 = vmatpush1.msra.mxu0 0.0
        %1262 = vmatprep.mubr.f32.mxu0 0.0
        %1263 = vmatmul.mubr.f32.gmra.mrb[0].mxu0 %v1196
        %v1264 = vpop.f32.mrb[0].mxu0
        %v1265 = vadd.f32 0.0, %v1264
        %v1266 = vpop.f32.mrb[0].mxu0
        %1267 = vdwg.mxu0
        %1268 = vrot.lane.b32.xlu0 %v856, 64
        %v1269 = vpop.permute.xlu0 %1268
        %1270 = vrot.lane.b32.xlu0 %v858, 64
        %v1271 = vpop.permute.xlu0 %1270
        %v1272 = vsel %vm930, %v1269, 0
        %v1274 = vsel %vm930, %v1271, 0
        %1276 = vmatprep.subr.mxu0 0.0
        %1277 = vmatpush1.xpose.msra.mxu0 %v1274
        %1278 = vmatprep.subr.mxu0 0.0
        %1279 = vmatpush1.xpose.msra.mxu0 0.0
        %1280 = vmatprep.subr.mxu0 0.0
        %1281 = vmatpush1.xpose.msra.mxu0 0.0
        %1282 = vmatprep.subr.mxu0 0.0
        %1283 = vmatpush1.xpose.msra.mxu0 0.0
        %1284 = vmatprep.subr.mxu0 0.0
        %1285 = vmatpush1.xpose.msra.mxu0 0.0
        %1286 = vmatprep.subr.mxu0 0.0
        %1287 = vmatpush1.xpose.msra.mxu0 0.0
        %1288 = vmatprep.subr.mxu0 0.0
        %1289 = vmatpush1.xpose.msra.mxu0 0.0
        %1290 = vmatprep.subr.mxu0 0.0
        %1291 = vmatpush1.xpose.msra.mxu0 0.0
        %1292 = vmatprep.subr.mxu0 0.0
        %1293 = vmatpush1.xpose.msra.mxu0 0.0
        %1294 = vmatprep.subr.mxu0 0.0
        %1295 = vmatpush1.xpose.msra.mxu0 0.0
        %1296 = vmatprep.subr.mxu0 0.0
        %1297 = vmatpush1.xpose.msra.mxu0 0.0
        %1298 = vmatprep.subr.mxu0 0.0
        %1299 = vmatpush1.xpose.msra.mxu0 0.0
        %1300 = vmatprep.subr.mxu0 0.0
        %1301 = vmatpush1.xpose.msra.mxu0 0.0
        %1302 = vmatprep.subr.mxu0 0.0
        %1303 = vmatpush1.xpose.msra.mxu0 0.0
        %1304 = vmatprep.subr.mxu0 0.0
        %1305 = vmatpush1.xpose.msra.mxu0 0.0
        %1306 = vmatprep.subr.mxu0 0.0
        %1307 = vmatpush1.xpose.msra.mxu0 0.0
        %1308 = vmatprep.subr.mxu0 0.0
        %1309 = vmatpush1.xpose.msra.mxu0 0.0
        %1310 = vmatprep.subr.mxu0 0.0
        %1311 = vmatpush1.xpose.msra.mxu0 0.0
        %1312 = vmatprep.subr.mxu0 0.0
        %1313 = vmatpush1.xpose.msra.mxu0 0.0
        %1314 = vmatprep.subr.mxu0 0.0
        %1315 = vmatpush1.xpose.msra.mxu0 0.0
        %1316 = vmatprep.subr.mxu0 0.0
        %1317 = vmatpush1.xpose.msra.mxu0 0.0
        %1318 = vmatprep.subr.mxu0 0.0
        %1319 = vmatpush1.xpose.msra.mxu0 0.0
        %1320 = vmatprep.subr.mxu0 0.0
        %1321 = vmatpush1.xpose.msra.mxu0 0.0
        %1322 = vmatprep.subr.mxu0 0.0
        %1323 = vmatpush1.xpose.msra.mxu0 0.0
        %1324 = vmatprep.subr.mxu0 0.0
        %1325 = vmatpush1.xpose.msra.mxu0 0.0
        %1326 = vmatprep.subr.mxu0 0.0
        %1327 = vmatpush1.xpose.msra.mxu0 0.0
        %1328 = vmatprep.subr.mxu0 0.0
        %1329 = vmatpush1.xpose.msra.mxu0 0.0
        %1330 = vmatprep.subr.mxu0 0.0
        %1331 = vmatpush1.xpose.msra.mxu0 0.0
        %1332 = vmatprep.subr.mxu0 0.0
        %1333 = vmatpush1.xpose.msra.mxu0 0.0
        %1334 = vmatprep.subr.mxu0 0.0
        %1335 = vmatpush1.xpose.msra.mxu0 0.0
        %1336 = vmatprep.subr.mxu0 0.0
        %1337 = vmatpush1.xpose.msra.mxu0 0.0
        %1338 = vmatprep.subr.mxu0 0.0
        %1339 = vmatpush1.xpose.msra.mxu0 0.0
        %1340 = vmatprep.mubr.f32.mxu0 0.0
        %1341 = vmatmul.mubr.f32.gmra.mrb[0].mxu0 %v1272
        %v1342 = vpop.f32.mrb[0].mxu0
        %v1343 = vadd.f32 0.0, %v1342
        %v1344 = vpop.f32.mrb[0].mxu0
        %1345 = vdwg.mxu0
        %v1346 = vmul.f32 %v1343, 0.17677669
        %v1347 = vadd.f32 %v1346, %v1012
        %v1348 = vsel %vm1015, %v1347, -inf
        %1349 = vmax.xlane.f32.xlu0 %v1348
        %v1350 = vpop.xlane.xlu0 %1349
        %v1351 = vsub.f32 %v1347, %v1350
        %v1352 = vmul.f32 %v1351, 1.442695
        %v1353 = vpow.pop %v1352
        %v1354 = vsel %vm1015, %v1353, 0.0
        %1355 = vadd.xlane.f32.xlu0 %v1354
        %v1356 = vpop.xlane.xlu0 %1355
        %v1357 = vrcp.pop %v1356
        %v1358 = vmul.f32 %v1353, %v1357
        %1359 = vrot.lane.b32.xlu0 %v927, 64
        %v1360 = vpop.permute.xlu0 %1359
        %v1363 = vsel %vm1015, %v1358, 0
        %1365 = vmatprep.subr.mxu0 0.0
        %1366 = vmatpush1.msra.mxu0 %v1360
        %1367 = vmatprep.subr.mxu0 0.0
        %1368 = vmatpush1.msra.mxu0 0.0
        %1369 = vmatprep.subr.mxu0 0.0
        %1370 = vmatpush1.msra.mxu0 0.0
        %1371 = vmatprep.subr.mxu0 0.0
        %1372 = vmatpush1.msra.mxu0 0.0
        %1373 = vmatprep.subr.mxu0 0.0
        %1374 = vmatpush1.msra.mxu0 0.0
        %1375 = vmatprep.subr.mxu0 0.0
        %1376 = vmatpush1.msra.mxu0 0.0
        %1377 = vmatprep.subr.mxu0 0.0
        %1378 = vmatpush1.msra.mxu0 0.0
        %1379 = vmatprep.subr.mxu0 0.0
        %1380 = vmatpush1.msra.mxu0 0.0
        %1381 = vmatprep.subr.mxu0 0.0
        %1382 = vmatpush1.msra.mxu0 0.0
        %1383 = vmatprep.subr.mxu0 0.0
        %1384 = vmatpush1.msra.mxu0 0.0
        %1385 = vmatprep.subr.mxu0 0.0
        %1386 = vmatpush1.msra.mxu0 0.0
        %1387 = vmatprep.subr.mxu0 0.0
        %1388 = vmatpush1.msra.mxu0 0.0
        %1389 = vmatprep.subr.mxu0 0.0
        %1390 = vmatpush1.msra.mxu0 0.0
        %1391 = vmatprep.subr.mxu0 0.0
        %1392 = vmatpush1.msra.mxu0 0.0
        %1393 = vmatprep.subr.mxu0 0.0
        %1394 = vmatpush1.msra.mxu0 0.0
        %1395 = vmatprep.subr.mxu0 0.0
        %1396 = vmatpush1.msra.mxu0 0.0
        %1397 = vmatprep.subr.mxu0 0.0
        %1398 = vmatpush1.msra.mxu0 0.0
        %1399 = vmatprep.subr.mxu0 0.0
        %1400 = vmatpush1.msra.mxu0 0.0
        %1401 = vmatprep.subr.mxu0 0.0
        %1402 = vmatpush1.msra.mxu0 0.0
        %1403 = vmatprep.subr.mxu0 0.0
        %1404 = vmatpush1.msra.mxu0 0.0
        %1405 = vmatprep.subr.mxu0 0.0
        %1406 = vmatpush1.msra.mxu0 0.0
        %1407 = vmatprep.subr.mxu0 0.0
        %1408 = vmatpush1.msra.mxu0 0.0
        %1409 = vmatprep.subr.mxu0 0.0
        %1410 = vmatpush1.msra.mxu0 0.0
        %1411 = vmatprep.subr.mxu0 0.0
        %1412 = vmatpush1.msra.mxu0 0.0
        %1413 = vmatprep.subr.mxu0 0.0
        %1414 = vmatpush1.msra.mxu0 0.0
        %1415 = vmatprep.subr.mxu0 0.0
        %1416 = vmatpush1.msra.mxu0 0.0
        %1417 = vmatprep.subr.mxu0 0.0
        %1418 = vmatpush1.msra.mxu0 0.0
        %1419 = vmatprep.subr.mxu0 0.0
        %1420 = vmatpush1.msra.mxu0 0.0
        %1421 = vmatprep.subr.mxu0 0.0
        %1422 = vmatpush1.msra.mxu0 0.0
        %1423 = vmatprep.subr.mxu0 0.0
        %1424 = vmatpush1.msra.mxu0 0.0
        %1425 = vmatprep.subr.mxu0 0.0
        %1426 = vmatpush1.msra.mxu0 0.0
        %1427 = vmatprep.subr.mxu0 0.0
        %1428 = vmatpush1.msra.mxu0 0.0
        %1429 = vmatprep.mubr.f32.mxu0 0.0
        %1430 = vmatmul.mubr.f32.gmra.mrb[0].mxu0 %v1363
        %v1431 = vpop.f32.mrb[0].mxu0
        %v1432 = vadd.f32 0.0, %v1431
        %v1433 = vpop.f32.mrb[0].mxu0
        %1434 = vdwg.mxu0
        %1435 = vrot.lane.b32.xlu0 %v856, 32
        %v1436 = vpop.permute.xlu0 %1435
        %1437 = vrot.lane.b32.xlu0 %v858, 32
        %v1438 = vpop.permute.xlu0 %1437
        %v1439 = vsel %vm930, %v1436, 0
        %v1441 = vsel %vm930, %v1438, 0
        %1443 = vmatprep.subr.mxu0 0.0
        %1444 = vmatpush1.xpose.msra.mxu0 %v1441
        %1445 = vmatprep.subr.mxu0 0.0
        %1446 = vmatpush1.xpose.msra.mxu0 0.0
        %1447 = vmatprep.subr.mxu0 0.0
        %1448 = vmatpush1.xpose.msra.mxu0 0.0
        %1449 = vmatprep.subr.mxu0 0.0
        %1450 = vmatpush1.xpose.msra.mxu0 0.0
        %1451 = vmatprep.subr.mxu0 0.0
        %1452 = vmatpush1.xpose.msra.mxu0 0.0
        %1453 = vmatprep.subr.mxu0 0.0
        %1454 = vmatpush1.xpose.msra.mxu0 0.0
        %1455 = vmatprep.subr.mxu0 0.0
        %1456 = vmatpush1.xpose.msra.mxu0 0.0
        %1457 = vmatprep.subr.mxu0 0.0
        %1458 = vmatpush1.xpose.msra.mxu0 0.0
        %1459 = vmatprep.subr.mxu0 0.0
        %1460 = vmatpush1.xpose.msra.mxu0 0.0
        %1461 = vmatprep.subr.mxu0 0.0
        %1462 = vmatpush1.xpose.msra.mxu0 0.0
        %1463 = vmatprep.subr.mxu0 0.0
        %1464 = vmatpush1.xpose.msra.mxu0 0.0
        %1465 = vmatprep.subr.mxu0 0.0
        %1466 = vmatpush1.xpose.msra.mxu0 0.0
        %1467 = vmatprep.subr.mxu0 0.0
        %1468 = vmatpush1.xpose.msra.mxu0 0.0
        %1469 = vmatprep.subr.mxu0 0.0
        %1470 = vmatpush1.xpose.msra.mxu0 0.0
        %1471 = vmatprep.subr.mxu0 0.0
        %1472 = vmatpush1.xpose.msra.mxu0 0.0
        %1473 = vmatprep.subr.mxu0 0.0
        %1474 = vmatpush1.xpose.msra.mxu0 0.0
        %1475 = vmatprep.subr.mxu0 0.0
        %1476 = vmatpush1.xpose.msra.mxu0 0.0
        %1477 = vmatprep.subr.mxu0 0.0
        %1478 = vmatpush1.xpose.msra.mxu0 0.0
        %1479 = vmatprep.subr.mxu0 0.0
        %1480 = vmatpush1.xpose.msra.mxu0 0.0
        %1481 = vmatprep.subr.mxu0 0.0
        %1482 = vmatpush1.xpose.msra.mxu0 0.0
        %1483 = vmatprep.subr.mxu0 0.0
        %1484 = vmatpush1.xpose.msra.mxu0 0.0
        %1485 = vmatprep.subr.mxu0 0.0
        %1486 = vmatpush1.xpose.msra.mxu0 0.0
        %1487 = vmatprep.subr.mxu0 0.0
        %1488 = vmatpush1.xpose.msra.mxu0 0.0
        %1489 = vmatprep.subr.mxu0 0.0
        %1490 = vmatpush1.xpose.msra.mxu0 0.0
        %1491 = vmatprep.subr.mxu0 0.0
        %1492 = vmatpush1.xpose.msra.mxu0 0.0
        %1493 = vmatprep.subr.mxu0 0.0
        %1494 = vmatpush1.xpose.msra.mxu0 0.0
        %1495 = vmatprep.subr.mxu0 0.0
        %1496 = vmatpush1.xpose.msra.mxu0 0.0
        %1497 = vmatprep.subr.mxu0 0.0
        %1498 = vmatpush1.xpose.msra.mxu0 0.0
        %1499 = vmatprep.subr.mxu0 0.0
        %1500 = vmatpush1.xpose.msra.mxu0 0.0
        %1501 = vmatprep.subr.mxu0 0.0
        %1502 = vmatpush1.xpose.msra.mxu0 0.0
        %1503 = vmatprep.subr.mxu0 0.0
        %1504 = vmatpush1.xpose.msra.mxu0 0.0
        %1505 = vmatprep.subr.mxu0 0.0
        %1506 = vmatpush1.xpose.msra.mxu0 0.0
        %1507 = vmatprep.mubr.f32.mxu0 0.0
        %1508 = vmatmul.mubr.f32.gmra.mrb[0].mxu0 %v1439
        %v1509 = vpop.f32.mrb[0].mxu0
        %v1510 = vadd.f32 0.0, %v1509
        %v1511 = vpop.f32.mrb[0].mxu0
        %1512 = vdwg.mxu0
        %v1513 = vmul.f32 %v1510, 0.17677669
        %v1514 = vadd.f32 %v1513, %v1012
        %v1515 = vsel %vm1015, %v1514, -inf
        %1516 = vmax.xlane.f32.xlu0 %v1515
        %v1517 = vpop.xlane.xlu0 %1516
        %v1518 = vsub.f32 %v1514, %v1517
        %v1519 = vmul.f32 %v1518, 1.442695
        %v1520 = vpow.pop %v1519
        %v1521 = vsel %vm1015, %v1520, 0.0
        %1522 = vadd.xlane.f32.xlu0 %v1521
        %v1523 = vpop.xlane.xlu0 %1522
        %v1524 = vrcp.pop %v1523
        %v1525 = vmul.f32 %v1520, %v1524
        %1526 = vrot.lane.b32.xlu0 %v927, 32
        %v1527 = vpop.permute.xlu0 %1526
        %v1530 = vsel %vm1015, %v1525, 0
        %1532 = vmatprep.subr.mxu0 0.0
        %1533 = vmatpush1.msra.mxu0 %v1527
        %1534 = vmatprep.subr.mxu0 0.0
        %1535 = vmatpush1.msra.mxu0 0.0
        %1536 = vmatprep.subr.mxu0 0.0
        %1537 = vmatpush1.msra.mxu0 0.0
        %1538 = vmatprep.subr.mxu0 0.0
        %1539 = vmatpush1.msra.mxu0 0.0
        %1540 = vmatprep.subr.mxu0 0.0
        %1541 = vmatpush1.msra.mxu0 0.0
        %1542 = vmatprep.subr.mxu0 0.0
        %1543 = vmatpush1.msra.mxu0 0.0
        %1544 = vmatprep.subr.mxu0 0.0
        %1545 = vmatpush1.msra.mxu0 0.0
        %1546 = vmatprep.subr.mxu0 0.0
        %1547 = vmatpush1.msra.mxu0 0.0
        %1548 = vmatprep.subr.mxu0 0.0
        %1549 = vmatpush1.msra.mxu0 0.0
        %1550 = vmatprep.subr.mxu0 0.0
        %1551 = vmatpush1.msra.mxu0 0.0
        %1552 = vmatprep.subr.mxu0 0.0
        %1553 = vmatpush1.msra.mxu0 0.0
        %1554 = vmatprep.subr.mxu0 0.0
        %1555 = vmatpush1.msra.mxu0 0.0
        %1556 = vmatprep.subr.mxu0 0.0
        %1557 = vmatpush1.msra.mxu0 0.0
        %1558 = vmatprep.subr.mxu0 0.0
        %1559 = vmatpush1.msra.mxu0 0.0
        %1560 = vmatprep.subr.mxu0 0.0
        %1561 = vmatpush1.msra.mxu0 0.0
        %1562 = vmatprep.subr.mxu0 0.0
        %1563 = vmatpush1.msra.mxu0 0.0
        %1564 = vmatprep.subr.mxu0 0.0
        %1565 = vmatpush1.msra.mxu0 0.0
        %1566 = vmatprep.subr.mxu0 0.0
        %1567 = vmatpush1.msra.mxu0 0.0
        %1568 = vmatprep.subr.mxu0 0.0
        %1569 = vmatpush1.msra.mxu0 0.0
        %1570 = vmatprep.subr.mxu0 0.0
        %1571 = vmatpush1.msra.mxu0 0.0
        %1572 = vmatprep.subr.mxu0 0.0
        %1573 = vmatpush1.msra.mxu0 0.0
        %1574 = vmatprep.subr.mxu0 0.0
        %1575 = vmatpush1.msra.mxu0 0.0
        %1576 = vmatprep.subr.mxu0 0.0
        %1577 = vmatpush1.msra.mxu0 0.0
        %1578 = vmatprep.subr.mxu0 0.0
        %1579 = vmatpush1.msra.mxu0 0.0
        %1580 = vmatprep.subr.mxu0 0.0
        %1581 = vmatpush1.msra.mxu0 0.0
        %1582 = vmatprep.subr.mxu0 0.0
        %1583 = vmatpush1.msra.mxu0 0.0
        %1584 = vmatprep.subr.mxu0 0.0
        %1585 = vmatpush1.msra.mxu0 0.0
        %1586 = vmatprep.subr.mxu0 0.0
        %1587 = vmatpush1.msra.mxu0 0.0
        %1588 = vmatprep.subr.mxu0 0.0
        %1589 = vmatpush1.msra.mxu0 0.0
        %1590 = vmatprep.subr.mxu0 0.0
        %1591 = vmatpush1.msra.mxu0 0.0
        %1592 = vmatprep.subr.mxu0 0.0
        %1593 = vmatpush1.msra.mxu0 0.0
        %1594 = vmatprep.subr.mxu0 0.0
        %1595 = vmatpush1.msra.mxu0 0.0
        %1596 = vmatprep.mubr.f32.mxu0 0.0
        %1597 = vmatmul.mubr.f32.gmra.mrb[0].mxu0 %v1530
        %v1598 = vpop.f32.mrb[0].mxu0
        %v1599 = vadd.f32 0.0, %v1598
        %v1600 = vpop.f32.mrb[0].mxu0
        %1601 = vdwg.mxu0
        %1603 = vrot.lane.b32.xlu0 %v1265, 32
        %v1604 = vpop.permute.xlu0 %1603
        %1607 = vrot.lane.b32.xlu0 %v1432, 64
        %v1608 = vpop.permute.xlu0 %1607
        %1611 = vrot.lane.b32.xlu0 %v1599, 96
        %v1612 = vpop.permute.xlu0 %1611
        %v1614 = vsel %vm930, %v1097, %v1604
        %vm1615 = vcmask 523264
        %v1616 = vsel %vm1615, %v1614, %v1608
        %vm1617 = vcmask 785408
        %v1618 = vsel %vm1617, %v1616, %v1612
        %v1619 = vld [vmem:[%s6] sm:$0xff]
        %v1620 = vld [vmem:[%s6 + $0x8] sm:$0xff]
        %v1621 = vld [vmem:[%s6 + $0x10] sm:$0xff]
        %v1622 = vld [vmem:[%s6 + $0x18] sm:$0xff]
        %v1623 = vld [vmem:[%s6 + $0x20] sm:$0xff]
        %v1624 = vld [vmem:[%s6 + $0x28] sm:$0xff]
        %v1625 = vld [vmem:[%s6 + $0x30] sm:$0xff]
        %v1626 = vld [vmem:[%s6 + $0x38] sm:$0xff]
        %v1627 = vld [vmem:[%s6 + $0x40] sm:$0xff]
        %v1628 = vld [vmem:[%s6 + $0x48] sm:$0xff]
        %v1629 = vld [vmem:[%s6 + $0x50] sm:$0xff]
        %v1630 = vld [vmem:[%s6 + $0x58] sm:$0xff]
        %v1631 = vld [vmem:[%s6 + $0x60] sm:$0xff]
        %v1632 = vld [vmem:[%s6 + $0x68] sm:$0xff]
        %v1633 = vld [vmem:[%s6 + $0x70] sm:$0xff]
        %v1634 = vld [vmem:[%s6 + $0x78] sm:$0xff]
        %v1635 = vld [vmem:[%s7] sm:$0x1]
        %v1637 = vlaneseq
        %v1638 = vshrl.u32 %v1637, 7
        %v1639 = vsub.s32 0, %v1638
        %v1640 = vrot.slane %v1635, %v1639
        %1642 = vmatprep.subr.mxu0 0.0
        %1643 = vmatpush1.msra.mxu0 %v1619
        %1644 = vmatprep.subr.mxu0 0.0
        %1645 = vmatpush1.msra.mxu0 %v1620
        %1646 = vmatprep.subr.mxu0 0.0
        %1647 = vmatpush1.msra.mxu0 %v1621
        %1648 = vmatprep.subr.mxu0 0.0
        %1649 = vmatpush1.msra.mxu0 %v1622
        %1650 = vmatprep.subr.mxu0 0.0
        %1651 = vmatpush1.msra.mxu0 %v1623
        %1652 = vmatprep.subr.mxu0 0.0
        %1653 = vmatpush1.msra.mxu0 %v1624
        %1654 = vmatprep.subr.mxu0 0.0
        %1655 = vmatpush1.msra.mxu0 %v1625
        %1656 = vmatprep.subr.mxu0 0.0
        %1657 = vmatpush1.msra.mxu0 %v1626
        %1658 = vmatprep.subr.mxu0 0.0
        %1659 = vmatpush1.msra.mxu0 %v1627
        %1660 = vmatprep.subr.mxu0 0.0
        %1661 = vmatpush1.msra.mxu0 %v1628
        %1662 = vmatprep.subr.mxu0 0.0
        %1663 = vmatpush1.msra.mxu0 %v1629
        %1664 = vmatprep.subr.mxu0 0.0
        %1665 = vmatpush1.msra.mxu0 %v1630
        %1666 = vmatprep.subr.mxu0 0.0
        %1667 = vmatpush1.msra.mxu0 %v1631
        %1668 = vmatprep.subr.mxu0 0.0
        %1669 = vmatpush1.msra.mxu0 %v1632
        %1670 = vmatprep.subr.mxu0 0.0
        %1671 = vmatpush1.msra.mxu0 %v1633
        %1672 = vmatprep.subr.mxu0 0.0
        %1673 = vmatpush1.msra.mxu0 %v1634
        %1674 = vmatprep.subr.mxu0 0.0
        %1675 = vmatpush1.msra.mxu0 0.0
        %1676 = vmatprep.subr.mxu0 0.0
        %1677 = vmatpush1.msra.mxu0 0.0
        %1678 = vmatprep.subr.mxu0 0.0
        %1679 = vmatpush1.msra.mxu0 0.0
        %1680 = vmatprep.subr.mxu0 0.0
        %1681 = vmatpush1.msra.mxu0 0.0
        %1682 = vmatprep.subr.mxu0 0.0
        %1683 = vmatpush1.msra.mxu0 0.0
        %1684 = vmatprep.subr.mxu0 0.0
        %1685 = vmatpush1.msra.mxu0 0.0
        %1686 = vmatprep.subr.mxu0 0.0
        %1687 = vmatpush1.msra.mxu0 0.0
        %1688 = vmatprep.subr.mxu0 0.0
        %1689 = vmatpush1.msra.mxu0 0.0
        %1690 = vmatprep.subr.mxu0 0.0
        %1691 = vmatpush1.msra.mxu0 0.0
        %1692 = vmatprep.subr.mxu0 0.0
        %1693 = vmatpush1.msra.mxu0 0.0
        %1694 = vmatprep.subr.mxu0 0.0
        %1695 = vmatpush1.msra.mxu0 0.0
        %1696 = vmatprep.subr.mxu0 0.0
        %1697 = vmatpush1.msra.mxu0 0.0
        %1698 = vmatprep.subr.mxu0 0.0
        %1699 = vmatpush1.msra.mxu0 0.0
        %1700 = vmatprep.subr.mxu0 0.0
        %1701 = vmatpush1.msra.mxu0 0.0
        %1702 = vmatprep.subr.mxu0 0.0
        %1703 = vmatpush1.msra.mxu0 0.0
        %1704 = vmatprep.subr.mxu0 0.0
        %1705 = vmatpush1.msra.mxu0 0.0
        %1706 = vmatprep.mubr.f32.mxu0 0.0
        %1707 = vmatmul.mubr.f32.gmra.mrb[0].mxu0 %v1618
        %v1708 = vpop.f32.mrb[0].mxu0
        %v1709 = vadd.f32 %v1640, %v1708
        %v1710 = vpop.f32.mrb[0].mxu0
        %1711 = vdwg.mxu0
        %v1712 = vadd.f32 %v1709, %v722
        %v1713 = vld [vmem:[%s8] sm:$0x1]
        %v1714 = vld [vmem:[%s9] sm:$0x1]
        %1715 = vadd.xlane.f32.xlu0 %v1712
        %v1716 = vpop.xlane.xlu0 %1715
        %v1717 = vmul.f32 %v1716, %v699
        %v1718 = vsub.f32 %v1712, %v1717
        %v1719 = vmul.f32 %v1718, %v1718
        %1720 = vadd.xlane.f32.xlu0 %v1719
        %v1721 = vpop.xlane.xlu0 %1720
        %v1722 = vmul.f32 %v1721, %v699
        %v1723 = vadd.f32 %v1722, 1e-12
        %v1724 = vrsqrt.pop %v1723
        %v1725 = vmul.f32 %v1718, %v1724
        %v1727 = vlaneseq
        %v1728 = vshrl.u32 %v1727, 7
        %v1729 = vsub.s32 0, %v1728
        %v1730 = vrot.slane %v1713, %v1729
        %v1732 = vmul.f32 %v1725, %v1730
        %v1734 = vlaneseq
        %v1735 = vshrl.u32 %v1734, 7
        %v1736 = vsub.s32 0, %v1735
        %v1737 = vrot.slane %v1714, %v1736
        %v1739 = vadd.f32 %v1732, %v1737
        %v1740 = vld [vmem:[#allocation7] sm:$0xff]
        %v1741 = vld [vmem:[#allocation7 + $0x8] sm:$0xff]
        %v1742 = vld [vmem:[#allocation7 + $0x10] sm:$0xff]
        %v1743 = vld [vmem:[#allocation7 + $0x18] sm:$0xff]
        %v1744 = vld [vmem:[#allocation7 + $0x20] sm:$0xff]
        %v1745 = vld [vmem:[#allocation7 + $0x28] sm:$0xff]
        %v1746 = vld [vmem:[#allocation7 + $0x30] sm:$0xff]
        %v1747 = vld [vmem:[#allocation7 + $0x38] sm:$0xff]
        %v1748 = vld [vmem:[#allocation7 + $0x40] sm:$0xff]
        %v1749 = vld [vmem:[#allocation7 + $0x48] sm:$0xff]
        %v1750 = vld [vmem:[#allocation7 + $0x50] sm:$0xff]
        %v1751 = vld [vmem:[#allocation7 + $0x58] sm:$0xff]
        %v1752 = vld [vmem:[#allocation7 + $0x60] sm:$0xff]
        %v1753 = vld [vmem:[#allocation7 + $0x68] sm:$0xff]
        %v1754 = vld [vmem:[#allocation7 + $0x70] sm:$0xff]
        %v1755 = vld [vmem:[#allocation7 + $0x78] sm:$0xff]
        %v1756 = vld [vmem:[#allocation7 + $0x80] sm:$0xff]
        %v1757 = vld [vmem:[#allocation7 + $0x88] sm:$0xff]
        %v1758 = vld [vmem:[#allocation7 + $0x90] sm:$0xff]
        %v1759 = vld [vmem:[#allocation7 + $0x98] sm:$0xff]
        %v1760 = vld [vmem:[#allocation7 + $0xa0] sm:$0xff]
        %v1761 = vld [vmem:[#allocation7 + $0xa8] sm:$0xff]
        %v1762 = vld [vmem:[#allocation7 + $0xb0] sm:$0xff]
        %v1763 = vld [vmem:[#allocation7 + $0xb8] sm:$0xff]
        %v1764 = vld [vmem:[#allocation7 + $0xc0] sm:$0xff]
        %v1765 = vld [vmem:[#allocation7 + $0xc8] sm:$0xff]
        %v1766 = vld [vmem:[#allocation7 + $0xd0] sm:$0xff]
        %v1767 = vld [vmem:[#allocation7 + $0xd8] sm:$0xff]
        %v1768 = vld [vmem:[#allocation7 + $0xe0] sm:$0xff]
        %v1769 = vld [vmem:[#allocation7 + $0xe8] sm:$0xff]
        %v1770 = vld [vmem:[#allocation7 + $0xf0] sm:$0xff]
        %v1771 = vld [vmem:[#allocation7 + $0xf8] sm:$0xff]
        %v1772 = vld [vmem:[%s11] sm:$0x3]
        %v1774 = vlaneseq
        %v1775 = vshrl.u32 %v1774, 7
        %v1776 = vsub.s32 0, %v1775
        %v1777 = vrot.slane %v1772, %v1776
        %v1778 = vlaneseq
        %v1779 = vshrl.u32 %v1778, 7
        %v1780 = vsub.s32 1, %v1779
        %v1781 = vrot.slane %v1772, %v1780
        %1784 = vmatprep.subr.mxu0 %v1741
        %1785 = vmatpush1.msra.mxu0 %v1740
        %1786 = vmatprep.subr.mxu0 %v1743
        %1787 = vmatpush1.msra.mxu0 %v1742
        %1788 = vmatprep.subr.mxu0 %v1745
        %1789 = vmatpush1.msra.mxu0 %v1744
        %1790 = vmatprep.subr.mxu0 %v1747
        %1791 = vmatpush1.msra.mxu0 %v1746
        %1792 = vmatprep.subr.mxu0 %v1749
        %1793 = vmatpush1.msra.mxu0 %v1748
        %1794 = vmatprep.subr.mxu0 %v1751
        %1795 = vmatpush1.msra.mxu0 %v1750
        %1796 = vmatprep.subr.mxu0 %v1753
        %1797 = vmatpush1.msra.mxu0 %v1752
        %1798 = vmatprep.subr.mxu0 %v1755
        %1799 = vmatpush1.msra.mxu0 %v1754
        %1800 = vmatprep.subr.mxu0 %v1757
        %1801 = vmatpush1.msra.mxu0 %v1756
        %1802 = vmatprep.subr.mxu0 %v1759
        %1803 = vmatpush1.msra.mxu0 %v1758
        %1804 = vmatprep.subr.mxu0 %v1761
        %1805 = vmatpush1.msra.mxu0 %v1760
        %1806 = vmatprep.subr.mxu0 %v1763
        %1807 = vmatpush1.msra.mxu0 %v1762
        %1808 = vmatprep.subr.mxu0 %v1765
        %1809 = vmatpush1.msra.mxu0 %v1764
        %1810 = vmatprep.subr.mxu0 %v1767
        %1811 = vmatpush1.msra.mxu0 %v1766
        %1812 = vmatprep.subr.mxu0 %v1769
        %1813 = vmatpush1.msra.mxu0 %v1768
        %1814 = vmatprep.subr.mxu0 %v1771
        %1815 = vmatpush1.msra.mxu0 %v1770
        %1816 = vmatprep.subr.mxu0 0.0
        %1817 = vmatpush1.msra.mxu0 0.0
        %1818 = vmatprep.subr.mxu0 0.0
        %1819 = vmatpush1.msra.mxu0 0.0
        %1820 = vmatprep.subr.mxu0 0.0
        %1821 = vmatpush1.msra.mxu0 0.0
        %1822 = vmatprep.subr.mxu0 0.0
        %1823 = vmatpush1.msra.mxu0 0.0
        %1824 = vmatprep.subr.mxu0 0.0
        %1825 = vmatpush1.msra.mxu0 0.0
        %1826 = vmatprep.subr.mxu0 0.0
        %1827 = vmatpush1.msra.mxu0 0.0
        %1828 = vmatprep.subr.mxu0 0.0
        %1829 = vmatpush1.msra.mxu0 0.0
        %1830 = vmatprep.subr.mxu0 0.0
        %1831 = vmatpush1.msra.mxu0 0.0
        %1832 = vmatprep.subr.mxu0 0.0
        %1833 = vmatpush1.msra.mxu0 0.0
        %1834 = vmatprep.subr.mxu0 0.0
        %1835 = vmatpush1.msra.mxu0 0.0
        %1836 = vmatprep.subr.mxu0 0.0
        %1837 = vmatpush1.msra.mxu0 0.0
        %1838 = vmatprep.subr.mxu0 0.0
        %1839 = vmatpush1.msra.mxu0 0.0
        %1840 = vmatprep.subr.mxu0 0.0
        %1841 = vmatpush1.msra.mxu0 0.0
        %1842 = vmatprep.subr.mxu0 0.0
        %1843 = vmatpush1.msra.mxu0 0.0
        %1844 = vmatprep.subr.mxu0 0.0
        %1845 = vmatpush1.msra.mxu0 0.0
        %1846 = vmatprep.subr.mxu0 0.0
        %1847 = vmatpush1.msra.mxu0 0.0
        %1848 = vmatprep.mubr.f32.mxu0 0.0
        %1849 = vmatmul.mubr.f32.gmra.mrb[0].mxu0 %v1739
        %v1850 = vpop.f32.mrb[0].mxu0
        %v1851 = vadd.f32 %v1777, %v1850
        %v1852 = vpop.f32.mrb[0].mxu0
        %v1853 = vadd.f32 %v1781, %v1852
        %1854 = vdwg.mxu0
        %v1855 = vmul.f32 %v1851, %v1851
        %v1856 = vmul.f32 %v1853, %v1853
        %v1857 = vmul.f32 %v1851, %v1855
        %v1858 = vmul.f32 %v1853, %v1856
        %v1859 = vmul.f32 %v1857, 0.044715
        %v1860 = vmul.f32 %v1858, 0.044715
        %v1861 = vadd.f32 %v1851, %v1859
        %v1862 = vadd.f32 %v1853, %v1860
        %v1863 = vmul.f32 %v1861, 0.7978846
        %v1864 = vmul.f32 %v1862, 0.7978846
        %v1865 = vtanh.pop %v1863
        %v1866 = vtanh.pop %v1864
        %v1867 = vadd.f32 %v1865, 1.0
        %v1868 = vadd.f32 %v1866, 1.0
        %v1869 = vmul.f32 %v1867, 0.5
        %v1870 = vmul.f32 %v1868, 0.5
        %v1871 = vmul.f32 %v1851, %v1869
        %v1872 = vmul.f32 %v1853, %v1870
        %v1873 = vld [vmem:[#allocation9] sm:$0xff]
        %v1874 = vld [vmem:[#allocation9 + $0x8] sm:$0xff]
        %v1875 = vld [vmem:[#allocation9 + $0x10] sm:$0xff]
        %v1876 = vld [vmem:[#allocation9 + $0x18] sm:$0xff]
        %v1877 = vld [vmem:[#allocation9 + $0x20] sm:$0xff]
        %v1878 = vld [vmem:[#allocation9 + $0x28] sm:$0xff]
        %v1879 = vld [vmem:[#allocation9 + $0x30] sm:$0xff]
        %v1880 = vld [vmem:[#allocation9 + $0x38] sm:$0xff]
        %v1881 = vld [vmem:[#allocation9 + $0x40] sm:$0xff]
        %v1882 = vld [vmem:[#allocation9 + $0x48] sm:$0xff]
        %v1883 = vld [vmem:[#allocation9 + $0x50] sm:$0xff]
        %v1884 = vld [vmem:[#allocation9 + $0x58] sm:$0xff]
        %v1885 = vld [vmem:[#allocation9 + $0x60] sm:$0xff]
        %v1886 = vld [vmem:[#allocation9 + $0x68] sm:$0xff]
        %v1887 = vld [vmem:[#allocation9 + $0x70] sm:$0xff]
        %v1888 = vld [vmem:[#allocation9 + $0x78] sm:$0xff]
        %v1889 = vld [vmem:[#allocation9 + $0x80] sm:$0xff]
        %v1890 = vld [vmem:[#allocation9 + $0x88] sm:$0xff]
        %v1891 = vld [vmem:[#allocation9 + $0x90] sm:$0xff]
        %v1892 = vld [vmem:[#allocation9 + $0x98] sm:$0xff]
        %v1893 = vld [vmem:[#allocation9 + $0xa0] sm:$0xff]
        %v1894 = vld [vmem:[#allocation9 + $0xa8] sm:$0xff]
        %v1895 = vld [vmem:[#allocation9 + $0xb0] sm:$0xff]
        %v1896 = vld [vmem:[#allocation9 + $0xb8] sm:$0xff]
        %v1897 = vld [vmem:[#allocation9 + $0xc0] sm:$0xff]
        %v1898 = vld [vmem:[#allocation9 + $0xc8] sm:$0xff]
        %v1899 = vld [vmem:[#allocation9 + $0xd0] sm:$0xff]
        %v1900 = vld [vmem:[#allocation9 + $0xd8] sm:$0xff]
        %v1901 = vld [vmem:[#allocation9 + $0xe0] sm:$0xff]
        %v1902 = vld [vmem:[#allocation9 + $0xe8] sm:$0xff]
        %v1903 = vld [vmem:[#allocation9 + $0xf0] sm:$0xff]
        %v1904 = vld [vmem:[#allocation9 + $0xf8] sm:$0xff]
        %v1905 = vld [vmem:[%s13] sm:$0x1]
        %v1907 = vlaneseq
        %v1908 = vshrl.u32 %v1907, 7
        %v1909 = vsub.s32 0, %v1908
        %v1910 = vrot.slane %v1905, %v1909
        %1912 = vmatprep.subr.mxu0 0.0
        %1913 = vmatpush1.msra.mxu0 %v1873
        %1914 = vmatprep.subr.mxu0 0.0
        %1915 = vmatpush1.msra.mxu0 %v1874
        %1916 = vmatprep.subr.mxu0 0.0
        %1917 = vmatpush1.msra.mxu0 %v1875
        %1918 = vmatprep.subr.mxu0 0.0
        %1919 = vmatpush1.msra.mxu0 %v1876
        %1920 = vmatprep.subr.mxu0 0.0
        %1921 = vmatpush1.msra.mxu0 %v1877
        %1922 = vmatprep.subr.mxu0 0.0
        %1923 = vmatpush1.msra.mxu0 %v1878
        %1924 = vmatprep.subr.mxu0 0.0
        %1925 = vmatpush1.msra.mxu0 %v1879
        %1926 = vmatprep.subr.mxu0 0.0
        %1927 = vmatpush1.msra.mxu0 %v1880
        %1928 = vmatprep.subr.mxu0 0.0
        %1929 = vmatpush1.msra.mxu0 %v1881
        %1930 = vmatprep.subr.mxu0 0.0
        %1931 = vmatpush1.msra.mxu0 %v1882
        %1932 = vmatprep.subr.mxu0 0.0
        %1933 = vmatpush1.msra.mxu0 %v1883
        %1934 = vmatprep.subr.mxu0 0.0
        %1935 = vmatpush1.msra.mxu0 %v1884
        %1936 = vmatprep.subr.mxu0 0.0
        %1937 = vmatpush1.msra.mxu0 %v1885
        %1938 = vmatprep.subr.mxu0 0.0
        %1939 = vmatpush1.msra.mxu0 %v1886
        %1940 = vmatprep.subr.mxu0 0.0
        %1941 = vmatpush1.msra.mxu0 %v1887
        %1942 = vmatprep.subr.mxu0 0.0
        %1943 = vmatpush1.msra.mxu0 %v1888
        %1944 = vmatprep.subr.mxu0 0.0
        %1945 = vmatpush1.msra.mxu0 %v1889
        %1946 = vmatprep.subr.mxu0 0.0
        %1947 = vmatpush1.msra.mxu0 %v1890
        %1948 = vmatprep.subr.mxu0 0.0
        %1949 = vmatpush1.msra.mxu0 %v1891
        %1950 = vmatprep.subr.mxu0 0.0
        %1951 = vmatpush1.msra.mxu0 %v1892
        %1952 = vmatprep.subr.mxu0 0.0
        %1953 = vmatpush1.msra.mxu0 %v1893
        %1954 = vmatprep.subr.mxu0 0.0
        %1955 = vmatpush1.msra.mxu0 %v1894
        %1956 = vmatprep.subr.mxu0 0.0
        %1957 = vmatpush1.msra.mxu0 %v1895
        %1958 = vmatprep.subr.mxu0 0.0
        %1959 = vmatpush1.msra.mxu0 %v1896
        %1960 = vmatprep.subr.mxu0 0.0
        %1961 = vmatpush1.msra.mxu0 %v1897
        %1962 = vmatprep.subr.mxu0 0.0
        %1963 = vmatpush1.msra.mxu0 %v1898
        %1964 = vmatprep.subr.mxu0 0.0
        %1965 = vmatpush1.msra.mxu0 %v1899
        %1966 = vmatprep.subr.mxu0 0.0
        %1967 = vmatpush1.msra.mxu0 %v1900
        %1968 = vmatprep.subr.mxu0 0.0
        %1969 = vmatpush1.msra.mxu0 %v1901
        %1970 = vmatprep.subr.mxu0 0.0
        %1971 = vmatpush1.msra.mxu0 %v1902
        %1972 = vmatprep.subr.mxu0 0.0
        %1973 = vmatpush1.msra.mxu0 %v1903
        %1974 = vmatprep.subr.mxu0 0.0
        %1975 = vmatpush1.msra.mxu0 %v1904
        %1976 = vmatprep.mubr.f32.mxu0 %v1872
        %1977 = vmatmul.mubr.f32.gmra.mrb[0].mxu0 %v1871
        %v1978 = vpop.f32.mrb[0].mxu0
        %v1979 = vadd.f32 %v1910, %v1978
        %v1980 = vpop.f32.mrb[0].mxu0
        %1981 = vdwg.mxu0
        %v1982 = vadd.f32 %v1979, %v1739
        %v1983 = vld [vmem:[%s14] sm:$0x1]
        %v1984 = vld [vmem:[#allocation10] sm:$0x1]
        %1985 = vadd.xlane.f32.xlu0 %v1982
        %v1986 = vpop.xlane.xlu0 %1985
        %v1987 = vmul.f32 %v1986, %v699
        %v1988 = vsub.f32 %v1982, %v1987
        %v1989 = vmul.f32 %v1988, %v1988
        %1990 = vadd.xlane.f32.xlu0 %v1989
        %v1991 = vpop.xlane.xlu0 %1990
        %v1992 = vmul.f32 %v1991, %v699
        %v1993 = vadd.f32 %v1992, 1e-12
        %v1994 = vrsqrt.pop %v1993
        %v1995 = vmul.f32 %v1988, %v1994
        %v1997 = vlaneseq
        %v1998 = vshrl.u32 %v1997, 7
        %v1999 = vsub.s32 0, %v1998
        %v2000 = vrot.slane %v1983, %v1999
        %v2002 = vmul.f32 %v1995, %v2000
        %v2004 = vlaneseq
        %v2005 = vshrl.u32 %v2004, 7
        %v2006 = vsub.s32 0, %v2005
        %v2007 = vrot.slane %v1984, %v2006
        %v2009 = vadd.f32 %v2002, %v2007
        %s2010 = scalar_lea.vmem [#allocation6], 384
        %v2011 = vld [vmem:[%s2010] sm:$0xff]
        %v2012 = vld [vmem:[%s2010 + $0x8] sm:$0xff]
        %v2013 = vld [vmem:[%s2010 + $0x10] sm:$0xff]
        %v2014 = vld [vmem:[%s2010 + $0x18] sm:$0xff]
        %v2015 = vld [vmem:[%s2010 + $0x20] sm:$0xff]
        %v2016 = vld [vmem:[%s2010 + $0x28] sm:$0xff]
        %v2017 = vld [vmem:[%s2010 + $0x30] sm:$0xff]
        %v2018 = vld [vmem:[%s2010 + $0x38] sm:$0xff]
        %v2019 = vld [vmem:[%s2010 + $0x40] sm:$0xff]
        %v2020 = vld [vmem:[%s2010 + $0x48] sm:$0xff]
        %v2021 = vld [vmem:[%s2010 + $0x50] sm:$0xff]
        %v2022 = vld [vmem:[%s2010 + $0x58] sm:$0xff]
        %v2023 = vld [vmem:[%s2010 + $0x60] sm:$0xff]
        %v2024 = vld [vmem:[%s2010 + $0x68] sm:$0xff]
        %v2025 = vld [vmem:[%s2010 + $0x70] sm:$0xff]
        %v2026 = vld [vmem:[%s2010 + $0x78] sm:$0xff]
        %v2027 = vld [vmem:[%s2010 + $0x80] sm:$0xff]
        %v2028 = vld [vmem:[%s2010 + $0x88] sm:$0xff]
        %v2029 = vld [vmem:[%s2010 + $0x90] sm:$0xff]
        %v2030 = vld [vmem:[%s2010 + $0x98] sm:$0xff]
        %v2031 = vld [vmem:[%s2010 + $0xa0] sm:$0xff]
        %v2032 = vld [vmem:[%s2010 + $0xa8] sm:$0xff]
        %v2033 = vld [vmem:[%s2010 + $0xb0] sm:$0xff]
        %v2034 = vld [vmem:[%s2010 + $0xb8] sm:$0xff]
        %v2035 = vld [vmem:[%s2010 + $0xc0] sm:$0xff]
        %v2036 = vld [vmem:[%s2010 + $0xc8] sm:$0xff]
        %v2037 = vld [vmem:[%s2010 + $0xd0] sm:$0xff]
        %v2038 = vld [vmem:[%s2010 + $0xd8] sm:$0xff]
        %v2039 = vld [vmem:[%s2010 + $0xe0] sm:$0xff]
        %v2040 = vld [vmem:[%s2010 + $0xe8] sm:$0xff]
        %v2041 = vld [vmem:[%s2010 + $0xf0] sm:$0xff]
        %v2042 = vld [vmem:[%s2010 + $0xf8] sm:$0xff]
        %v2043 = vld [vmem:[%s2010 + $0x100] sm:$0xff]
        %v2044 = vld [vmem:[%s2010 + $0x108] sm:$0xff]
        %v2045 = vld [vmem:[%s2010 + $0x110] sm:$0xff]
        %v2046 = vld [vmem:[%s2010 + $0x118] sm:$0xff]
        %v2047 = vld [vmem:[%s2010 + $0x120] sm:$0xff]
        %v2048 = vld [vmem:[%s2010 + $0x128] sm:$0xff]
        %v2049 = vld [vmem:[%s2010 + $0x130] sm:$0xff]
        %v2050 = vld [vmem:[%s2010 + $0x138] sm:$0xff]
        %v2051 = vld [vmem:[%s2010 + $0x140] sm:$0xff]
        %v2052 = vld [vmem:[%s2010 + $0x148] sm:$0xff]
        %v2053 = vld [vmem:[%s2010 + $0x150] sm:$0xff]
        %v2054 = vld [vmem:[%s2010 + $0x158] sm:$0xff]
        %v2055 = vld [vmem:[%s2010 + $0x160] sm:$0xff]
        %v2056 = vld [vmem:[%s2010 + $0x168] sm:$0xff]
        %v2057 = vld [vmem:[%s2010 + $0x170] sm:$0xff]
        %v2058 = vld [vmem:[%s2010 + $0x178] sm:$0xff]
        %s2059 = scalar_lea.vmem %s5, 3
        %v2060 = vld [vmem:[%s2059] sm:$0x7]
        %v2062 = vlaneseq
        %v2063 = vshrl.u32 %v2062, 7
        %v2064 = vsub.s32 0, %v2063
        %v2065 = vrot.slane %v2060, %v2064
        %v2066 = vlaneseq
        %v2067 = vshrl.u32 %v2066, 7
        %v2068 = vsub.s32 1, %v2067
        %v2069 = vrot.slane %v2060, %v2068
        %v2070 = vlaneseq
        %v2071 = vshrl.u32 %v2070, 7
        %v2072 = vsub.s32 2, %v2071
        %v2073 = vrot.slane %v2060, %v2072
        %2077 = vmatprep.subr.mxu0 %v2012
        %2078 = vmatpush1.msra.mxu0 %v2011
        %2079 = vmatprep.subr.mxu0 %v2015
        %2080 = vmatpush1.msra.mxu0 %v2014
        %2081 = vmatprep.subr.mxu0 %v2018
        %2082 = vmatpush1.msra.mxu0 %v2017
        %2083 = vmatprep.subr.mxu0 %v2021
        %2084 = vmatpush1.msra.mxu0 %v2020
        %2085 = vmatprep.subr.mxu0 %v2024
        %2086 = vmatpush1.msra.mxu0 %v2023
        %2087 = vmatprep.subr.mxu0 %v2027
        %2088 = vmatpush1.msra.mxu0 %v2026
        %2089 = vmatprep.subr.mxu0 %v2030
        %2090 = vmatpush1.msra.mxu0 %v2029
        %2091 = vmatprep.subr.mxu0 %v2033
        %2092 = vmatpush1.msra.mxu0 %v2032
        %2093 = vmatprep.subr.mxu0 %v2036
        %2094 = vmatpush1.msra.mxu0 %v2035
        %2095 = vmatprep.subr.mxu0 %v2039
        %2096 = vmatpush1.msra.mxu0 %v2038
        %2097 = vmatprep.subr.mxu0 %v2042
        %2098 = vmatpush1.msra.mxu0 %v2041
        %2099 = vmatprep.subr.mxu0 %v2045
        %2100 = vmatpush1.msra.mxu0 %v2044
        %2101 = vmatprep.subr.mxu0 %v2048
        %2102 = vmatpush1.msra.mxu0 %v2047
        %2103 = vmatprep.subr.mxu0 %v2051
        %2104 = vmatpush1.msra.mxu0 %v2050
        %2105 = vmatprep.subr.mxu0 %v2054
        %2106 = vmatpush1.msra.mxu0 %v2053
        %2107 = vmatprep.subr.mxu0 %v2057
        %2108 = vmatpush1.msra.mxu0 %v2056
        %2109 = vmatprep.subr.mxu0 0.0
        %2110 = vmatpush1.msra.mxu0 0.0
        %2111 = vmatprep.subr.mxu0 0.0
        %2112 = vmatpush1.msra.mxu0 0.0
        %2113 = vmatprep.subr.mxu0 0.0
        %2114 = vmatpush1.msra.mxu0 0.0
        %2115 = vmatprep.subr.mxu0 0.0
        %2116 = vmatpush1.msra.mxu0 0.0
        %2117 = vmatprep.subr.mxu0 0.0
        %2118 = vmatpush1.msra.mxu0 0.0
        %2119 = vmatprep.subr.mxu0 0.0
        %2120 = vmatpush1.msra.mxu0 0.0
        %2121 = vmatprep.subr.mxu0 0.0
        %2122 = vmatpush1.msra.mxu0 0.0
        %2123 = vmatprep.subr.mxu0 0.0
        %2124 = vmatpush1.msra.mxu0 0.0
        %2125 = vmatprep.subr.mxu0 0.0
        %2126 = vmatpush1.msra.mxu0 0.0
        %2127 = vmatprep.subr.mxu0 0.0
        %2128 = vmatpush1.msra.mxu0 0.0
        %2129 = vmatprep.subr.mxu0 0.0
        %2130 = vmatpush1.msra.mxu0 0.0
        %2131 = vmatprep.subr.mxu0 0.0
        %2132 = vmatpush1.msra.mxu0 0.0
        %2133 = vmatprep.subr.mxu0 0.0
        %2134 = vmatpush1.msra.mxu0 0.0
        %2135 = vmatprep.subr.mxu0 0.0
        %2136 = vmatpush1.msra.mxu0 0.0
        %2137 = vmatprep.subr.mxu0 0.0
        %2138 = vmatpush1.msra.mxu0 0.0
        %2139 = vmatprep.subr.mxu0 0.0
        %2140 = vmatpush1.msra.mxu0 0.0
        %2141 = vmatprep.mubr.f32.mxu0 0.0
        %2142 = vmatmul.mubr.f32.gmra.mrb[0].mxu0 %v2009
        %v2143 = vpop.f32.mrb[0].mxu0
        %v2144 = vadd.f32 %v2065, %v2143
        %v2145 = vpop.f32.mrb[0].mxu0
        %v2146 = vadd.f32 %v2069, %v2145
        %2147 = vdwg.mxu0
        %2148 = vmatprep.subr.mxu0 0.0
        %2149 = vmatpush1.msra.mxu0 %v2013
        %2150 = vmatprep.subr.mxu0 0.0
        %2151 = vmatpush1.msra.mxu0 %v2016
        %2152 = vmatprep.subr.mxu0 0.0
        %2153 = vmatpush1.msra.mxu0 %v2019
        %2154 = vmatprep.subr.mxu0 0.0
        %2155 = vmatpush1.msra.mxu0 %v2022
        %2156 = vmatprep.subr.mxu0 0.0
        %2157 = vmatpush1.msra.mxu0 %v2025
        %2158 = vmatprep.subr.mxu0 0.0
        %2159 = vmatpush1.msra.mxu0 %v2028
        %2160 = vmatprep.subr.mxu0 0.0
        %2161 = vmatpush1.msra.mxu0 %v2031
        %2162 = vmatprep.subr.mxu0 0.0
        %2163 = vmatpush1.msra.mxu0 %v2034
        %2164 = vmatprep.subr.mxu0 0.0
        %2165 = vmatpush1.msra.mxu0 %v2037
        %2166 = vmatprep.subr.mxu0 0.0
        %2167 = vmatpush1.msra.mxu0 %v2040
        %2168 = vmatprep.subr.mxu0 0.0
        %2169 = vmatpush1.msra.mxu0 %v2043
        %2170 = vmatprep.subr.mxu0 0.0
        %2171 = vmatpush1.msra.mxu0 %v2046
        %2172 = vmatprep.subr.mxu0 0.0
        %2173 = vmatpush1.msra.mxu0 %v2049
        %2174 = vmatprep.subr.mxu0 0.0
        %2175 = vmatpush1.msra.mxu0 %v2052
        %2176 = vmatprep.subr.mxu0 0.0
        %2177 = vmatpush1.msra.mxu0 %v2055
        %2178 = vmatprep.subr.mxu0 0.0
        %2179 = vmatpush1.msra.mxu0 %v2058
        %2180 = vmatprep.subr.mxu0 0.0
        %2181 = vmatpush1.msra.mxu0 0.0
        %2182 = vmatprep.subr.mxu0 0.0
        %2183 = vmatpush1.msra.mxu0 0.0
        %2184 = vmatprep.subr.mxu0 0.0
        %2185 = vmatpush1.msra.mxu0 0.0
        %2186 = vmatprep.subr.mxu0 0.0
        %2187 = vmatpush1.msra.mxu0 0.0
        %2188 = vmatprep.subr.mxu0 0.0
        %2189 = vmatpush1.msra.mxu0 0.0
        %2190 = vmatprep.subr.mxu0 0.0
        %2191 = vmatpush1.msra.mxu0 0.0
        %2192 = vmatprep.subr.mxu0 0.0
        %2193 = vmatpush1.msra.mxu0 0.0
        %2194 = vmatprep.subr.mxu0 0.0
        %2195 = vmatpush1.msra.mxu0 0.0
        %2196 = vmatprep.subr.mxu0 0.0
        %2197 = vmatpush1.msra.mxu0 0.0
        %2198 = vmatprep.subr.mxu0 0.0
        %2199 = vmatpush1.msra.mxu0 0.0
        %2200 = vmatprep.subr.mxu0 0.0
        %2201 = vmatpush1.msra.mxu0 0.0
        %2202 = vmatprep.subr.mxu0 0.0
        %2203 = vmatpush1.msra.mxu0 0.0
        %2204 = vmatprep.subr.mxu0 0.0
        %2205 = vmatpush1.msra.mxu0 0.0
        %2206 = vmatprep.subr.mxu0 0.0
        %2207 = vmatpush1.msra.mxu0 0.0
        %2208 = vmatprep.subr.mxu0 0.0
        %2209 = vmatpush1.msra.mxu0 0.0
        %2210 = vmatprep.subr.mxu0 0.0
        %2211 = vmatpush1.msra.mxu0 0.0
        %2212 = vmatprep.mubr.f32.mxu0 0.0
        %2213 = vmatmul.mubr.f32.gmra.mrb[0].mxu0 %v2009
        %v2214 = vpop.f32.mrb[0].mxu0
        %v2215 = vadd.f32 %v2073, %v2214
        %v2216 = vpop.f32.mrb[0].mxu0
        %2217 = vdwg.mxu0
        %v2219 = vsel %vm930, %v2144, 0
        %v2222 = vsel %vm930, %v2146, 0
        %2224 = vmatprep.subr.mxu0 0.0
        %2225 = vmatpush1.xpose.msra.mxu0 %v2222
        %2226 = vmatprep.subr.mxu0 0.0
        %2227 = vmatpush1.xpose.msra.mxu0 0.0
        %2228 = vmatprep.subr.mxu0 0.0
        %2229 = vmatpush1.xpose.msra.mxu0 0.0
        %2230 = vmatprep.subr.mxu0 0.0
        %2231 = vmatpush1.xpose.msra.mxu0 0.0
        %2232 = vmatprep.subr.mxu0 0.0
        %2233 = vmatpush1.xpose.msra.mxu0 0.0
        %2234 = vmatprep.subr.mxu0 0.0
        %2235 = vmatpush1.xpose.msra.mxu0 0.0
        %2236 = vmatprep.subr.mxu0 0.0
        %2237 = vmatpush1.xpose.msra.mxu0 0.0
        %2238 = vmatprep.subr.mxu0 0.0
        %2239 = vmatpush1.xpose.msra.mxu0 0.0
        %2240 = vmatprep.subr.mxu0 0.0
        %2241 = vmatpush1.xpose.msra.mxu0 0.0
        %2242 = vmatprep.subr.mxu0 0.0
        %2243 = vmatpush1.xpose.msra.mxu0 0.0
        %2244 = vmatprep.subr.mxu0 0.0
        %2245 = vmatpush1.xpose.msra.mxu0 0.0
        %2246 = vmatprep.subr.mxu0 0.0
        %2247 = vmatpush1.xpose.msra.mxu0 0.0
        %2248 = vmatprep.subr.mxu0 0.0
        %2249 = vmatpush1.xpose.msra.mxu0 0.0
        %2250 = vmatprep.subr.mxu0 0.0
        %2251 = vmatpush1.xpose.msra.mxu0 0.0
        %2252 = vmatprep.subr.mxu0 0.0
        %2253 = vmatpush1.xpose.msra.mxu0 0.0
        %2254 = vmatprep.subr.mxu0 0.0
        %2255 = vmatpush1.xpose.msra.mxu0 0.0
        %2256 = vmatprep.subr.mxu0 0.0
        %2257 = vmatpush1.xpose.msra.mxu0 0.0
        %2258 = vmatprep.subr.mxu0 0.0
        %2259 = vmatpush1.xpose.msra.mxu0 0.0
        %2260 = vmatprep.subr.mxu0 0.0
        %2261 = vmatpush1.xpose.msra.mxu0 0.0
        %2262 = vmatprep.subr.mxu0 0.0
        %2263 = vmatpush1.xpose.msra.mxu0 0.0
        %2264 = vmatprep.subr.mxu0 0.0
        %2265 = vmatpush1.xpose.msra.mxu0 0.0
        %2266 = vmatprep.subr.mxu0 0.0
        %2267 = vmatpush1.xpose.msra.mxu0 0.0
        %2268 = vmatprep.subr.mxu0 0.0
        %2269 = vmatpush1.xpose.msra.mxu0 0.0
        %2270 = vmatprep.subr.mxu0 0.0
        %2271 = vmatpush1.xpose.msra.mxu0 0.0
        %2272 = vmatprep.subr.mxu0 0.0
        %2273 = vmatpush1.xpose.msra.mxu0 0.0
        %2274 = vmatprep.subr.mxu0 0.0
        %2275 = vmatpush1.xpose.msra.mxu0 0.0
        %2276 = vmatprep.subr.mxu0 0.0
        %2277 = vmatpush1.xpose.msra.mxu0 0.0
        %2278 = vmatprep.subr.mxu0 0.0
        %2279 = vmatpush1.xpose.msra.mxu0 0.0
        %2280 = vmatprep.subr.mxu0 0.0
        %2281 = vmatpush1.xpose.msra.mxu0 0.0
        %2282 = vmatprep.subr.mxu0 0.0
        %2283 = vmatpush1.xpose.msra.mxu0 0.0
        %2284 = vmatprep.subr.mxu0 0.0
        %2285 = vmatpush1.xpose.msra.mxu0 0.0
        %2286 = vmatprep.subr.mxu0 0.0
        %2287 = vmatpush1.xpose.msra.mxu0 0.0
        %2288 = vmatprep.mubr.f32.mxu0 0.0
        %2289 = vmatmul.mubr.f32.gmra.mrb[0].mxu0 %v2219
        %v2290 = vpop.f32.mrb[0].mxu0
        %v2291 = vadd.f32 0.0, %v2290
        %v2292 = vpop.f32.mrb[0].mxu0
        %2293 = vdwg.mxu0
        %v2294 = vmul.f32 %v2291, 0.17677669
        %v2295 = vadd.f32 %v2294, %v1012
        %v2296 = vsel %vm1015, %v2295, -inf
        %2297 = vmax.xlane.f32.xlu0 %v2296
        %v2298 = vpop.xlane.xlu0 %2297
        %v2299 = vsub.f32 %v2295, %v2298
        %v2300 = vmul.f32 %v2299, 1.442695
        %v2301 = vpow.pop %v2300
        %v2302 = vsel %vm1015, %v2301, 0.0
        %2303 = vadd.xlane.f32.xlu0 %v2302
        %v2304 = vpop.xlane.xlu0 %2303
        %v2305 = vrcp.pop %v2304
        %v2306 = vmul.f32 %v2301, %v2305
        %v2308 = vsel %vm1015, %v2306, 0
        %2310 = vmatprep.subr.mxu0 0.0
        %2311 = vmatpush1.msra.mxu0 %v2215
        %2312 = vmatprep.subr.mxu0 0.0
        %2313 = vmatpush1.msra.mxu0 0.0
        %2314 = vmatprep.subr.mxu0 0.0
        %2315 = vmatpush1.msra.mxu0 0.0
        %2316 = vmatprep.subr.mxu0 0.0
        %2317 = vmatpush1.msra.mxu0 0.0
        %2318 = vmatprep.subr.mxu0 0.0
        %2319 = vmatpush1.msra.mxu0 0.0
        %2320 = vmatprep.subr.mxu0 0.0
        %2321 = vmatpush1.msra.mxu0 0.0
        %2322 = vmatprep.subr.mxu0 0.0
        %2323 = vmatpush1.msra.mxu0 0.0
        %2324 = vmatprep.subr.mxu0 0.0
        %2325 = vmatpush1.msra.mxu0 0.0
        %2326 = vmatprep.subr.mxu0 0.0
        %2327 = vmatpush1.msra.mxu0 0.0
        %2328 = vmatprep.subr.mxu0 0.0
        %2329 = vmatpush1.msra.mxu0 0.0
        %2330 = vmatprep.subr.mxu0 0.0
        %2331 = vmatpush1.msra.mxu0 0.0
        %2332 = vmatprep.subr.mxu0 0.0
        %2333 = vmatpush1.msra.mxu0 0.0
        %2334 = vmatprep.subr.mxu0 0.0
        %2335 = vmatpush1.msra.mxu0 0.0
        %2336 = vmatprep.subr.mxu0 0.0
        %2337 = vmatpush1.msra.mxu0 0.0
        %2338 = vmatprep.subr.mxu0 0.0
        %2339 = vmatpush1.msra.mxu0 0.0
        %2340 = vmatprep.subr.mxu0 0.0
        %2341 = vmatpush1.msra.mxu0 0.0
        %2342 = vmatprep.subr.mxu0 0.0
        %2343 = vmatpush1.msra.mxu0 0.0
        %2344 = vmatprep.subr.mxu0 0.0
        %2345 = vmatpush1.msra.mxu0 0.0
        %2346 = vmatprep.subr.mxu0 0.0
        %2347 = vmatpush1.msra.mxu0 0.0
        %2348 = vmatprep.subr.mxu0 0.0
        %2349 = vmatpush1.msra.mxu0 0.0
        %2350 = vmatprep.subr.mxu0 0.0
        %2351 = vmatpush1.msra.mxu0 0.0
        %2352 = vmatprep.subr.mxu0 0.0
        %2353 = vmatpush1.msra.mxu0 0.0
        %2354 = vmatprep.subr.mxu0 0.0
        %2355 = vmatpush1.msra.mxu0 0.0
        %2356 = vmatprep.subr.mxu0 0.0
        %2357 = vmatpush1.msra.mxu0 0.0
        %2358 = vmatprep.subr.mxu0 0.0
        %2359 = vmatpush1.msra.mxu0 0.0
        %2360 = vmatprep.subr.mxu0 0.0
        %2361 = vmatpush1.msra.mxu0 0.0
        %2362 = vmatprep.subr.mxu0 0.0
        %2363 = vmatpush1.msra.mxu0 0.0
        %2364 = vmatprep.subr.mxu0 0.0
        %2365 = vmatpush1.msra.mxu0 0.0
        %2366 = vmatprep.subr.mxu0 0.0
        %2367 = vmatpush1.msra.mxu0 0.0
        %2368 = vmatprep.subr.mxu0 0.0
        %2369 = vmatpush1.msra.mxu0 0.0
        %2370 = vmatprep.subr.mxu0 0.0
        %2371 = vmatpush1.msra.mxu0 0.0
        %2372 = vmatprep.subr.mxu0 0.0
        %2373 = vmatpush1.msra.mxu0 0.0
        %2374 = vmatprep.mubr.f32.mxu0 0.0
        %2375 = vmatmul.mubr.f32.gmra.mrb[0].mxu0 %v2308
        %v2376 = vpop.f32.mrb[0].mxu0
        %v2377 = vadd.f32 0.0, %v2376
        %v2378 = vpop.f32.mrb[0].mxu0
        %2379 = vdwg.mxu0
        %2380 = vrot.lane.b32.xlu0 %v2144, 96
        %v2381 = vpop.permute.xlu0 %2380
        %2382 = vrot.lane.b32.xlu0 %v2146, 96
        %v2383 = vpop.permute.xlu0 %2382
        %v2384 = vsel %vm930, %v2381, 0
        %v2386 = vsel %vm930, %v2383, 0
        %2388 = vmatprep.subr.mxu0 0.0
        %2389 = vmatpush1.xpose.msra.mxu0 %v2386
        %2390 = vmatprep.subr.mxu0 0.0
        %2391 = vmatpush1.xpose.msra.mxu0 0.0
        %2392 = vmatprep.subr.mxu0 0.0
        %2393 = vmatpush1.xpose.msra.mxu0 0.0
        %2394 = vmatprep.subr.mxu0 0.0
        %2395 = vmatpush1.xpose.msra.mxu0 0.0
        %2396 = vmatprep.subr.mxu0 0.0
        %2397 = vmatpush1.xpose.msra.mxu0 0.0
        %2398 = vmatprep.subr.mxu0 0.0
        %2399 = vmatpush1.xpose.msra.mxu0 0.0
        %2400 = vmatprep.subr.mxu0 0.0
        %2401 = vmatpush1.xpose.msra.mxu0 0.0
        %2402 = vmatprep.subr.mxu0 0.0
        %2403 = vmatpush1.xpose.msra.mxu0 0.0
        %2404 = vmatprep.subr.mxu0 0.0
        %2405 = vmatpush1.xpose.msra.mxu0 0.0
        %2406 = vmatprep.subr.mxu0 0.0
        %2407 = vmatpush1.xpose.msra.mxu0 0.0
        %2408 = vmatprep.subr.mxu0 0.0
        %2409 = vmatpush1.xpose.msra.mxu0 0.0
        %2410 = vmatprep.subr.mxu0 0.0
        %2411 = vmatpush1.xpose.msra.mxu0 0.0
        %2412 = vmatprep.subr.mxu0 0.0
        %2413 = vmatpush1.xpose.msra.mxu0 0.0
        %2414 = vmatprep.subr.mxu0 0.0
        %2415 = vmatpush1.xpose.msra.mxu0 0.0
        %2416 = vmatprep.subr.mxu0 0.0
        %2417 = vmatpush1.xpose.msra.mxu0 0.0
        %2418 = vmatprep.subr.mxu0 0.0
        %2419 = vmatpush1.xpose.msra.mxu0 0.0
        %2420 = vmatprep.subr.mxu0 0.0
        %2421 = vmatpush1.xpose.msra.mxu0 0.0
        %2422 = vmatprep.subr.mxu0 0.0
        %2423 = vmatpush1.xpose.msra.mxu0 0.0
        %2424 = vmatprep.subr.mxu0 0.0
        %2425 = vmatpush1.xpose.msra.mxu0 0.0
        %2426 = vmatprep.subr.mxu0 0.0
        %2427 = vmatpush1.xpose.msra.mxu0 0.0
        %2428 = vmatprep.subr.mxu0 0.0
        %2429 = vmatpush1.xpose.msra.mxu0 0.0
        %2430 = vmatprep.subr.mxu0 0.0
        %2431 = vmatpush1.xpose.msra.mxu0 0.0
        %2432 = vmatprep.subr.mxu0 0.0
        %2433 = vmatpush1.xpose.msra.mxu0 0.0
        %2434 = vmatprep.subr.mxu0 0.0
        %2435 = vmatpush1.xpose.msra.mxu0 0.0
        %2436 = vmatprep.subr.mxu0 0.0
        %2437 = vmatpush1.xpose.msra.mxu0 0.0
        %2438 = vmatprep.subr.mxu0 0.0
        %2439 = vmatpush1.xpose.msra.mxu0 0.0
        %2440 = vmatprep.subr.mxu0 0.0
        %2441 = vmatpush1.xpose.msra.mxu0 0.0
        %2442 = vmatprep.subr.mxu0 0.0
        %2443 = vmatpush1.xpose.msra.mxu0 0.0
        %2444 = vmatprep.subr.mxu0 0.0
        %2445 = vmatpush1.xpose.msra.mxu0 0.0
        %2446 = vmatprep.subr.mxu0 0.0
        %2447 = vmatpush1.xpose.msra.mxu0 0.0
        %2448 = vmatprep.subr.mxu0 0.0
        %2449 = vmatpush1.xpose.msra.mxu0 0.0
        %2450 = vmatprep.subr.mxu0 0.0
        %2451 = vmatpush1.xpose.msra.mxu0 0.0
        %2452 = vmatprep.mubr.f32.mxu0 0.0
        %2453 = vmatmul.mubr.f32.gmra.mrb[0].mxu0 %v2384
        %v2454 = vpop.f32.mrb[0].mxu0
        %v2455 = vadd.f32 0.0, %v2454
        %v2456 = vpop.f32.mrb[0].mxu0
        %2457 = vdwg.mxu0
        %v2458 = vmul.f32 %v2455, 0.17677669
        %v2459 = vadd.f32 %v2458, %v1012
        %v2460 = vsel %vm1015, %v2459, -inf
        %2461 = vmax.xlane.f32.xlu0 %v2460
        %v2462 = vpop.xlane.xlu0 %2461
        %v2463 = vsub.f32 %v2459, %v2462
        %v2464 = vmul.f32 %v2463, 1.442695
        %v2465 = vpow.pop %v2464
        %v2466 = vsel %vm1015, %v2465, 0.0
        %2467 = vadd.xlane.f32.xlu0 %v2466
        %v2468 = vpop.xlane.xlu0 %2467
        %v2469 = vrcp.pop %v2468
        %v2470 = vmul.f32 %v2465, %v2469
        %2472 = vrot.lane.b32.xlu0 %v2215, 96
        %v2473 = vpop.permute.xlu0 %2472
        %v2476 = vsel %vm1015, %v2470, 0
        %2478 = vmatprep.subr.mxu0 0.0
        %2479 = vmatpush1.msra.mxu0 %v2473
        %2480 = vmatprep.subr.mxu0 0.0
        %2481 = vmatpush1.msra.mxu0 0.0
        %2482 = vmatprep.subr.mxu0 0.0
        %2483 = vmatpush1.msra.mxu0 0.0
        %2484 = vmatprep.subr.mxu0 0.0
        %2485 = vmatpush1.msra.mxu0 0.0
        %2486 = vmatprep.subr.mxu0 0.0
        %2487 = vmatpush1.msra.mxu0 0.0
        %2488 = vmatprep.subr.mxu0 0.0
        %2489 = vmatpush1.msra.mxu0 0.0
        %2490 = vmatprep.subr.mxu0 0.0
        %2491 = vmatpush1.msra.mxu0 0.0
        %2492 = vmatprep.subr.mxu0 0.0
        %2493 = vmatpush1.msra.mxu0 0.0
        %2494 = vmatprep.subr.mxu0 0.0
        %2495 = vmatpush1.msra.mxu0 0.0
        %2496 = vmatprep.subr.mxu0 0.0
        %2497 = vmatpush1.msra.mxu0 0.0
        %2498 = vmatprep.subr.mxu0 0.0
        %2499 = vmatpush1.msra.mxu0 0.0
        %2500 = vmatprep.subr.mxu0 0.0
        %2501 = vmatpush1.msra.mxu0 0.0
        %2502 = vmatprep.subr.mxu0 0.0
        %2503 = vmatpush1.msra.mxu0 0.0
        %2504 = vmatprep.subr.mxu0 0.0
        %2505 = vmatpush1.msra.mxu0 0.0
        %2506 = vmatprep.subr.mxu0 0.0
        %2507 = vmatpush1.msra.mxu0 0.0
        %2508 = vmatprep.subr.mxu0 0.0
        %2509 = vmatpush1.msra.mxu0 0.0
        %2510 = vmatprep.subr.mxu0 0.0
        %2511 = vmatpush1.msra.mxu0 0.0
        %2512 = vmatprep.subr.mxu0 0.0
        %2513 = vmatpush1.msra.mxu0 0.0
        %2514 = vmatprep.subr.mxu0 0.0
        %2515 = vmatpush1.msra.mxu0 0.0
        %2516 = vmatprep.subr.mxu0 0.0
        %2517 = vmatpush1.msra.mxu0 0.0
        %2518 = vmatprep.subr.mxu0 0.0
        %2519 = vmatpush1.msra.mxu0 0.0
        %2520 = vmatprep.subr.mxu0 0.0
        %2521 = vmatpush1.msra.mxu0 0.0
        %2522 = vmatprep.subr.mxu0 0.0
        %2523 = vmatpush1.msra.mxu0 0.0
        %2524 = vmatprep.subr.mxu0 0.0
        %2525 = vmatpush1.msra.mxu0 0.0
        %2526 = vmatprep.subr.mxu0 0.0
        %2527 = vmatpush1.msra.mxu0 0.0
        %2528 = vmatprep.subr.mxu0 0.0
        %2529 = vmatpush1.msra.mxu0 0.0
        %2530 = vmatprep.subr.mxu0 0.0
        %2531 = vmatpush1.msra.mxu0 0.0
        %2532 = vmatprep.subr.mxu0 0.0
        %2533 = vmatpush1.msra.mxu0 0.0
        %2534 = vmatprep.subr.mxu0 0.0
        %2535 = vmatpush1.msra.mxu0 0.0
        %2536 = vmatprep.subr.mxu0 0.0
        %2537 = vmatpush1.msra.mxu0 0.0
        %2538 = vmatprep.subr.mxu0 0.0
        %2539 = vmatpush1.msra.mxu0 0.0
        %2540 = vmatprep.subr.mxu0 0.0
        %2541 = vmatpush1.msra.mxu0 0.0
        %2542 = vmatprep.mubr.f32.mxu0 0.0
        %2543 = vmatmul.mubr.f32.gmra.mrb[0].mxu0 %v2476
        %v2544 = vpop.f32.mrb[0].mxu0
        %v2545 = vadd.f32 0.0, %v2544
        %v2546 = vpop.f32.mrb[0].mxu0
        %2547 = vdwg.mxu0
        %2548 = vrot.lane.b32.xlu0 %v2144, 64
        %v2549 = vpop.permute.xlu0 %2548
        %2550 = vrot.lane.b32.xlu0 %v2146, 64
        %v2551 = vpop.permute.xlu0 %2550
        %v2552 = vsel %vm930, %v2549, 0
        %v2554 = vsel %vm930, %v2551, 0
        %2556 = vmatprep.subr.mxu0 0.0
        %2557 = vmatpush1.xpose.msra.mxu0 %v2554
        %2558 = vmatprep.subr.mxu0 0.0
        %2559 = vmatpush1.xpose.msra.mxu0 0.0
        %2560 = vmatprep.subr.mxu0 0.0
        %2561 = vmatpush1.xpose.msra.mxu0 0.0
        %2562 = vmatprep.subr.mxu0 0.0
        %2563 = vmatpush1.xpose.msra.mxu0 0.0
        %2564 = vmatprep.subr.mxu0 0.0
        %2565 = vmatpush1.xpose.msra.mxu0 0.0
        %2566 = vmatprep.subr.mxu0 0.0
        %2567 = vmatpush1.xpose.msra.mxu0 0.0
        %2568 = vmatprep.subr.mxu0 0.0
        %2569 = vmatpush1.xpose.msra.mxu0 0.0
        %2570 = vmatprep.subr.mxu0 0.0
        %2571 = vmatpush1.xpose.msra.mxu0 0.0
        %2572 = vmatprep.subr.mxu0 0.0
        %2573 = vmatpush1.xpose.msra.mxu0 0.0
        %2574 = vmatprep.subr.mxu0 0.0
        %2575 = vmatpush1.xpose.msra.mxu0 0.0
        %2576 = vmatprep.subr.mxu0 0.0
        %2577 = vmatpush1.xpose.msra.mxu0 0.0
        %2578 = vmatprep.subr.mxu0 0.0
        %2579 = vmatpush1.xpose.msra.mxu0 0.0
        %2580 = vmatprep.subr.mxu0 0.0
        %2581 = vmatpush1.xpose.msra.mxu0 0.0
        %2582 = vmatprep.subr.mxu0 0.0
        %2583 = vmatpush1.xpose.msra.mxu0 0.0
        %2584 = vmatprep.subr.mxu0 0.0
        %2585 = vmatpush1.xpose.msra.mxu0 0.0
        %2586 = vmatprep.subr.mxu0 0.0
        %2587 = vmatpush1.xpose.msra.mxu0 0.0
        %2588 = vmatprep.subr.mxu0 0.0
        %2589 = vmatpush1.xpose.msra.mxu0 0.0
        %2590 = vmatprep.subr.mxu0 0.0
        %2591 = vmatpush1.xpose.msra.mxu0 0.0
        %2592 = vmatprep.subr.mxu0 0.0
        %2593 = vmatpush1.xpose.msra.mxu0 0.0
        %2594 = vmatprep.subr.mxu0 0.0
        %2595 = vmatpush1.xpose.msra.mxu0 0.0
        %2596 = vmatprep.subr.mxu0 0.0
        %2597 = vmatpush1.xpose.msra.mxu0 0.0
        %2598 = vmatprep.subr.mxu0 0.0
        %2599 = vmatpush1.xpose.msra.mxu0 0.0
        %2600 = vmatprep.subr.mxu0 0.0
        %2601 = vmatpush1.xpose.msra.mxu0 0.0
        %2602 = vmatprep.subr.mxu0 0.0
        %2603 = vmatpush1.xpose.msra.mxu0 0.0
        %2604 = vmatprep.subr.mxu0 0.0
        %2605 = vmatpush1.xpose.msra.mxu0 0.0
        %2606 = vmatprep.subr.mxu0 0.0
        %2607 = vmatpush1.xpose.msra.mxu0 0.0
        %2608 = vmatprep.subr.mxu0 0.0
        %2609 = vmatpush1.xpose.msra.mxu0 0.0
        %2610 = vmatprep.subr.mxu0 0.0
        %2611 = vmatpush1.xpose.msra.mxu0 0.0
        %2612 = vmatprep.subr.mxu0 0.0
        %2613 = vmatpush1.xpose.msra.mxu0 0.0
        %2614 = vmatprep.subr.mxu0 0.0
        %2615 = vmatpush1.xpose.msra.mxu0 0.0
        %2616 = vmatprep.subr.mxu0 0.0
        %2617 = vmatpush1.xpose.msra.mxu0 0.0
        %2618 = vmatprep.subr.mxu0 0.0
        %2619 = vmatpush1.xpose.msra.mxu0 0.0
        %2620 = vmatprep.mubr.f32.mxu0 0.0
        %2621 = vmatmul.mubr.f32.gmra.mrb[0].mxu0 %v2552
        %v2622 = vpop.f32.mrb[0].mxu0
        %v2623 = vadd.f32 0.0, %v2622
        %v2624 = vpop.f32.mrb[0].mxu0
        %2625 = vdwg.mxu0
        %v2626 = vmul.f32 %v2623, 0.17677669
        %v2627 = vadd.f32 %v2626, %v1012
        %v2628 = vsel %vm1015, %v2627, -inf
        %2629 = vmax.xlane.f32.xlu0 %v2628
        %v2630 = vpop.xlane.xlu0 %2629
        %v2631 = vsub.f32 %v2627, %v2630
        %v2632 = vmul.f32 %v2631, 1.442695
        %v2633 = vpow.pop %v2632
        %v2634 = vsel %vm1015, %v2633, 0.0
        %2635 = vadd.xlane.f32.xlu0 %v2634
        %v2636 = vpop.xlane.xlu0 %2635
        %v2637 = vrcp.pop %v2636
        %v2638 = vmul.f32 %v2633, %v2637
        %2639 = vrot.lane.b32.xlu0 %v2215, 64
        %v2640 = vpop.permute.xlu0 %2639
        %v2643 = vsel %vm1015, %v2638, 0
        %2645 = vmatprep.subr.mxu0 0.0
        %2646 = vmatpush1.msra.mxu0 %v2640
        %2647 = vmatprep.subr.mxu0 0.0
        %2648 = vmatpush1.msra.mxu0 0.0
        %2649 = vmatprep.subr.mxu0 0.0
        %2650 = vmatpush1.msra.mxu0 0.0
        %2651 = vmatprep.subr.mxu0 0.0
        %2652 = vmatpush1.msra.mxu0 0.0
        %2653 = vmatprep.subr.mxu0 0.0
        %2654 = vmatpush1.msra.mxu0 0.0
        %2655 = vmatprep.subr.mxu0 0.0
        %2656 = vmatpush1.msra.mxu0 0.0
        %2657 = vmatprep.subr.mxu0 0.0
        %2658 = vmatpush1.msra.mxu0 0.0
        %2659 = vmatprep.subr.mxu0 0.0
        %2660 = vmatpush1.msra.mxu0 0.0
        %2661 = vmatprep.subr.mxu0 0.0
        %2662 = vmatpush1.msra.mxu0 0.0
        %2663 = vmatprep.subr.mxu0 0.0
        %2664 = vmatpush1.msra.mxu0 0.0
        %2665 = vmatprep.subr.mxu0 0.0
        %2666 = vmatpush1.msra.mxu0 0.0
        %2667 = vmatprep.subr.mxu0 0.0
        %2668 = vmatpush1.msra.mxu0 0.0
        %2669 = vmatprep.subr.mxu0 0.0
        %2670 = vmatpush1.msra.mxu0 0.0
        %2671 = vmatprep.subr.mxu0 0.0
        %2672 = vmatpush1.msra.mxu0 0.0
        %2673 = vmatprep.subr.mxu0 0.0
        %2674 = vmatpush1.msra.mxu0 0.0
        %2675 = vmatprep.subr.mxu0 0.0
        %2676 = vmatpush1.msra.mxu0 0.0
        %2677 = vmatprep.subr.mxu0 0.0
        %2678 = vmatpush1.msra.mxu0 0.0
        %2679 = vmatprep.subr.mxu0 0.0
        %2680 = vmatpush1.msra.mxu0 0.0
        %2681 = vmatprep.subr.mxu0 0.0
        %2682 = vmatpush1.msra.mxu0 0.0
        %2683 = vmatprep.subr.mxu0 0.0
        %2684 = vmatpush1.msra.mxu0 0.0
        %2685 = vmatprep.subr.mxu0 0.0
        %2686 = vmatpush1.msra.mxu0 0.0
        %2687 = vmatprep.subr.mxu0 0.0
        %2688 = vmatpush1.msra.mxu0 0.0
        %2689 = vmatprep.subr.mxu0 0.0
        %2690 = vmatpush1.msra.mxu0 0.0
        %2691 = vmatprep.subr.mxu0 0.0
        %2692 = vmatpush1.msra.mxu0 0.0
        %2693 = vmatprep.subr.mxu0 0.0
        %2694 = vmatpush1.msra.mxu0 0.0
        %2695 = vmatprep.subr.mxu0 0.0
        %2696 = vmatpush1.msra.mxu0 0.0
        %2697 = vmatprep.subr.mxu0 0.0
        %2698 = vmatpush1.msra.mxu0 0.0
        %2699 = vmatprep.subr.mxu0 0.0
        %2700 = vmatpush1.msra.mxu0 0.0
        %2701 = vmatprep.subr.mxu0 0.0
        %2702 = vmatpush1.msra.mxu0 0.0
        %2703 = vmatprep.subr.mxu0 0.0
        %2704 = vmatpush1.msra.mxu0 0.0
        %2705 = vmatprep.subr.mxu0 0.0
        %2706 = vmatpush1.msra.mxu0 0.0
        %2707 = vmatprep.subr.mxu0 0.0
        %2708 = vmatpush1.msra.mxu0 0.0
        %2709 = vmatprep.mubr.f32.mxu0 0.0
        %2710 = vmatmul.mubr.f32.gmra.mrb[0].mxu0 %v2643
        %v2711 = vpop.f32.mrb[0].mxu0
        %v2712 = vadd.f32 0.0, %v2711
        %v2713 = vpop.f32.mrb[0].mxu0
        %2714 = vdwg.mxu0
        %2715 = vrot.lane.b32.xlu0 %v2144, 32
        %v2716 = vpop.permute.xlu0 %2715
        %2717 = vrot.lane.b32.xlu0 %v2146, 32
        %v2718 = vpop.permute.xlu0 %2717
        %v2719 = vsel %vm930, %v2716, 0
        %v2721 = vsel %vm930, %v2718, 0
        %2723 = vmatprep.subr.mxu0 0.0
        %2724 = vmatpush1.xpose.msra.mxu0 %v2721
        %2725 = vmatprep.subr.mxu0 0.0
        %2726 = vmatpush1.xpose.msra.mxu0 0.0
        %2727 = vmatprep.subr.mxu0 0.0
        %2728 = vmatpush1.xpose.msra.mxu0 0.0
        %2729 = vmatprep.subr.mxu0 0.0
        %2730 = vmatpush1.xpose.msra.mxu0 0.0
        %2731 = vmatprep.subr.mxu0 0.0
        %2732 = vmatpush1.xpose.msra.mxu0 0.0
        %2733 = vmatprep.subr.mxu0 0.0
        %2734 = vmatpush1.xpose.msra.mxu0 0.0
        %2735 = vmatprep.subr.mxu0 0.0
        %2736 = vmatpush1.xpose.msra.mxu0 0.0
        %2737 = vmatprep.subr.mxu0 0.0
        %2738 = vmatpush1.xpose.msra.mxu0 0.0
        %2739 = vmatprep.subr.mxu0 0.0
        %2740 = vmatpush1.xpose.msra.mxu0 0.0
        %2741 = vmatprep.subr.mxu0 0.0
        %2742 = vmatpush1.xpose.msra.mxu0 0.0
        %2743 = vmatprep.subr.mxu0 0.0
        %2744 = vmatpush1.xpose.msra.mxu0 0.0
        %2745 = vmatprep.subr.mxu0 0.0
        %2746 = vmatpush1.xpose.msra.mxu0 0.0
        %2747 = vmatprep.subr.mxu0 0.0
        %2748 = vmatpush1.xpose.msra.mxu0 0.0
        %2749 = vmatprep.subr.mxu0 0.0
        %2750 = vmatpush1.xpose.msra.mxu0 0.0
        %2751 = vmatprep.subr.mxu0 0.0
        %2752 = vmatpush1.xpose.msra.mxu0 0.0
        %2753 = vmatprep.subr.mxu0 0.0
        %2754 = vmatpush1.xpose.msra.mxu0 0.0
        %2755 = vmatprep.subr.mxu0 0.0
        %2756 = vmatpush1.xpose.msra.mxu0 0.0
        %2757 = vmatprep.subr.mxu0 0.0
        %2758 = vmatpush1.xpose.msra.mxu0 0.0
        %2759 = vmatprep.subr.mxu0 0.0
        %2760 = vmatpush1.xpose.msra.mxu0 0.0
        %2761 = vmatprep.subr.mxu0 0.0
        %2762 = vmatpush1.xpose.msra.mxu0 0.0
        %2763 = vmatprep.subr.mxu0 0.0
        %2764 = vmatpush1.xpose.msra.mxu0 0.0
        %2765 = vmatprep.subr.mxu0 0.0
        %2766 = vmatpush1.xpose.msra.mxu0 0.0
        %2767 = vmatprep.subr.mxu0 0.0
        %2768 = vmatpush1.xpose.msra.mxu0 0.0
        %2769 = vmatprep.subr.mxu0 0.0
        %2770 = vmatpush1.xpose.msra.mxu0 0.0
        %2771 = vmatprep.subr.mxu0 0.0
        %2772 = vmatpush1.xpose.msra.mxu0 0.0
        %2773 = vmatprep.subr.mxu0 0.0
        %2774 = vmatpush1.xpose.msra.mxu0 0.0
        %2775 = vmatprep.subr.mxu0 0.0
        %2776 = vmatpush1.xpose.msra.mxu0 0.0
        %2777 = vmatprep.subr.mxu0 0.0
        %2778 = vmatpush1.xpose.msra.mxu0 0.0
        %2779 = vmatprep.subr.mxu0 0.0
        %2780 = vmatpush1.xpose.msra.mxu0 0.0
        %2781 = vmatprep.subr.mxu0 0.0
        %2782 = vmatpush1.xpose.msra.mxu0 0.0
        %2783 = vmatprep.subr.mxu0 0.0
        %2784 = vmatpush1.xpose.msra.mxu0 0.0
        %2785 = vmatprep.subr.mxu0 0.0
        %2786 = vmatpush1.xpose.msra.mxu0 0.0
        %2787 = vmatprep.mubr.f32.mxu0 0.0
        %2788 = vmatmul.mubr.f32.gmra.mrb[0].mxu0 %v2719
        %v2789 = vpop.f32.mrb[0].mxu0
        %v2790 = vadd.f32 0.0, %v2789
        %v2791 = vpop.f32.mrb[0].mxu0
        %2792 = vdwg.mxu0
        %v2793 = vmul.f32 %v2790, 0.17677669
        %v2794 = vadd.f32 %v2793, %v1012
        %v2795 = vsel %vm1015, %v2794, -inf
        %2796 = vmax.xlane.f32.xlu0 %v2795
        %v2797 = vpop.xlane.xlu0 %2796
        %v2798 = vsub.f32 %v2794, %v2797
        %v2799 = vmul.f32 %v2798, 1.442695
        %v2800 = vpow.pop %v2799
        %v2801 = vsel %vm1015, %v2800, 0.0
        %2802 = vadd.xlane.f32.xlu0 %v2801
        %v2803 = vpop.xlane.xlu0 %2802
        %v2804 = vrcp.pop %v2803
        %v2805 = vmul.f32 %v2800, %v2804
        %2806 = vrot.lane.b32.xlu0 %v2215, 32
        %v2807 = vpop.permute.xlu0 %2806
        %v2810 = vsel %vm1015, %v2805, 0
        %2812 = vmatprep.subr.mxu0 0.0
        %2813 = vmatpush1.msra.mxu0 %v2807
        %2814 = vmatprep.subr.mxu0 0.0
        %2815 = vmatpush1.msra.mxu0 0.0
        %2816 = vmatprep.subr.mxu0 0.0
        %2817 = vmatpush1.msra.mxu0 0.0
        %2818 = vmatprep.subr.mxu0 0.0
        %2819 = vmatpush1.msra.mxu0 0.0
        %2820 = vmatprep.subr.mxu0 0.0
        %2821 = vmatpush1.msra.mxu0 0.0
        %2822 = vmatprep.subr.mxu0 0.0
        %2823 = vmatpush1.msra.mxu0 0.0
        %2824 = vmatprep.subr.mxu0 0.0
        %2825 = vmatpush1.msra.mxu0 0.0
        %2826 = vmatprep.subr.mxu0 0.0
        %2827 = vmatpush1.msra.mxu0 0.0
        %2828 = vmatprep.subr.mxu0 0.0
        %2829 = vmatpush1.msra.mxu0 0.0
        %2830 = vmatprep.subr.mxu0 0.0
        %2831 = vmatpush1.msra.mxu0 0.0
        %2832 = vmatprep.subr.mxu0 0.0
        %2833 = vmatpush1.msra.mxu0 0.0
        %2834 = vmatprep.subr.mxu0 0.0
        %2835 = vmatpush1.msra.mxu0 0.0
        %2836 = vmatprep.subr.mxu0 0.0
        %2837 = vmatpush1.msra.mxu0 0.0
        %2838 = vmatprep.subr.mxu0 0.0
        %2839 = vmatpush1.msra.mxu0 0.0
        %2840 = vmatprep.subr.mxu0 0.0
        %2841 = vmatpush1.msra.mxu0 0.0
        %2842 = vmatprep.subr.mxu0 0.0
        %2843 = vmatpush1.msra.mxu0 0.0
        %2844 = vmatprep.subr.mxu0 0.0
        %2845 = vmatpush1.msra.mxu0 0.0
        %2846 = vmatprep.subr.mxu0 0.0
        %2847 = vmatpush1.msra.mxu0 0.0
        %2848 = vmatprep.subr.mxu0 0.0
        %2849 = vmatpush1.msra.mxu0 0.0
        %2850 = vmatprep.subr.mxu0 0.0
        %2851 = vmatpush1.msra.mxu0 0.0
        %2852 = vmatprep.subr.mxu0 0.0
        %2853 = vmatpush1.msra.mxu0 0.0
        %2854 = vmatprep.subr.mxu0 0.0
        %2855 = vmatpush1.msra.mxu0 0.0
        %2856 = vmatprep.subr.mxu0 0.0
        %2857 = vmatpush1.msra.mxu0 0.0
        %2858 = vmatprep.subr.mxu0 0.0
        %2859 = vmatpush1.msra.mxu0 0.0
        %2860 = vmatprep.subr.mxu0 0.0
        %2861 = vmatpush1.msra.mxu0 0.0
        %2862 = vmatprep.subr.mxu0 0.0
        %2863 = vmatpush1.msra.mxu0 0.0
        %2864 = vmatprep.subr.mxu0 0.0
        %2865 = vmatpush1.msra.mxu0 0.0
        %2866 = vmatprep.subr.mxu0 0.0
        %2867 = vmatpush1.msra.mxu0 0.0
        %2868 = vmatprep.subr.mxu0 0.0
        %2869 = vmatpush1.msra.mxu0 0.0
        %2870 = vmatprep.subr.mxu0 0.0
        %2871 = vmatpush1.msra.mxu0 0.0
        %2872 = vmatprep.subr.mxu0 0.0
        %2873 = vmatpush1.msra.mxu0 0.0
        %2874 = vmatprep.subr.mxu0 0.0
        %2875 = vmatpush1.msra.mxu0 0.0
        %2876 = vmatprep.mubr.f32.mxu0 0.0
        %2877 = vmatmul.mubr.f32.gmra.mrb[0].mxu0 %v2810
        %v2878 = vpop.f32.mrb[0].mxu0
        %v2879 = vadd.f32 0.0, %v2878
        %v2880 = vpop.f32.mrb[0].mxu0
        %2881 = vdwg.mxu0
        %2883 = vrot.lane.b32.xlu0 %v2545, 32
        %v2884 = vpop.permute.xlu0 %2883
        %2887 = vrot.lane.b32.xlu0 %v2712, 64
        %v2888 = vpop.permute.xlu0 %2887
        %2891 = vrot.lane.b32.xlu0 %v2879, 96
        %v2892 = vpop.permute.xlu0 %2891
        %v2894 = vsel %vm930, %v2377, %v2884
        %v2895 = vsel %vm1615, %v2894, %v2888
        %v2896 = vsel %vm1617, %v2895, %v2892
        %s2897 = scalar_lea.vmem %s6, 128
        %v2898 = vld [vmem:[%s2897] sm:$0xff]
        %v2899 = vld [vmem:[%s2897 + $0x8] sm:$0xff]
        %v2900 = vld [vmem:[%s2897 + $0x10] sm:$0xff]
        %v2901 = vld [vmem:[%s2897 + $0x18] sm:$0xff]
        %v2902 = vld [vmem:[%s2897 + $0x20] sm:$0xff]
        %v2903 = vld [vmem:[%s2897 + $0x28] sm:$0xff]
        %v2904 = vld [vmem:[%s2897 + $0x30] sm:$0xff]
        %v2905 = vld [vmem:[%s2897 + $0x38] sm:$0xff]
        %v2906 = vld [vmem:[%s2897 + $0x40] sm:$0xff]
        %v2907 = vld [vmem:[%s2897 + $0x48] sm:$0xff]
        %v2908 = vld [vmem:[%s2897 + $0x50] sm:$0xff]
        %v2909 = vld [vmem:[%s2897 + $0x58] sm:$0xff]
        %v2910 = vld [vmem:[%s2897 + $0x60] sm:$0xff]
        %v2911 = vld [vmem:[%s2897 + $0x68] sm:$0xff]
        %v2912 = vld [vmem:[%s2897 + $0x70] sm:$0xff]
        %v2913 = vld [vmem:[%s2897 + $0x78] sm:$0xff]
        %s2914 = scalar_lea.vmem %s7, 1
        %v2915 = vld [vmem:[%s2914] sm:$0x1]
        %v2917 = vlaneseq
        %v2918 = vshrl.u32 %v2917, 7
        %v2919 = vsub.s32 0, %v2918
        %v2920 = vrot.slane %v2915, %v2919
        %2922 = vmatprep.subr.mxu0 0.0
        %2923 = vmatpush1.msra.mxu0 %v2898
        %2924 = vmatprep.subr.mxu0 0.0
        %2925 = vmatpush1.msra.mxu0 %v2899
        %2926 = vmatprep.subr.mxu0 0.0
        %2927 = vmatpush1.msra.mxu0 %v2900
        %2928 = vmatprep.subr.mxu0 0.0
        %2929 = vmatpush1.msra.mxu0 %v2901
        %2930 = vmatprep.subr.mxu0 0.0
        %2931 = vmatpush1.msra.mxu0 %v2902
        %2932 = vmatprep.subr.mxu0 0.0
        %2933 = vmatpush1.msra.mxu0 %v2903
        %2934 = vmatprep.subr.mxu0 0.0
        %2935 = vmatpush1.msra.mxu0 %v2904
        %2936 = vmatprep.subr.mxu0 0.0
        %2937 = vmatpush1.msra.mxu0 %v2905
        %2938 = vmatprep.subr.mxu0 0.0
        %2939 = vmatpush1.msra.mxu0 %v2906
        %2940 = vmatprep.subr.mxu0 0.0
        %2941 = vmatpush1.msra.mxu0 %v2907
        %2942 = vmatprep.subr.mxu0 0.0
        %2943 = vmatpush1.msra.mxu0 %v2908
        %2944 = vmatprep.subr.mxu0 0.0
        %2945 = vmatpush1.msra.mxu0 %v2909
        %2946 = vmatprep.subr.mxu0 0.0
        %2947 = vmatpush1.msra.mxu0 %v2910
        %2948 = vmatprep.subr.mxu0 0.0
        %2949 = vmatpush1.msra.mxu0 %v2911
        %2950 = vmatprep.subr.mxu0 0.0
        %2951 = vmatpush1.msra.mxu0 %v2912
        %2952 = vmatprep.subr.mxu0 0.0
        %2953 = vmatpush1.msra.mxu0 %v2913
        %2954 = vmatprep.subr.mxu0 0.0
        %2955 = vmatpush1.msra.mxu0 0.0
        %2956 = vmatprep.subr.mxu0 0.0
        %2957 = vmatpush1.msra.mxu0 0.0
        %2958 = vmatprep.subr.mxu0 0.0
        %2959 = vmatpush1.msra.mxu0 0.0
        %2960 = vmatprep.subr.mxu0 0.0
        %2961 = vmatpush1.msra.mxu0 0.0
        %2962 = vmatprep.subr.mxu0 0.0
        %2963 = vmatpush1.msra.mxu0 0.0
        %2964 = vmatprep.subr.mxu0 0.0
        %2965 = vmatpush1.msra.mxu0 0.0
        %2966 = vmatprep.subr.mxu0 0.0
        %2967 = vmatpush1.msra.mxu0 0.0
        %2968 = vmatprep.subr.mxu0 0.0
        %2969 = vmatpush1.msra.mxu0 0.0
        %2970 = vmatprep.subr.mxu0 0.0
        %2971 = vmatpush1.msra.mxu0 0.0
        %2972 = vmatprep.subr.mxu0 0.0
        %2973 = vmatpush1.msra.mxu0 0.0
        %2974 = vmatprep.subr.mxu0 0.0
        %2975 = vmatpush1.msra.mxu0 0.0
        %2976 = vmatprep.subr.mxu0 0.0
        %2977 = vmatpush1.msra.mxu0 0.0
        %2978 = vmatprep.subr.mxu0 0.0
        %2979 = vmatpush1.msra.mxu0 0.0
        %2980 = vmatprep.subr.mxu0 0.0
        %2981 = vmatpush1.msra.mxu0 0.0
        %2982 = vmatprep.subr.mxu0 0.0
        %2983 = vmatpush1.msra.mxu0 0.0
        %2984 = vmatprep.subr.mxu0 0.0
        %2985 = vmatpush1.msra.mxu0 0.0
        %2986 = vmatprep.mubr.f32.mxu0 0.0
        %2987 = vmatmul.mubr.f32.gmra.mrb[0].mxu0 %v2896
        %v2988 = vpop.f32.mrb[0].mxu0
        %v2989 = vadd.f32 %v2920, %v2988
        %v2990 = vpop.f32.mrb[0].mxu0
        %2991 = vdwg.mxu0
        %v2992 = vadd.f32 %v2989, %v2009
        %s2993 = scalar_lea.vmem %s8, 1
        %v2994 = vld [vmem:[%s2993] sm:$0x1]
        %s2995 = scalar_lea.vmem %s9, 1
        %v2996 = vld [vmem:[%s2995] sm:$0x1]
        %2997 = vadd.xlane.f32.xlu0 %v2992
        %v2998 = vpop.xlane.xlu0 %2997
        %v2999 = vmul.f32 %v2998, %v699
        %v3000 = vsub.f32 %v2992, %v2999
        %v3001 = vmul.f32 %v3000, %v3000
        %3002 = vadd.xlane.f32.xlu0 %v3001
        %v3003 = vpop.xlane.xlu0 %3002
        %v3004 = vmul.f32 %v3003, %v699
        %v3005 = vadd.f32 %v3004, 1e-12
        %v3006 = vrsqrt.pop %v3005
        %v3007 = vmul.f32 %v3000, %v3006
        %v3009 = vlaneseq
        %v3010 = vshrl.u32 %v3009, 7
        %v3011 = vsub.s32 0, %v3010
        %v3012 = vrot.slane %v2994, %v3011
        %v3014 = vmul.f32 %v3007, %v3012
        %v3016 = vlaneseq
        %v3017 = vshrl.u32 %v3016, 7
        %v3018 = vsub.s32 0, %v3017
        %v3019 = vrot.slane %v2996, %v3018
        %v3021 = vadd.f32 %v3014, %v3019
        %s3022 = scalar_lea.vmem [#allocation7], 256
        %v3023 = vld [vmem:[%s3022] sm:$0xff]
        %v3024 = vld [vmem:[%s3022 + $0x8] sm:$0xff]
        %v3025 = vld [vmem:[%s3022 + $0x10] sm:$0xff]
        %v3026 = vld [vmem:[%s3022 + $0x18] sm:$0xff]
        %v3027 = vld [vmem:[%s3022 + $0x20] sm:$0xff]
        %v3028 = vld [vmem:[%s3022 + $0x28] sm:$0xff]
        %v3029 = vld [vmem:[%s3022 + $0x30] sm:$0xff]
        %v3030 = vld [vmem:[%s3022 + $0x38] sm:$0xff]
        %v3031 = vld [vmem:[%s3022 + $0x40] sm:$0xff]
        %v3032 = vld [vmem:[%s3022 + $0x48] sm:$0xff]
        %v3033 = vld [vmem:[%s3022 + $0x50] sm:$0xff]
        %v3034 = vld [vmem:[%s3022 + $0x58] sm:$0xff]
        %v3035 = vld [vmem:[%s3022 + $0x60] sm:$0xff]
        %v3036 = vld [vmem:[%s3022 + $0x68] sm:$0xff]
        %v3037 = vld [vmem:[%s3022 + $0x70] sm:$0xff]
        %v3038 = vld [vmem:[%s3022 + $0x78] sm:$0xff]
        %v3039 = vld [vmem:[%s3022 + $0x80] sm:$0xff]
        %v3040 = vld [vmem:[%s3022 + $0x88] sm:$0xff]
        %v3041 = vld [vmem:[%s3022 + $0x90] sm:$0xff]
        %v3042 = vld [vmem:[%s3022 + $0x98] sm:$0xff]
        %v3043 = vld [vmem:[%s3022 + $0xa0] sm:$0xff]
        %v3044 = vld [vmem:[%s3022 + $0xa8] sm:$0xff]
        %v3045 = vld [vmem:[%s3022 + $0xb0] sm:$0xff]
        %v3046 = vld [vmem:[%s3022 + $0xb8] sm:$0xff]
        %v3047 = vld [vmem:[%s3022 + $0xc0] sm:$0xff]
        %v3048 = vld [vmem:[%s3022 + $0xc8] sm:$0xff]
        %v3049 = vld [vmem:[%s3022 + $0xd0] sm:$0xff]
        %v3050 = vld [vmem:[%s3022 + $0xd8] sm:$0xff]
        %v3051 = vld [vmem:[%s3022 + $0xe0] sm:$0xff]
        %v3052 = vld [vmem:[%s3022 + $0xe8] sm:$0xff]
        %v3053 = vld [vmem:[%s3022 + $0xf0] sm:$0xff]
        %v3054 = vld [vmem:[%s3022 + $0xf8] sm:$0xff]
        %s3055 = scalar_lea.vmem %s11, 2
        %v3056 = vld [vmem:[%s3055] sm:$0x3]
        %v3058 = vlaneseq
        %v3059 = vshrl.u32 %v3058, 7
        %v3060 = vsub.s32 0, %v3059
        %v3061 = vrot.slane %v3056, %v3060
        %v3062 = vlaneseq
        %v3063 = vshrl.u32 %v3062, 7
        %v3064 = vsub.s32 1, %v3063
        %v3065 = vrot.slane %v3056, %v3064
        %3068 = vmatprep.subr.mxu0 %v3024
        %3069 = vmatpush1.msra.mxu0 %v3023
        %3070 = vmatprep.subr.mxu0 %v3026
        %3071 = vmatpush1.msra.mxu0 %v3025
        %3072 = vmatprep.subr.mxu0 %v3028
        %3073 = vmatpush1.msra.mxu0 %v3027
        %3074 = vmatprep.subr.mxu0 %v3030
        %3075 = vmatpush1.msra.mxu0 %v3029
        %3076 = vmatprep.subr.mxu0 %v3032
        %3077 = vmatpush1.msra.mxu0 %v3031
        %3078 = vmatprep.subr.mxu0 %v3034
        %3079 = vmatpush1.msra.mxu0 %v3033
        %3080 = vmatprep.subr.mxu0 %v3036
        %3081 = vmatpush1.msra.mxu0 %v3035
        %3082 = vmatprep.subr.mxu0 %v3038
        %3083 = vmatpush1.msra.mxu0 %v3037
        %3084 = vmatprep.subr.mxu0 %v3040
        %3085 = vmatpush1.msra.mxu0 %v3039
        %3086 = vmatprep.subr.mxu0 %v3042
        %3087 = vmatpush1.msra.mxu0 %v3041
        %3088 = vmatprep.subr.mxu0 %v3044
        %3089 = vmatpush1.msra.mxu0 %v3043
        %3090 = vmatprep.subr.mxu0 %v3046
        %3091 = vmatpush1.msra.mxu0 %v3045
        %3092 = vmatprep.subr.mxu0 %v3048
        %3093 = vmatpush1.msra.mxu0 %v3047
        %3094 = vmatprep.subr.mxu0 %v3050
        %3095 = vmatpush1.msra.mxu0 %v3049
        %3096 = vmatprep.subr.mxu0 %v3052
        %3097 = vmatpush1.msra.mxu0 %v3051
        %3098 = vmatprep.subr.mxu0 %v3054
        %3099 = vmatpush1.msra.mxu0 %v3053
        %3100 = vmatprep.subr.mxu0 0.0
        %3101 = vmatpush1.msra.mxu0 0.0
        %3102 = vmatprep.subr.mxu0 0.0
        %3103 = vmatpush1.msra.mxu0 0.0
        %3104 = vmatprep.subr.mxu0 0.0
        %3105 = vmatpush1.msra.mxu0 0.0
        %3106 = vmatprep.subr.mxu0 0.0
        %3107 = vmatpush1.msra.mxu0 0.0
        %3108 = vmatprep.subr.mxu0 0.0
        %3109 = vmatpush1.msra.mxu0 0.0
        %3110 = vmatprep.subr.mxu0 0.0
        %3111 = vmatpush1.msra.mxu0 0.0
        %3112 = vmatprep.subr.mxu0 0.0
        %3113 = vmatpush1.msra.mxu0 0.0
        %3114 = vmatprep.subr.mxu0 0.0
        %3115 = vmatpush1.msra.mxu0 0.0
        %3116 = vmatprep.subr.mxu0 0.0
        %3117 = vmatpush1.msra.mxu0 0.0
        %3118 = vmatprep.subr.mxu0 0.0
        %3119 = vmatpush1.msra.mxu0 0.0
        %3120 = vmatprep.subr.mxu0 0.0
        %3121 = vmatpush1.msra.mxu0 0.0
        %3122 = vmatprep.subr.mxu0 0.0
        %3123 = vmatpush1.msra.mxu0 0.0
        %3124 = vmatprep.subr.mxu0 0.0
        %3125 = vmatpush1.msra.mxu0 0.0
        %3126 = vmatprep.subr.mxu0 0.0
        %3127 = vmatpush1.msra.mxu0 0.0
        %3128 = vmatprep.subr.mxu0 0.0
        %3129 = vmatpush1.msra.mxu0 0.0
        %3130 = vmatprep.subr.mxu0 0.0
        %3131 = vmatpush1.msra.mxu0 0.0
        %3132 = vmatprep.mubr.f32.mxu0 0.0
        %3133 = vmatmul.mubr.f32.gmra.mrb[0].mxu0 %v3021
        %v3134 = vpop.f32.mrb[0].mxu0
        %v3135 = vadd.f32 %v3061, %v3134
        %v3136 = vpop.f32.mrb[0].mxu0
        %v3137 = vadd.f32 %v3065, %v3136
        %3138 = vdwg.mxu0
        %v3139 = vmul.f32 %v3135, %v3135
        %v3140 = vmul.f32 %v3137, %v3137
        %v3141 = vmul.f32 %v3135, %v3139
        %v3142 = vmul.f32 %v3137, %v3140
        %v3143 = vmul.f32 %v3141, 0.044715
        %v3144 = vmul.f32 %v3142, 0.044715
        %v3145 = vadd.f32 %v3135, %v3143
        %v3146 = vadd.f32 %v3137, %v3144
        %v3147 = vmul.f32 %v3145, 0.7978846
        %v3148 = vmul.f32 %v3146, 0.7978846
        %v3149 = vtanh.pop %v3147
        %v3150 = vtanh.pop %v3148
        %v3151 = vadd.f32 %v3149, 1.0
        %v3152 = vadd.f32 %v3150, 1.0
        %v3153 = vmul.f32 %v3151, 0.5
        %v3154 = vmul.f32 %v3152, 0.5
        %v3155 = vmul.f32 %v3135, %v3153
        %v3156 = vmul.f32 %v3137, %v3154
        %s3157 = scalar_lea.vmem [#allocation9], 256
        %v3158 = vld [vmem:[%s3157] sm:$0xff]
        %v3159 = vld [vmem:[%s3157 + $0x8] sm:$0xff]
        %v3160 = vld [vmem:[%s3157 + $0x10] sm:$0xff]
        %v3161 = vld [vmem:[%s3157 + $0x18] sm:$0xff]
        %v3162 = vld [vmem:[%s3157 + $0x20] sm:$0xff]
        %v3163 = vld [vmem:[%s3157 + $0x28] sm:$0xff]
        %v3164 = vld [vmem:[%s3157 + $0x30] sm:$0xff]
        %v3165 = vld [vmem:[%s3157 + $0x38] sm:$0xff]
        %v3166 = vld [vmem:[%s3157 + $0x40] sm:$0xff]
        %v3167 = vld [vmem:[%s3157 + $0x48] sm:$0xff]
        %v3168 = vld [vmem:[%s3157 + $0x50] sm:$0xff]
        %v3169 = vld [vmem:[%s3157 + $0x58] sm:$0xff]
        %v3170 = vld [vmem:[%s3157 + $0x60] sm:$0xff]
        %v3171 = vld [vmem:[%s3157 + $0x68] sm:$0xff]
        %v3172 = vld [vmem:[%s3157 + $0x70] sm:$0xff]
        %v3173 = vld [vmem:[%s3157 + $0x78] sm:$0xff]
        %v3174 = vld [vmem:[%s3157 + $0x80] sm:$0xff]
        %v3175 = vld [vmem:[%s3157 + $0x88] sm:$0xff]
        %v3176 = vld [vmem:[%s3157 + $0x90] sm:$0xff]
        %v3177 = vld [vmem:[%s3157 + $0x98] sm:$0xff]
        %v3178 = vld [vmem:[%s3157 + $0xa0] sm:$0xff]
        %v3179 = vld [vmem:[%s3157 + $0xa8] sm:$0xff]
        %v3180 = vld [vmem:[%s3157 + $0xb0] sm:$0xff]
        %v3181 = vld [vmem:[%s3157 + $0xb8] sm:$0xff]
        %v3182 = vld [vmem:[%s3157 + $0xc0] sm:$0xff]
        %v3183 = vld [vmem:[%s3157 + $0xc8] sm:$0xff]
        %v3184 = vld [vmem:[%s3157 + $0xd0] sm:$0xff]
        %v3185 = vld [vmem:[%s3157 + $0xd8] sm:$0xff]
        %v3186 = vld [vmem:[%s3157 + $0xe0] sm:$0xff]
        %v3187 = vld [vmem:[%s3157 + $0xe8] sm:$0xff]
        %v3188 = vld [vmem:[%s3157 + $0xf0] sm:$0xff]
        %v3189 = vld [vmem:[%s3157 + $0xf8] sm:$0xff]
        %s3190 = scalar_lea.vmem %s13, 1
        %v3191 = vld [vmem:[%s3190] sm:$0x1]
        %v3193 = vlaneseq
        %v3194 = vshrl.u32 %v3193, 7
        %v3195 = vsub.s32 0, %v3194
        %v3196 = vrot.slane %v3191, %v3195
        %3198 = vmatprep.subr.mxu0 0.0
        %3199 = vmatpush1.msra.mxu0 %v3158
        %3200 = vmatprep.subr.mxu0 0.0
        %3201 = vmatpush1.msra.mxu0 %v3159
        %3202 = vmatprep.subr.mxu0 0.0
        %3203 = vmatpush1.msra.mxu0 %v3160
        %3204 = vmatprep.subr.mxu0 0.0
        %3205 = vmatpush1.msra.mxu0 %v3161
        %3206 = vmatprep.subr.mxu0 0.0
        %3207 = vmatpush1.msra.mxu0 %v3162
        %3208 = vmatprep.subr.mxu0 0.0
        %3209 = vmatpush1.msra.mxu0 %v3163
        %3210 = vmatprep.subr.mxu0 0.0
        %3211 = vmatpush1.msra.mxu0 %v3164
        %3212 = vmatprep.subr.mxu0 0.0
        %3213 = vmatpush1.msra.mxu0 %v3165
        %3214 = vmatprep.subr.mxu0 0.0
        %3215 = vmatpush1.msra.mxu0 %v3166
        %3216 = vmatprep.subr.mxu0 0.0
        %3217 = vmatpush1.msra.mxu0 %v3167
        %3218 = vmatprep.subr.mxu0 0.0
        %3219 = vmatpush1.msra.mxu0 %v3168
        %3220 = vmatprep.subr.mxu0 0.0
        %3221 = vmatpush1.msra.mxu0 %v3169
        %3222 = vmatprep.subr.mxu0 0.0
        %3223 = vmatpush1.msra.mxu0 %v3170
        %3224 = vmatprep.subr.mxu0 0.0
        %3225 = vmatpush1.msra.mxu0 %v3171
        %3226 = vmatprep.subr.mxu0 0.0
        %3227 = vmatpush1.msra.mxu0 %v3172
        %3228 = vmatprep.subr.mxu0 0.0
        %3229 = vmatpush1.msra.mxu0 %v3173
        %3230 = vmatprep.subr.mxu0 0.0
        %3231 = vmatpush1.msra.mxu0 %v3174
        %3232 = vmatprep.subr.mxu0 0.0
        %3233 = vmatpush1.msra.mxu0 %v3175
        %3234 = vmatprep.subr.mxu0 0.0
        %3235 = vmatpush1.msra.mxu0 %v3176
        %3236 = vmatprep.subr.mxu0 0.0
        %3237 = vmatpush1.msra.mxu0 %v3177
        %3238 = vmatprep.subr.mxu0 0.0
        %3239 = vmatpush1.msra.mxu0 %v3178
        %3240 = vmatprep.subr.mxu0 0.0
        %3241 = vmatpush1.msra.mxu0 %v3179
        %3242 = vmatprep.subr.mxu0 0.0
        %3243 = vmatpush1.msra.mxu0 %v3180
        %3244 = vmatprep.subr.mxu0 0.0
        %3245 = vmatpush1.msra.mxu0 %v3181
        %3246 = vmatprep.subr.mxu0 0.0
        %3247 = vmatpush1.msra.mxu0 %v3182
        %3248 = vmatprep.subr.mxu0 0.0
        %3249 = vmatpush1.msra.mxu0 %v3183
        %3250 = vmatprep.subr.mxu0 0.0
        %3251 = vmatpush1.msra.mxu0 %v3184
        %3252 = vmatprep.subr.mxu0 0.0
        %3253 = vmatpush1.msra.mxu0 %v3185
        %3254 = vmatprep.subr.mxu0 0.0
        %3255 = vmatpush1.msra.mxu0 %v3186
        %3256 = vmatprep.subr.mxu0 0.0
        %3257 = vmatpush1.msra.mxu0 %v3187
        %3258 = vmatprep.subr.mxu0 0.0
        %3259 = vmatpush1.msra.mxu0 %v3188
        %3260 = vmatprep.subr.mxu0 0.0
        %3261 = vmatpush1.msra.mxu0 %v3189
        %3262 = vmatprep.mubr.f32.mxu0 %v3156
        %3263 = vmatmul.mubr.f32.gmra.mrb[0].mxu0 %v3155
        %v3264 = vpop.f32.mrb[0].mxu0
        %v3265 = vadd.f32 %v3196, %v3264
        %v3266 = vpop.f32.mrb[0].mxu0
        %3267 = vdwg.mxu0
        %v3268 = vadd.f32 %v3265, %v3021
        %s3269 = scalar_lea.vmem %s14, 1
        %v3270 = vld [vmem:[%s3269] sm:$0x1]
        %s3271 = scalar_lea.vmem [#allocation10], 1
        %v3272 = vld [vmem:[%s3271] sm:$0x1]
        %3273 = vadd.xlane.f32.xlu0 %v3268
        %v3274 = vpop.xlane.xlu0 %3273
        %v3275 = vmul.f32 %v3274, %v699
        %v3276 = vsub.f32 %v3268, %v3275
        %v3277 = vmul.f32 %v3276, %v3276
        %3278 = vadd.xlane.f32.xlu0 %v3277
        %v3279 = vpop.xlane.xlu0 %3278
        %v3280 = vmul.f32 %v3279, %v699
        %v3281 = vadd.f32 %v3280, 1e-12
        %v3282 = vrsqrt.pop %v3281
        %v3283 = vmul.f32 %v3276, %v3282
        %v3285 = vlaneseq
        %v3286 = vshrl.u32 %v3285, 7
        %v3287 = vsub.s32 0, %v3286
        %v3288 = vrot.slane %v3270, %v3287
        %v3290 = vmul.f32 %v3283, %v3288
        %v3292 = vlaneseq
        %v3293 = vshrl.u32 %v3292, 7
        %v3294 = vsub.s32 0, %v3293
        %v3295 = vrot.slane %v3272, %v3294
        %v3297 = vadd.f32 %v3290, %v3295
        %v3298 = vld [vmem:[#allocation12] sm:$0xff]
        %v3299 = vld [vmem:[#allocation12 + $0x8] sm:$0xff]
        %v3300 = vld [vmem:[#allocation12 + $0x10] sm:$0xff]
        %v3301 = vld [vmem:[#allocation12 + $0x18] sm:$0xff]
        %v3302 = vld [vmem:[#allocation12 + $0x20] sm:$0xff]
        %v3303 = vld [vmem:[#allocation12 + $0x28] sm:$0xff]
        %v3304 = vld [vmem:[#allocation12 + $0x30] sm:$0xff]
        %v3305 = vld [vmem:[#allocation12 + $0x38] sm:$0xff]
        %v3306 = vld [vmem:[#allocation12 + $0x40] sm:$0xff]
        %v3307 = vld [vmem:[#allocation12 + $0x48] sm:$0xff]
        %v3308 = vld [vmem:[#allocation12 + $0x50] sm:$0xff]
        %v3309 = vld [vmem:[#allocation12 + $0x58] sm:$0xff]
        %v3310 = vld [vmem:[#allocation12 + $0x60] sm:$0xff]
        %v3311 = vld [vmem:[#allocation12 + $0x68] sm:$0xff]
        %v3312 = vld [vmem:[#allocation12 + $0x70] sm:$0xff]
        %v3313 = vld [vmem:[#allocation12 + $0x78] sm:$0xff]
        %v3314 = vld [vmem:[#allocation13] sm:$0x1]
        %3315 = vmatprep.subr.mxu0 0.0
        %3316 = vmatpush1.msra.mxu0 %v3298
        %3317 = vmatprep.subr.mxu0 0.0
        %3318 = vmatpush1.msra.mxu0 %v3299
        %3319 = vmatprep.subr.mxu0 0.0
        %3320 = vmatpush1.msra.mxu0 %v3300
        %3321 = vmatprep.subr.mxu0 0.0
        %3322 = vmatpush1.msra.mxu0 %v3301
        %3323 = vmatprep.subr.mxu0 0.0
        %3324 = vmatpush1.msra.mxu0 %v3302
        %3325 = vmatprep.subr.mxu0 0.0
        %3326 = vmatpush1.msra.mxu0 %v3303
        %3327 = vmatprep.subr.mxu0 0.0
        %3328 = vmatpush1.msra.mxu0 %v3304
        %3329 = vmatprep.subr.mxu0 0.0
        %3330 = vmatpush1.msra.mxu0 %v3305
        %3331 = vmatprep.subr.mxu0 0.0
        %3332 = vmatpush1.msra.mxu0 %v3306
        %3333 = vmatprep.subr.mxu0 0.0
        %3334 = vmatpush1.msra.mxu0 %v3307
        %3335 = vmatprep.subr.mxu0 0.0
        %3336 = vmatpush1.msra.mxu0 %v3308
        %3337 = vmatprep.subr.mxu0 0.0
        %3338 = vmatpush1.msra.mxu0 %v3309
        %3339 = vmatprep.subr.mxu0 0.0
        %3340 = vmatpush1.msra.mxu0 %v3310
        %3341 = vmatprep.subr.mxu0 0.0
        %3342 = vmatpush1.msra.mxu0 %v3311
        %3343 = vmatprep.subr.mxu0 0.0
        %3344 = vmatpush1.msra.mxu0 %v3312
        %3345 = vmatprep.subr.mxu0 0.0
        %3346 = vmatpush1.msra.mxu0 %v3313
        %3347 = vmatprep.subr.mxu0 0.0
        %3348 = vmatpush1.msra.mxu0 0.0
        %3349 = vmatprep.subr.mxu0 0.0
        %3350 = vmatpush1.msra.mxu0 0.0
        %3351 = vmatprep.subr.mxu0 0.0
        %3352 = vmatpush1.msra.mxu0 0.0
        %3353 = vmatprep.subr.mxu0 0.0
        %3354 = vmatpush1.msra.mxu0 0.0
        %3355 = vmatprep.subr.mxu0 0.0
        %3356 = vmatpush1.msra.mxu0 0.0
        %3357 = vmatprep.subr.mxu0 0.0
        %3358 = vmatpush1.msra.mxu0 0.0
        %3359 = vmatprep.subr.mxu0 0.0
        %3360 = vmatpush1.msra.mxu0 0.0
        %3361 = vmatprep.subr.mxu0 0.0
        %3362 = vmatpush1.msra.mxu0 0.0
        %3363 = vmatprep.subr.mxu0 0.0
        %3364 = vmatpush1.msra.mxu0 0.0
        %3365 = vmatprep.subr.mxu0 0.0
        %3366 = vmatpush1.msra.mxu0 0.0
        %3367 = vmatprep.subr.mxu0 0.0
        %3368 = vmatpush1.msra.mxu0 0.0
        %3369 = vmatprep.subr.mxu0 0.0
        %3370 = vmatpush1.msra.mxu0 0.0
        %3371 = vmatprep.subr.mxu0 0.0
        %3372 = vmatpush1.msra.mxu0 0.0
        %3373 = vmatprep.subr.mxu0 0.0
        %3374 = vmatpush1.msra.mxu0 0.0
        %3375 = vmatprep.subr.mxu0 0.0
        %3376 = vmatpush1.msra.mxu0 0.0
        %3377 = vmatprep.subr.mxu0 0.0
        %3378 = vmatpush1.msra.mxu0 0.0
        %3379 = vmatprep.mubr.f32.mxu0 0.0
        %3380 = vmatmul.mubr.f32.gmra.mrb[0].mxu0 %v3297
        %v3381 = vpop.f32.mrb[0].mxu0
        %v3382 = vadd.f32 %v3314, %v3381
        %v3383 = vpop.f32.mrb[0].mxu0
        %3384 = vdwg.mxu0
        %v3385 = vtanh.pop %v3382
        %3386 = vst [vmem:[%s693] sm:$0x1] %v3385
        %p3387 = scmp.lt.s32.totalorder %s34, 1
        %s3388 = scalar_select %p3387, %s34, 1
        %s3389 = scalar_lea.vmem %s18, %s3388
        // Predicated region
        $region125: #{predict_sentiment.1} parent=91 // pred_check
          %p3390 = pneg %p440
        $region126: #{predict_sentiment.1} parent=91 // pred_check_branch
          %3392 = sbr.rel (%p3390) target = $region128
        $region127: #{predict_sentiment.1} parent=91 // pred_region
          _
        $region128: #{predict_sentiment.1} parent=91 // pred_fallthru
          _
      $region92: #{predict_sentiment.1} parent=5 // pred_fallthru
        _
      %p3393 = scmp.le.s32.totalorder 2, %s29
      // Predicated region
      $region129: #{predict_sentiment.1} parent=5 // pred_check
        %p3394 = pneg %p3393
      $region130: #{predict_sentiment.1} parent=5 // pred_check_branch
        %3396 = sbr.rel (%p3394) target = $region132
      $region131: #{predict_sentiment.1} parent=5 // pred_region
        %s3397 = ssub.s32 %s29, 2
        // Predicated region
        $region133: #{predict_sentiment.1} parent=131 // pred_check
          %p3398 = pneg %p446
        $region134: #{predict_sentiment.1} parent=131 // pred_check_branch
          %3400 = sbr.rel (%p3398) target = $region136
        $region135: #{predict_sentiment.1} parent=131 // pred_region
          %p3401 = scmp.lt.s32.totalorder %s35, 1
          %s3402 = scalar_select %p3401, %s35, 1
          %s3403 = scalar_lea.vmem %s18, %s3402
        $region136: #{predict_sentiment.1} parent=131 // pred_fallthru
          _
      $region132: #{predict_sentiment.1} parent=5 // pred_fallthru
        _
    $region6: #{predict_sentiment.1} parent=1 // loop_footer
      %s33 = sadd.s32 1, %s29
    $region7: #{predict_sentiment.1} parent=1 // loop_footer_branch
      %28 = sbr.rel target = $region3
    $region8: #{predict_sentiment.1} parent=1 // loop_exit
      _
    %3404 = vsyncpa [#allocation3], 1
    %s3405 = scalar_lea.sflag [#allocation3], 1
    %3406 = vsyncpa %s3405, 1
    %3407 = vsyncpa [#allocation5], 1
    %3408 = vsyncpa [#allocation8], 1
    %3409 = vsyncpa [#allocation11], 1
    %3410 = vsyncpa [#allocation14], 1

</llo_original>
